<compile_context>
chip_gen: v5e
topology: v5e:2x2
jax: 0.10.0
libtpu: 0.0.40
codegen_flags: <defaults>
</compile_context>

<pallas_src>
import functools

import jax
import jax.numpy as jnp
from jax.experimental import pallas as pl
from jax.experimental.pallas import tpu as pltpu

_MIB = 1024 * 1024


# ----------------------------------------------------------------------------
# VMEM budgeting helpers (padding-aware estimate, per-generation clamp).
# ----------------------------------------------------------------------------
def _padded_bytes(shape, dtype):
    """Conservative VMEM footprint of one block: last two dims padded to (8,128)."""
    s = tuple(int(d) for d in shape)
    if len(s) < 2:
        s = (1,) * (2 - len(s)) + s
    lead = 1
    for d in s[:-2]:
        lead *= d
    sub = -(-s[-2] // 8) * 8
    lane = -(-s[-1] // 128) * 128
    return lead * sub * lane * jnp.dtype(dtype).itemsize


def _vmem_limit(block_bytes, scratch_bytes):
    """2x (double-buffer) per pipelined block + scratch, clamped per generation."""
    est = 2 * sum(block_bytes) + sum(scratch_bytes)
    try:
        phys = int(pltpu.get_tpu_info().vmem_capacity_bytes)
    except Exception:  # pragma: no cover - be robust to API/backend differences
        phys = 64 * _MIB  # v7x lower bound
    cap = (3 * phys) // 4
    return int(min(max(3 * est // 2, 32 * _MIB), cap))


# ----------------------------------------------------------------------------
# Kernel 1: ConvTranspose2d(k=2, s=2) as one matmul per batch element.
#   y[h, w, (ki*2+kj)*Ch + c] = sum_cin x[h, w, cin] * W[cin, c, ki, kj] + b[c]
# The output block is laid out (1, H, 2, W, 2*Ch) — byte-for-byte identical to
# NHWC (1, 2H, 2W, Ch) — so the pixel-shuffle costs only two full-slice stores
# in-kernel and a free reshape in the wrapper (no HBM transpose pass).
# ----------------------------------------------------------------------------
def _upconv_kernel(x_ref, w_ref, b_ref, o_ref):
    _, H, W, Cin = x_ref.shape
    two_ch = o_ref.shape[4]
    x2d = x_ref[0].reshape(H * W, Cin)                                # bf16
    y = jnp.dot(x2d, w_ref[...], preferred_element_type=jnp.float32)
    y = (y + b_ref[...]).astype(o_ref.dtype).reshape(H, W, 2 * two_ch)
    # Columns are (ki, kj, c); the (kj, c) pair already matches the fine-grid
    # (2w+kj, c) memory order, so each row-parity plane is one dense store.
    o_ref[0, :, 0, :, :] = y[:, :, 0:two_ch]          # ki = 0 rows
    o_ref[0, :, 1, :, :] = y[:, :, two_ch:2 * two_ch]  # ki = 1 rows


def upconv2x2_stride2(x_nhwc, w_torch, b):
    """x_nhwc: (N,H,W,Cin); w_torch: (Cin, Ch, 2, 2); b: (Ch,) -> (N,2H,2W,Ch) bf16."""
    N, H, W, Cin = (int(d) for d in x_nhwc.shape)
    Ch = int(w_torch.shape[1])
    # (Cin, Ch, ki, kj) -> (Cin, ki, kj, Ch) -> (Cin, 4*Ch); col = (ki*2+kj)*Ch + c
    w_flat = jnp.transpose(w_torch, (0, 2, 3, 1)).reshape(Cin, 4 * Ch)
    w_flat = w_flat.astype(jnp.bfloat16)
    b_flat = jnp.tile(b, 4).reshape(1, 4 * Ch).astype(jnp.float32)

    blocks = [_padded_bytes((1, H, W, Cin), jnp.bfloat16),
              _padded_bytes((Cin, 4 * Ch), jnp.bfloat16),
              _padded_bytes((1, 4 * Ch), jnp.float32),
              _padded_bytes((1, H, 2, W, 2 * Ch), jnp.bfloat16)]
    flops = 2 * N * H * W * Cin * 4 * Ch
    bytes_accessed = (N * H * W * Cin * 2 + Cin * 4 * Ch * 2
                      + N * H * W * 4 * Ch * 2)

    y = pl.pallas_call(
        _upconv_kernel,
        out_shape=jax.ShapeDtypeStruct((N, H, 2, W, 2 * Ch), jnp.bfloat16),
        grid=(N,),
        in_specs=[
            pl.BlockSpec((1, H, W, Cin), lambda n: (n, 0, 0, 0)),
            pl.BlockSpec((Cin, 4 * Ch), lambda n: (0, 0)),
            pl.BlockSpec((1, 4 * Ch), lambda n: (0, 0)),
        ],
        out_specs=pl.BlockSpec((1, H, 2, W, 2 * Ch), lambda n: (n, 0, 0, 0, 0)),
        compiler_params=pltpu.CompilerParams(
            dimension_semantics=("parallel",),
            vmem_limit_bytes=_vmem_limit(blocks, [])),
        cost_estimate=pl.CostEstimate(flops=flops, transcendentals=0,
                                      bytes_accessed=bytes_accessed),
    )(x_nhwc.astype(jnp.bfloat16), w_flat, b_flat)

    # Free reshape: (N, H, 2, W, 2*Ch) and (N, 2H, 2W, Ch) share one contiguous
    # memory layout, so the pixel-shuffle never touches HBM again.
    return y.reshape(N, 2 * H, 2 * W, Ch)


# ----------------------------------------------------------------------------
# Kernel 2: fused DoubleConv over the virtual concat [x2, x1_up]:
#   [channel-concat + pad-to-x2 + Conv3x3(pad=1) + BN + ReLU] x 2
# Both convs use a zero-bordered "3-slab" VMEM buffer
#   xcat[r, w, kx*C + c] = x_padded[r-1, w+kx-1, c]        ((H+2), W, 3*C)
# and 3 deep-K matmuls per row group (K = 3*C).  BN scale is folded into the
# weights at trace time; the epilogue is `+ shift; relu` in f32.  The
# intermediate activation h stays in VMEM.
# ----------------------------------------------------------------------------
def _fold_bn(w_torch, conv_b, gamma, beta, rmean, rvar, *, eps=1e-5):
    cout, cin = int(w_torch.shape[0]), int(w_torch.shape[1])
    scale = gamma / jnp.sqrt(rvar + eps)                              # (Cout,)
    shift = ((conv_b - rmean) * scale + beta).reshape(1, cout).astype(jnp.float32)
    w_scaled = w_torch * scale[:, None, None, None]                   # (Cout,Cin,3,3)
    # (Cout,Cin,ky,kx) -> (ky,kx,Cin,Cout) -> (3, 3*Cin, Cout); col = kx*Cin+cin
    w = jnp.transpose(w_scaled, (2, 3, 1, 0)).reshape(3, 3 * cin, cout)
    return w.astype(jnp.bfloat16), shift


def _pick_row_group(Hc, Wc, target_m=256):
    rg = max(1, min(Hc, target_m // max(Wc, 1)))
    while Hc % rg:
        rg -= 1
    return rg


def _make_doubleconv_kernel(ch_skip, ch_up, Hc, Wc, H2, W2, py, px, cout, rg):
    ccat = ch_skip + ch_up
    ngroups = Hc // rg

    def kernel(x2_ref, x1u_ref, w1_ref, s1_ref, w2_ref, s2_ref, o_ref,
               xc1_ref, xc2_ref):
        bf = xc1_ref.dtype

        # ---- zero ONLY the halo each step (rows 0 / Hc+1, first col of the
        # kx=0 slab, last col of the kx=2 slab).  The interior is fully
        # overwritten below, and per-step halo zeroing stays correct when the
        # batch grid axis is split across TensorCores (scratch is per-core).
        xc1_ref[0:1, :, :] = jnp.zeros((1, Wc, 3 * ccat), bf)
        xc1_ref[Hc + 1:Hc + 2, :, :] = jnp.zeros((1, Wc, 3 * ccat), bf)
        xc1_ref[1:Hc + 1, 0:1, 0:ccat] = jnp.zeros((Hc, 1, ccat), bf)
        xc1_ref[1:Hc + 1, Wc - 1:Wc, 2 * ccat:3 * ccat] = jnp.zeros((Hc, 1, ccat), bf)
        xc2_ref[0:1, :, :] = jnp.zeros((1, Wc, 3 * cout), bf)
        xc2_ref[Hc + 1:Hc + 2, :, :] = jnp.zeros((1, Wc, 3 * cout), bf)
        xc2_ref[1:Hc + 1, 0:1, 0:cout] = jnp.zeros((Hc, 1, cout), bf)
        xc2_ref[1:Hc + 1, Wc - 1:Wc, 2 * cout:3 * cout] = jnp.zeros((Hc, 1, cout), bf)
        if (Hc != H2) or (Wc != W2):
            # F.pad margins for the x1_up half of the channels (only emitted
            # when the skip tensor is spatially larger; no-op in the demo).
            for kx in range(3):
                c0 = kx * ccat + ch_skip
                xc1_ref[1:Hc + 1, :, c0:c0 + ch_up] = jnp.zeros((Hc, Wc, ch_up), bf)

        # ---- build conv1's 3-slab buffer: torch.cat([x2, x1_up]) and the
        # padding=1 zeros are materialised only in VMEM, never in HBM. ----
        x2v = x2_ref[0]                                      # (Hc, Wc, ch_skip)
        xc1_ref[1:Hc + 1, 1:Wc, 0:ch_skip] = x2v[:, 0:Wc - 1, :]                  # kx=0
        xc1_ref[1:Hc + 1, 0:Wc, ccat:ccat + ch_skip] = x2v                        # kx=1
        xc1_ref[1:Hc + 1, 0:Wc - 1, 2 * ccat:2 * ccat + ch_skip] = x2v[:, 1:Wc, :]  # kx=2

        x1v = x1u_ref[0]                                     # (H2, W2, ch_up)
        r0, r1 = py + 1, py + 1 + H2                         # F.pad row offsets
        n0 = min(W2, Wc - (px + 1))                          # kx=0 (clip right)
        if n0 > 0:
            xc1_ref[r0:r1, px + 1:px + 1 + n0, ch_skip:ccat] = x1v[:, 0:n0, :]
        xc1_ref[r0:r1, px:px + W2, ccat + ch_skip:2 * ccat] = x1v                 # kx=1
        d2 = max(px - 1, 0)                                  # kx=2 (clip left)
        src2 = d2 - (px - 1)
        n2 = W2 - src2
        if n2 > 0:
            xc1_ref[r0:r1, d2:d2 + n2, 2 * ccat + ch_skip:3 * ccat] = \
                x1v[:, src2:src2 + n2, :]

        # ---- conv1 (BN scale folded into w1) -> ReLU -> fill conv2's 3-slab.
        # M is tiled over row groups so the f32 accumulator stays vreg-sized.
        for g in range(ngroups):
            rr = g * rg
            acc = jnp.zeros((rg * Wc, cout), jnp.float32)
            for ky in range(3):                              # 3 deep-K matmuls
                lhs = xc1_ref[rr + ky:rr + ky + rg, :, :].reshape(rg * Wc, 3 * ccat)
                acc = acc + jnp.dot(lhs, w1_ref[ky],
                                    preferred_element_type=jnp.float32)
            h = jnp.maximum(acc + s1_ref[...], 0.0).astype(bf).reshape(rg, Wc, cout)
            xc2_ref[rr + 1:rr + 1 + rg, 1:Wc, 0:cout] = h[:, 0:Wc - 1, :]
            xc2_ref[rr + 1:rr + 1 + rg, 0:Wc, cout:2 * cout] = h
            xc2_ref[rr + 1:rr + 1 + rg, 0:Wc - 1, 2 * cout:3 * cout] = h[:, 1:Wc, :]

        # ---- conv2 (BN folded) -> ReLU -> store; h never round-trips to HBM.
        for g in range(ngroups):
            rr = g * rg
            acc = jnp.zeros((rg * Wc, cout), jnp.float32)
            for ky in range(3):
                lhs = xc2_ref[rr + ky:rr + ky + rg, :, :].reshape(rg * Wc, 3 * cout)
                acc = acc + jnp.dot(lhs, w2_ref[ky],
                                    preferred_element_type=jnp.float32)
            y = jnp.maximum(acc + s2_ref[...], 0.0)
            o_ref[0, rr * Wc:(rr + rg) * Wc, :] = y.astype(o_ref.dtype)

    return kernel


def double_conv_fused(x2, x1u, params):
    """cat([x2, x1u], channel) -> [Conv3x3+BN+ReLU] x 2 in ONE pallas_call."""
    N, Hc, Wc, ch_skip = (int(d) for d in x2.shape)
    _, H2, W2, ch_up = (int(d) for d in x1u.shape)
    # TODO(synk): negative diffs (crop) are not handled, as in the original.
    assert Hc >= H2 and Wc >= W2, "x2 must be spatially >= upsampled x1"
    py, px = (Hc - H2) // 2, (Wc - W2) // 2
    ccat = ch_skip + ch_up
    cout = int(params["w1"].shape[0])

    w1, s1 = _fold_bn(params["w1"], params["b1"], params["g1"], params["be1"],
                      params["rm1"], params["rv1"])
    w2, s2 = _fold_bn(params["w2"], params["b2"], params["g2"], params["be2"],
                      params["rm2"], params["rv2"])

    rg = _pick_row_group(Hc, Wc)
    kernel = _make_doubleconv_kernel(ch_skip, ch_up, Hc, Wc, H2, W2, py, px,
                                     cout, rg)

    blocks = [_padded_bytes((1, Hc, Wc, ch_skip), jnp.bfloat16),
              _padded_bytes((1, H2, W2, ch_up), jnp.bfloat16),
              _padded_bytes((3, 3 * ccat, cout), jnp.bfloat16),
              _padded_bytes((1, cout), jnp.float32),
              _padded_bytes((3, 3 * cout, cout), jnp.bfloat16),
              _padded_bytes((1, cout), jnp.float32),
              _padded_bytes((1, Hc * Wc, cout), jnp.bfloat16)]
    scratch = [_padded_bytes((Hc + 2, Wc, 3 * ccat), jnp.bfloat16),
               _padded_bytes((Hc + 2, Wc, 3 * cout), jnp.bfloat16)]
    flops = 2 * N * Hc * Wc * 9 * (ccat + cout) * cout
    bytes_accessed = (N * Hc * Wc * ch_skip * 2 + N * H2 * W2 * ch_up * 2
                      + 9 * (ccat + cout) * cout * 2 + N * Hc * Wc * cout * 2)

    out = pl.pallas_call(
        kernel,
        out_shape=jax.ShapeDtypeStruct((N, Hc * Wc, cout), jnp.bfloat16),
        grid=(N,),
        in_specs=[
            pl.BlockSpec((1, Hc, Wc, ch_skip), lambda n: (n, 0, 0, 0)),
            pl.BlockSpec((1, H2, W2, ch_up), lambda n: (n, 0, 0, 0)),
            pl.BlockSpec((3, 3 * ccat, cout), lambda n: (0, 0, 0)),
            pl.BlockSpec((1, cout), lambda n: (0, 0)),
            pl.BlockSpec((3, 3 * cout, cout), lambda n: (0, 0, 0)),
            pl.BlockSpec((1, cout), lambda n: (0, 0)),
        ],
        out_specs=pl.BlockSpec((1, Hc * Wc, cout), lambda n: (n, 0, 0)),
        scratch_shapes=[pltpu.VMEM((Hc + 2, Wc, 3 * ccat), jnp.bfloat16),
                        pltpu.VMEM((Hc + 2, Wc, 3 * cout), jnp.bfloat16)],
        compiler_params=pltpu.CompilerParams(
            dimension_semantics=("parallel",),
            vmem_limit_bytes=_vmem_limit(blocks, scratch)),
        cost_estimate=pl.CostEstimate(flops=flops, transcendentals=0,
                                      bytes_accessed=bytes_accessed),
    )(x2.astype(jnp.bfloat16), x1u.astype(jnp.bfloat16), w1, s1, w2, s2)

    return out.reshape(N, Hc, Wc, cout)   # free contiguous reshape


# ----------------------------------------------------------------------------
# Up.forward
# ----------------------------------------------------------------------------
def up_forward(x1_nchw, x2_nchw, params):
    """x1: (N, Cin, H, W); x2: (N, Cin//2, ~2H, ~2W) -> (N, Cout, H2, W2)."""
    # TODO(synk): keep the model NHWC end-to-end; these boundary transposes
    # only exist to match the PyTorch NCHW interface.
    x1 = jnp.transpose(x1_nchw, (0, 2, 3, 1))
    x2 = jnp.transpose(x2_nchw, (0, 2, 3, 1))

    # 1) ConvTranspose2d(k=2, s=2); kernel emits the pixel-shuffled layout
    #    directly, so the only "glue" left is a zero-cost reshape.
    x1u = upconv2x2_stride2(x1, params["up_w"], params["up_b"])

    # 2-4) F.pad + torch.cat + DoubleConv fused into a single pallas_call
    #      (padding, concat and the inter-conv intermediate never hit HBM).
    out = double_conv_fused(x2, x1u, params)

    # Kernel output stays bf16; cast to f32 only at the NCHW boundary.
    return jnp.transpose(out, (0, 3, 1, 2)).astype(jnp.float32)


def make_params(in_channels, out_channels, key):
    ks = jax.random.split(key, 6)
    ch = in_channels // 2
    f32 = jnp.float32
    return {
        # ConvTranspose2d(in_channels, in_channels//2, 2, 2): weight (Cin, Ch, 2, 2)
        "up_w": 0.1 * jax.random.normal(ks[0], (in_channels, ch, 2, 2), f32),
        "up_b": 0.1 * jax.random.normal(ks[1], (ch,), f32),
        # DoubleConv conv1: Conv2d(in_channels, out_channels, 3, padding=1)
        "w1": 0.1 * jax.random.normal(ks[2], (out_channels, in_channels, 3, 3), f32),
        "b1": 0.1 * jax.random.normal(ks[3], (out_channels,), f32),
        "g1": jnp.ones((out_channels,), f32), "be1": jnp.zeros((out_channels,), f32),
        "rm1": jnp.zeros((out_channels,), f32), "rv1": jnp.ones((out_channels,), f32),
        # DoubleConv conv2: Conv2d(out_channels, out_channels, 3, padding=1)
        "w2": 0.1 * jax.random.normal(ks[4], (out_channels, out_channels, 3, 3), f32),
        "b2": 0.1 * jax.random.normal(ks[5], (out_channels,), f32),
        "g2": jnp.ones((out_channels,), f32), "be2": jnp.zeros((out_channels,), f32),
        "rm2": jnp.zeros((out_channels,), f32), "rv2": jnp.ones((out_channels,), f32),
    }


if __name__ == "__main__":
    in_channels, out_channels = 8, 4
    N, H, W = 2, 8, 8  # x1 spatial; x2 is 2x larger (standard UNet skip)

    key = jax.random.PRNGKey(0)
    k1, k2, kp = jax.random.split(key, 3)
    x1 = jax.random.normal(k1, (N, in_channels, H, W), jnp.float32)
    x2 = jax.random.normal(k2, (N, in_channels // 2, 2 * H, 2 * W), jnp.float32)
    params = make_params(in_channels, out_channels, kp)

    out = jax.jit(functools.partial(up_forward, params=params))(x1, x2)
    out = jax.block_until_ready(out)
    assert out.shape == (N, out_channels, 2 * H, 2 * W), out.shape
    assert bool(jnp.all(jnp.isfinite(out)))
    print("KERNEL_OK")
</pallas_src>

<mosaic_0001>
module attributes {stable_mosaic.version = 11 : i64} {
  func.func @_upconv_kernel(%arg0: i32, %arg1: memref<1x8x8x8xbf16, #tpu.memory_space<vmem>>, %arg2: memref<8x16xbf16, #tpu.memory_space<vmem>>, %arg3: memref<1x16xf32, #tpu.memory_space<vmem>>, %arg4: memref<1x8x2x8x8xbf16, #tpu.memory_space<vmem>>) attributes {dimension_semantics = [#tpu.dimension_semantics<parallel>], iteration_bounds = array<i64: 2>, scalar_prefetch = 0 : i64, scratch_operands = 0 : i64, tpu.core_type = #tpu.core_type<tc>, window_params = [{transform_indices = @transform_0, window_bounds = array<i64: 1, 8, 8, 8>}, {pipeline_mode = #tpu.pipeline_mode<synchronous>, transform_indices = @transform_1, window_bounds = array<i64: 8, 16>}, {pipeline_mode = #tpu.pipeline_mode<synchronous>, transform_indices = @transform_2, window_bounds = array<i64: 1, 16>}, {transform_indices = @transform_3, window_bounds = array<i64: 1, 8, 2, 8, 8>}]} {
    %c0 = arith.constant 0 : index
    %c0_0 = arith.constant 0 : index
    %c0_1 = arith.constant 0 : index
    %c0_2 = arith.constant 0 : index
    %0 = vector.load %arg1[%c0, %c0_0, %c0_1, %c0_2] : memref<1x8x8x8xbf16, #tpu.memory_space<vmem>>, vector<1x8x8x8xbf16>
    %1 = vector.shape_cast %0 : vector<1x8x8x8xbf16> to vector<8x8x8xbf16>
    %2 = vector.shape_cast %1 : vector<8x8x8xbf16> to vector<64x8xbf16>
    %c0_3 = arith.constant 0 : index
    %c0_4 = arith.constant 0 : index
    %3 = vector.load %arg2[%c0_3, %c0_4] : memref<8x16xbf16, #tpu.memory_space<vmem>>, vector<8x16xbf16>
    %cst = arith.constant dense<0.000000e+00> : vector<64x16xf32>
    %4 = tpu.matmul %2, %3, %cst {dimension_numbers = #tpu.dot_dimension_numbers<[1], [0], [0], [1], [0, 0, 1, 1], [], []>} : vector<64x8xbf16>, vector<8x16xbf16>, vector<64x16xf32> -> vector<64x16xf32>
    %c0_5 = arith.constant 0 : index
    %c0_6 = arith.constant 0 : index
    %5 = vector.load %arg3[%c0_5, %c0_6] : memref<1x16xf32, #tpu.memory_space<vmem>>, vector<1x16xf32>
    %6 = vector.broadcast %5 : vector<1x16xf32> to vector<64x16xf32>
    %7 = arith.addf %4, %6 : vector<64x16xf32>
    %8 = arith.truncf %7 : vector<64x16xf32> to vector<64x16xbf16>
    %9 = vector.shape_cast %8 : vector<64x16xbf16> to vector<8x8x16xbf16>
    %10 = vector.extract_strided_slice %9 {offsets = [0, 0, 0], sizes = [8, 8, 8], strides = [1, 1, 1]} : vector<8x8x16xbf16> to vector<8x8x8xbf16>
    %c0_7 = arith.constant 0 : index
    %c0_8 = arith.constant 0 : index
    %c0_9 = arith.constant 0 : index
    %c0_10 = arith.constant 0 : index
    %c0_11 = arith.constant 0 : index
    %11 = vector.load %arg4[%c0_7, %c0_8, %c0_9, %c0_10, %c0_11] : memref<1x8x2x8x8xbf16, #tpu.memory_space<vmem>>, vector<1x8x1x8x8xbf16>
    %12 = vector.shape_cast %11 : vector<1x8x1x8x8xbf16> to vector<8x8x8xbf16>
    %13 = vector.shape_cast %10 : vector<8x8x8xbf16> to vector<1x8x1x8x8xbf16>
    tpu.vector_store %arg4[%c0_7, %c0_8, %c0_9, %c0_10, %c0_11], %13 {strides = array<i32>} : memref<1x8x2x8x8xbf16, #tpu.memory_space<vmem>>, vector<1x8x1x8x8xbf16>,
    %14 = vector.extract_strided_slice %9 {offsets = [0, 0, 8], sizes = [8, 8, 8], strides = [1, 1, 1]} : vector<8x8x16xbf16> to vector<8x8x8xbf16>
    %c0_12 = arith.constant 0 : index
    %c0_13 = arith.constant 0 : index
    %c1 = arith.constant 1 : index
    %c0_14 = arith.constant 0 : index
    %c0_15 = arith.constant 0 : index
    %15 = vector.load %arg4[%c0_12, %c0_13, %c1, %c0_14, %c0_15] : memref<1x8x2x8x8xbf16, #tpu.memory_space<vmem>>, vector<1x8x1x8x8xbf16>
    %16 = vector.shape_cast %15 : vector<1x8x1x8x8xbf16> to vector<8x8x8xbf16>
    %17 = vector.shape_cast %14 : vector<8x8x8xbf16> to vector<1x8x1x8x8xbf16>
    tpu.vector_store %arg4[%c0_12, %c0_13, %c1, %c0_14, %c0_15], %17 {strides = array<i32>} : memref<1x8x2x8x8xbf16, #tpu.memory_space<vmem>>, vector<1x8x1x8x8xbf16>,
    return
  }
  func.func @transform_0(%arg0: i32) -> (i32, i32, i32, i32) {
    %c0_i32 = arith.constant 0 : i32
    %c0_i32_0 = arith.constant 0 : i32
    %c0_i32_1 = arith.constant 0 : i32
    %c0_i32_2 = arith.constant 0 : i32
    return %arg0, %c0_i32, %c0_i32_0, %c0_i32_1 : i32, i32, i32, i32
  }
  func.func @transform_1(%arg0: i32) -> (i32, i32) {
    %c0_i32 = arith.constant 0 : i32
    %c0_i32_0 = arith.constant 0 : i32
    %c0_i32_1 = arith.constant 0 : i32
    return %c0_i32, %c0_i32_0 : i32, i32
  }
  func.func @transform_2(%arg0: i32) -> (i32, i32) {
    %c0_i32 = arith.constant 0 : i32
    %c0_i32_0 = arith.constant 0 : i32
    %c0_i32_1 = arith.constant 0 : i32
    return %c0_i32, %c0_i32_0 : i32, i32
  }
  func.func @transform_3(%arg0: i32) -> (i32, i32, i32, i32, i32) {
    %c0_i32 = arith.constant 0 : i32
    %c0_i32_0 = arith.constant 0 : i32
    %c0_i32_1 = arith.constant 0 : i32
    %c0_i32_2 = arith.constant 0 : i32
    %c0_i32_3 = arith.constant 0 : i32
    return %arg0, %c0_i32, %c0_i32_0, %c0_i32_1, %c0_i32_2 : i32, i32, i32, i32, i32
  }
}

module attributes {stable_mosaic.version = 11 : i64} {
  func.func @kernel(%arg0: i32, %arg1: memref<1x16x16x4xbf16, #tpu.memory_space<vmem>>, %arg2: memref<1x16x16x4xbf16, #tpu.memory_space<vmem>>, %arg3: memref<3x24x4xbf16, #tpu.memory_space<vmem>>, %arg4: memref<1x4xf32, #tpu.memory_space<vmem>>, %arg5: memref<3x12x4xbf16, #tpu.memory_space<vmem>>, %arg6: memref<1x4xf32, #tpu.memory_space<vmem>>, %arg7: memref<1x256x4xbf16, #tpu.memory_space<vmem>>, %arg8: memref<18x16x24xbf16, #tpu.memory_space<vmem>>, %arg9: memref<18x16x12xbf16, #tpu.memory_space<vmem>>) attributes {dimension_semantics = [#tpu.dimension_semantics<parallel>], iteration_bounds = array<i64: 2>, scalar_prefetch = 0 : i64, scratch_operands = 2 : i64, tpu.core_type = #tpu.core_type<tc>, window_params = [{transform_indices = @transform_0, window_bounds = array<i64: 1, 16, 16, 4>}, {transform_indices = @transform_1, window_bounds = array<i64: 1, 16, 16, 4>}, {pipeline_mode = #tpu.pipeline_mode<synchronous>, transform_indices = @transform_2, window_bounds = array<i64: 3, 24, 4>}, {pipeline_mode = #tpu.pipeline_mode<synchronous>, transform_indices = @transform_3, window_bounds = array<i64: 1, 4>}, {pipeline_mode = #tpu.pipeline_mode<synchronous>, transform_indices = @transform_4, window_bounds = array<i64: 3, 12, 4>}, {pipeline_mode = #tpu.pipeline_mode<synchronous>, transform_indices = @transform_5, window_bounds = array<i64: 1, 4>}, {transform_indices = @transform_6, window_bounds = array<i64: 1, 256, 4>}]} {
    %cst = arith.constant 0.000000e+00 : bf16
    %0 = vector.broadcast %cst : bf16 to vector<1x16x24xbf16>
    %c0 = arith.constant 0 : index
    %c0_0 = arith.constant 0 : index
    %c0_1 = arith.constant 0 : index
    %1 = vector.load %arg8[%c0, %c0_0, %c0_1] : memref<18x16x24xbf16, #tpu.memory_space<vmem>>, vector<1x16x24xbf16>
    tpu.vector_store %arg8[%c0, %c0_0, %c0_1], %0 {strides = array<i32>} : memref<18x16x24xbf16, #tpu.memory_space<vmem>>, vector<1x16x24xbf16>,
    %cst_2 = arith.constant 0.000000e+00 : bf16
    %2 = vector.broadcast %cst_2 : bf16 to vector<1x16x24xbf16>
    %c17 = arith.constant 17 : index
    %c0_3 = arith.constant 0 : index
    %c0_4 = arith.constant 0 : index
    %3 = vector.load %arg8[%c17, %c0_3, %c0_4] : memref<18x16x24xbf16, #tpu.memory_space<vmem>>, vector<1x16x24xbf16>
    tpu.vector_store %arg8[%c17, %c0_3, %c0_4], %2 {strides = array<i32>} : memref<18x16x24xbf16, #tpu.memory_space<vmem>>, vector<1x16x24xbf16>,
    %cst_5 = arith.constant 0.000000e+00 : bf16
    %4 = vector.broadcast %cst_5 : bf16 to vector<16x1x8xbf16>
    %c1 = arith.constant 1 : index
    %c0_6 = arith.constant 0 : index
    %c0_7 = arith.constant 0 : index
    %5 = vector.load %arg8[%c1, %c0_6, %c0_7] : memref<18x16x24xbf16, #tpu.memory_space<vmem>>, vector<16x1x8xbf16>
    tpu.vector_store %arg8[%c1, %c0_6, %c0_7], %4 {strides = array<i32>} : memref<18x16x24xbf16, #tpu.memory_space<vmem>>, vector<16x1x8xbf16>,
    %cst_8 = arith.constant 0.000000e+00 : bf16
    %6 = vector.broadcast %cst_8 : bf16 to vector<16x1x8xbf16>
    %c1_9 = arith.constant 1 : index
    %c15 = arith.constant 15 : index
    %c16 = arith.constant 16 : index
    %7 = vector.load %arg8[%c1_9, %c15, %c16] : memref<18x16x24xbf16, #tpu.memory_space<vmem>>, vector<16x1x8xbf16>
    tpu.vector_store %arg8[%c1_9, %c15, %c16], %6 {strides = array<i32>} : memref<18x16x24xbf16, #tpu.memory_space<vmem>>, vector<16x1x8xbf16>,
    %cst_10 = arith.constant 0.000000e+00 : bf16
    %8 = vector.broadcast %cst_10 : bf16 to vector<1x16x12xbf16>
    %c0_11 = arith.constant 0 : index
    %c0_12 = arith.constant 0 : index
    %c0_13 = arith.constant 0 : index
    %9 = vector.load %arg9[%c0_11, %c0_12, %c0_13] : memref<18x16x12xbf16, #tpu.memory_space<vmem>>, vector<1x16x12xbf16>
    tpu.vector_store %arg9[%c0_11, %c0_12, %c0_13], %8 {strides = array<i32>} : memref<18x16x12xbf16, #tpu.memory_space<vmem>>, vector<1x16x12xbf16>,
    %cst_14 = arith.constant 0.000000e+00 : bf16
    %10 = vector.broadcast %cst_14 : bf16 to vector<1x16x12xbf16>
    %c17_15 = arith.constant 17 : index
    %c0_16 = arith.constant 0 : index
    %c0_17 = arith.constant 0 : index
    %11 = vector.load %arg9[%c17_15, %c0_16, %c0_17] : memref<18x16x12xbf16, #tpu.memory_space<vmem>>, vector<1x16x12xbf16>
    tpu.vector_store %arg9[%c17_15, %c0_16, %c0_17], %10 {strides = array<i32>} : memref<18x16x12xbf16, #tpu.memory_space<vmem>>, vector<1x16x12xbf16>,
    %cst_18 = arith.constant 0.000000e+00 : bf16
    %12 = vector.broadcast %cst_18 : bf16 to vector<16x1x4xbf16>
    %c1_19 = arith.constant 1 : index
    %c0_20 = arith.constant 0 : index
    %c0_21 = arith.constant 0 : index
    %13 = vector.load %arg9[%c1_19, %c0_20, %c0_21] : memref<18x16x12xbf16, #tpu.memory_space<vmem>>, vector<16x1x4xbf16>
    tpu.vector_store %arg9[%c1_19, %c0_20, %c0_21], %12 {strides = array<i32>} : memref<18x16x12xbf16, #tpu.memory_space<vmem>>, vector<16x1x4xbf16>,
    %cst_22 = arith.constant 0.000000e+00 : bf16
    %14 = vector.broadcast %cst_22 : bf16 to vector<16x1x4xbf16>
    %c1_23 = arith.constant 1 : index
    %c15_24 = arith.constant 15 : index
    %c8 = arith.constant 8 : index
    %15 = vector.load %arg9[%c1_23, %c15_24, %c8] : memref<18x16x12xbf16, #tpu.memory_space<vmem>>, vector<16x1x4xbf16>
    tpu.vector_store %arg9[%c1_23, %c15_24, %c8], %14 {strides = array<i32>} : memref<18x16x12xbf16, #tpu.memory_space<vmem>>, vector<16x1x4xbf16>,
    %c0_25 = arith.constant 0 : index
    %c0_26 = arith.constant 0 : index
    %c0_27 = arith.constant 0 : index
    %c0_28 = arith.constant 0 : index
    %16 = vector.load %arg1[%c0_25, %c0_26, %c0_27, %c0_28] : memref<1x16x16x4xbf16, #tpu.memory_space<vmem>>, vector<1x16x16x4xbf16>
    %17 = vector.shape_cast %16 : vector<1x16x16x4xbf16> to vector<16x16x4xbf16>
    %18 = vector.extract_strided_slice %17 {offsets = [0, 0, 0], sizes = [16, 15, 4], strides = [1, 1, 1]} : vector<16x16x4xbf16> to vector<16x15x4xbf16>
    %c1_29 = arith.constant 1 : index
    %c1_30 = arith.constant 1 : index
    %c0_31 = arith.constant 0 : index
    %19 = vector.load %arg8[%c1_29, %c1_30, %c0_31] : memref<18x16x24xbf16, #tpu.memory_space<vmem>>, vector<16x15x4xbf16>
    tpu.vector_store %arg8[%c1_29, %c1_30, %c0_31], %18 {strides = array<i32>} : memref<18x16x24xbf16, #tpu.memory_space<vmem>>, vector<16x15x4xbf16>,
    %c1_32 = arith.constant 1 : index
    %c0_33 = arith.constant 0 : index
    %c8_34 = arith.constant 8 : index
    %20 = vector.load %arg8[%c1_32, %c0_33, %c8_34] : memref<18x16x24xbf16, #tpu.memory_space<vmem>>, vector<16x16x4xbf16>
    tpu.vector_store %arg8[%c1_32, %c0_33, %c8_34], %17 {strides = array<i32>} : memref<18x16x24xbf16, #tpu.memory_space<vmem>>, vector<16x16x4xbf16>,
    %21 = vector.extract_strided_slice %17 {offsets = [0, 1, 0], sizes = [16, 15, 4], strides = [1, 1, 1]} : vector<16x16x4xbf16> to vector<16x15x4xbf16>
    %c1_35 = arith.constant 1 : index
    %c0_36 = arith.constant 0 : index
    %c16_37 = arith.constant 16 : index
    %22 = vector.load %arg8[%c1_35, %c0_36, %c16_37] : memref<18x16x24xbf16, #tpu.memory_space<vmem>>, vector<16x15x4xbf16>
    tpu.vector_store %arg8[%c1_35, %c0_36, %c16_37], %21 {strides = array<i32>} : memref<18x16x24xbf16, #tpu.memory_space<vmem>>, vector<16x15x4xbf16>,
    %c0_38 = arith.constant 0 : index
    %c0_39 = arith.constant 0 : index
    %c0_40 = arith.constant 0 : index
    %c0_41 = arith.constant 0 : index
    %23 = vector.load %arg2[%c0_38, %c0_39, %c0_40, %c0_41] : memref<1x16x16x4xbf16, #tpu.memory_space<vmem>>, vector<1x16x16x4xbf16>
    %24 = vector.shape_cast %23 : vector<1x16x16x4xbf16> to vector<16x16x4xbf16>
    %25 = vector.extract_strided_slice %24 {offsets = [0, 0, 0], sizes = [16, 15, 4], strides = [1, 1, 1]} : vector<16x16x4xbf16> to vector<16x15x4xbf16>
    %c1_42 = arith.constant 1 : index
    %c1_43 = arith.constant 1 : index
    %c4 = arith.constant 4 : index
    %26 = vector.load %arg8[%c1_42, %c1_43, %c4] : memref<18x16x24xbf16, #tpu.memory_space<vmem>>, vector<16x15x4xbf16>
    tpu.vector_store %arg8[%c1_42, %c1_43, %c4], %25 {strides = array<i32>} : memref<18x16x24xbf16, #tpu.memory_space<vmem>>, vector<16x15x4xbf16>,
    %c1_44 = arith.constant 1 : index
    %c0_45 = arith.constant 0 : index
    %c12 = arith.constant 12 : index
    %27 = vector.load %arg8[%c1_44, %c0_45, %c12] : memref<18x16x24xbf16, #tpu.memory_space<vmem>>, vector<16x16x4xbf16>
    tpu.vector_store %arg8[%c1_44, %c0_45, %c12], %24 {strides = array<i32>} : memref<18x16x24xbf16, #tpu.memory_space<vmem>>, vector<16x16x4xbf16>,
    %28 = vector.extract_strided_slice %24 {offsets = [0, 1, 0], sizes = [16, 15, 4], strides = [1, 1, 1]} : vector<16x16x4xbf16> to vector<16x15x4xbf16>
    %c1_46 = arith.constant 1 : index
    %c0_47 = arith.constant 0 : index
    %c20 = arith.constant 20 : index
    %29 = vector.load %arg8[%c1_46, %c0_47, %c20] : memref<18x16x24xbf16, #tpu.memory_space<vmem>>, vector<16x15x4xbf16>
    tpu.vector_store %arg8[%c1_46, %c0_47, %c20], %28 {strides = array<i32>} : memref<18x16x24xbf16, #tpu.memory_space<vmem>>, vector<16x15x4xbf16>,
    %cst_48 = arith.constant 0.000000e+00 : f32
    %30 = vector.broadcast %cst_48 : f32 to vector<256x4xf32>
    %c0_49 = arith.constant 0 : index
    %c0_50 = arith.constant 0 : index
    %c0_51 = arith.constant 0 : index
    %31 = vector.load %arg8[%c0_49, %c0_50, %c0_51] : memref<18x16x24xbf16, #tpu.memory_space<vmem>>, vector<16x16x24xbf16>
    %32 = vector.shape_cast %31 : vector<16x16x24xbf16> to vector<256x24xbf16>
    %c0_52 = arith.constant 0 : index
    %c0_53 = arith.constant 0 : index
    %c0_54 = arith.constant 0 : index
    %33 = vector.load %arg3[%c0_52, %c0_53, %c0_54] : memref<3x24x4xbf16, #tpu.memory_space<vmem>>, vector<1x24x4xbf16>
    %34 = vector.shape_cast %33 : vector<1x24x4xbf16> to vector<24x4xbf16>
    %cst_55 = arith.constant dense<0.000000e+00> : vector<256x4xf32>
    %35 = tpu.matmul %32, %34, %cst_55 {dimension_numbers = #tpu.dot_dimension_numbers<[1], [0], [0], [1], [0, 0, 1, 1], [], []>} : vector<256x24xbf16>, vector<24x4xbf16>, vector<256x4xf32> -> vector<256x4xf32>
    %36 = arith.addf %30, %35 : vector<256x4xf32>
    %c1_56 = arith.constant 1 : index
    %c0_57 = arith.constant 0 : index
    %c0_58 = arith.constant 0 : index
    %37 = vector.load %arg8[%c1_56, %c0_57, %c0_58] : memref<18x16x24xbf16, #tpu.memory_space<vmem>>, vector<16x16x24xbf16>
    %38 = vector.shape_cast %37 : vector<16x16x24xbf16> to vector<256x24xbf16>
    %c1_59 = arith.constant 1 : index
    %c0_60 = arith.constant 0 : index
    %c0_61 = arith.constant 0 : index
    %39 = vector.load %arg3[%c1_59, %c0_60, %c0_61] : memref<3x24x4xbf16, #tpu.memory_space<vmem>>, vector<1x24x4xbf16>
    %40 = vector.shape_cast %39 : vector<1x24x4xbf16> to vector<24x4xbf16>
    %cst_62 = arith.constant dense<0.000000e+00> : vector<256x4xf32>
    %41 = tpu.matmul %38, %40, %cst_62 {dimension_numbers = #tpu.dot_dimension_numbers<[1], [0], [0], [1], [0, 0, 1, 1], [], []>} : vector<256x24xbf16>, vector<24x4xbf16>, vector<256x4xf32> -> vector<256x4xf32>
    %42 = arith.addf %36, %41 : vector<256x4xf32>
    %c2 = arith.constant 2 : index
    %c0_63 = arith.constant 0 : index
    %c0_64 = arith.constant 0 : index
    %43 = vector.load %arg8[%c2, %c0_63, %c0_64] : memref<18x16x24xbf16, #tpu.memory_space<vmem>>, vector<16x16x24xbf16>
    %44 = vector.shape_cast %43 : vector<16x16x24xbf16> to vector<256x24xbf16>
    %c2_65 = arith.constant 2 : index
    %c0_66 = arith.constant 0 : index
    %c0_67 = arith.constant 0 : index
    %45 = vector.load %arg3[%c2_65, %c0_66, %c0_67] : memref<3x24x4xbf16, #tpu.memory_space<vmem>>, vector<1x24x4xbf16>
    %46 = vector.shape_cast %45 : vector<1x24x4xbf16> to vector<24x4xbf16>
    %cst_68 = arith.constant dense<0.000000e+00> : vector<256x4xf32>
    %47 = tpu.matmul %44, %46, %cst_68 {dimension_numbers = #tpu.dot_dimension_numbers<[1], [0], [0], [1], [0, 0, 1, 1], [], []>} : vector<256x24xbf16>, vector<24x4xbf16>, vector<256x4xf32> -> vector<256x4xf32>
    %48 = arith.addf %42, %47 : vector<256x4xf32>
    %c0_69 = arith.constant 0 : index
    %c0_70 = arith.constant 0 : index
    %49 = vector.load %arg4[%c0_69, %c0_70] : memref<1x4xf32, #tpu.memory_space<vmem>>, vector<1x4xf32>
    %50 = vector.broadcast %49 : vector<1x4xf32> to vector<256x4xf32>
    %51 = arith.addf %48, %50 : vector<256x4xf32>
    %cst_71 = arith.constant 0.000000e+00 : f32
    %52 = vector.broadcast %cst_71 : f32 to vector<256x4xf32>
    %53 = arith.maximumf %51, %52 : vector<256x4xf32>
    %54 = arith.truncf %53 : vector<256x4xf32> to vector<256x4xbf16>
    %55 = vector.shape_cast %54 : vector<256x4xbf16> to vector<16x16x4xbf16>
    %56 = vector.extract_strided_slice %55 {offsets = [0, 0, 0], sizes = [16, 15, 4], strides = [1, 1, 1]} : vector<16x16x4xbf16> to vector<16x15x4xbf16>
    %c1_72 = arith.constant 1 : index
    %c1_73 = arith.constant 1 : index
    %c0_74 = arith.constant 0 : index
    %57 = vector.load %arg9[%c1_72, %c1_73, %c0_74] : memref<18x16x12xbf16, #tpu.memory_space<vmem>>, vector<16x15x4xbf16>
    tpu.vector_store %arg9[%c1_72, %c1_73, %c0_74], %56 {strides = array<i32>} : memref<18x16x12xbf16, #tpu.memory_space<vmem>>, vector<16x15x4xbf16>,
    %c1_75 = arith.constant 1 : index
    %c0_76 = arith.constant 0 : index
    %c4_77 = arith.constant 4 : index
    %58 = vector.load %arg9[%c1_75, %c0_76, %c4_77] : memref<18x16x12xbf16, #tpu.memory_space<vmem>>, vector<16x16x4xbf16>
    tpu.vector_store %arg9[%c1_75, %c0_76, %c4_77], %55 {strides = array<i32>} : memref<18x16x12xbf16, #tpu.memory_space<vmem>>, vector<16x16x4xbf16>,
    %59 = vector.extract_strided_slice %55 {offsets = [0, 1, 0], sizes = [16, 15, 4], strides = [1, 1, 1]} : vector<16x16x4xbf16> to vector<16x15x4xbf16>
    %c1_78 = arith.constant 1 : index
    %c0_79 = arith.constant 0 : index
    %c8_80 = arith.constant 8 : index
    %60 = vector.load %arg9[%c1_78, %c0_79, %c8_80] : memref<18x16x12xbf16, #tpu.memory_space<vmem>>, vector<16x15x4xbf16>
    tpu.vector_store %arg9[%c1_78, %c0_79, %c8_80], %59 {strides = array<i32>} : memref<18x16x12xbf16, #tpu.memory_space<vmem>>, vector<16x15x4xbf16>,
    %cst_81 = arith.constant 0.000000e+00 : f32
    %61 = vector.broadcast %cst_81 : f32 to vector<256x4xf32>
    %c0_82 = arith.constant 0 : index
    %c0_83 = arith.constant 0 : index
    %c0_84 = arith.constant 0 : index
    %62 = vector.load %arg9[%c0_82, %c0_83, %c0_84] : memref<18x16x12xbf16, #tpu.memory_space<vmem>>, vector<16x16x12xbf16>
    %63 = vector.shape_cast %62 : vector<16x16x12xbf16> to vector<256x12xbf16>
    %c0_85 = arith.constant 0 : index
    %c0_86 = arith.constant 0 : index
    %c0_87 = arith.constant 0 : index
    %64 = vector.load %arg5[%c0_85, %c0_86, %c0_87] : memref<3x12x4xbf16, #tpu.memory_space<vmem>>, vector<1x12x4xbf16>
    %65 = vector.shape_cast %64 : vector<1x12x4xbf16> to vector<12x4xbf16>
    %cst_88 = arith.constant dense<0.000000e+00> : vector<256x4xf32>
    %66 = tpu.matmul %63, %65, %cst_88 {dimension_numbers = #tpu.dot_dimension_numbers<[1], [0], [0], [1], [0, 0, 1, 1], [], []>} : vector<256x12xbf16>, vector<12x4xbf16>, vector<256x4xf32> -> vector<256x4xf32>
    %67 = arith.addf %61, %66 : vector<256x4xf32>
    %c1_89 = arith.constant 1 : index
    %c0_90 = arith.constant 0 : index
    %c0_91 = arith.constant 0 : index
    %68 = vector.load %arg9[%c1_89, %c0_90, %c0_91] : memref<18x16x12xbf16, #tpu.memory_space<vmem>>, vector<16x16x12xbf16>
    %69 = vector.shape_cast %68 : vector<16x16x12xbf16> to vector<256x12xbf16>
    %c1_92 = arith.constant 1 : index
    %c0_93 = arith.constant 0 : index
    %c0_94 = arith.constant 0 : index
    %70 = vector.load %arg5[%c1_92, %c0_93, %c0_94] : memref<3x12x4xbf16, #tpu.memory_space<vmem>>, vector<1x12x4xbf16>
    %71 = vector.shape_cast %70 : vector<1x12x4xbf16> to vector<12x4xbf16>
    %cst_95 = arith.constant dense<0.000000e+00> : vector<256x4xf32>
    %72 = tpu.matmul %69, %71, %cst_95 {dimension_numbers = #tpu.dot_dimension_numbers<[1], [0], [0], [1], [0, 0, 1, 1], [], []>} : vector<256x12xbf16>, vector<12x4xbf16>, vector<256x4xf32> -> vector<256x4xf32>
    %73 = arith.addf %67, %72 : vector<256x4xf32>
    %c2_96 = arith.constant 2 : index
    %c0_97 = arith.constant 0 : index
    %c0_98 = arith.constant 0 : index
    %74 = vector.load %arg9[%c2_96, %c0_97, %c0_98] : memref<18x16x12xbf16, #tpu.memory_space<vmem>>, vector<16x16x12xbf16>
    %75 = vector.shape_cast %74 : vector<16x16x12xbf16> to vector<256x12xbf16>
    %c2_99 = arith.constant 2 : index
    %c0_100 = arith.constant 0 : index
    %c0_101 = arith.constant 0 : index
    %76 = vector.load %arg5[%c2_99, %c0_100, %c0_101] : memref<3x12x4xbf16, #tpu.memory_space<vmem>>, vector<1x12x4xbf16>
    %77 = vector.shape_cast %76 : vector<1x12x4xbf16> to vector<12x4xbf16>
    %cst_102 = arith.constant dense<0.000000e+00> : vector<256x4xf32>
    %78 = tpu.matmul %75, %77, %cst_102 {dimension_numbers = #tpu.dot_dimension_numbers<[1], [0], [0], [1], [0, 0, 1, 1], [], []>} : vector<256x12xbf16>, vector<12x4xbf16>, vector<256x4xf32> -> vector<256x4xf32>
    %79 = arith.addf %73, %78 : vector<256x4xf32>
    %c0_103 = arith.constant 0 : index
    %c0_104 = arith.constant 0 : index
    %80 = vector.load %arg6[%c0_103, %c0_104] : memref<1x4xf32, #tpu.memory_space<vmem>>, vector<1x4xf32>
    %81 = vector.broadcast %80 : vector<1x4xf32> to vector<256x4xf32>
    %82 = arith.addf %79, %81 : vector<256x4xf32>
    %cst_105 = arith.constant 0.000000e+00 : f32
    %83 = vector.broadcast %cst_105 : f32 to vector<256x4xf32>
    %84 = arith.maximumf %82, %83 : vector<256x4xf32>
    %85 = arith.truncf %84 : vector<256x4xf32> to vector<256x4xbf16>
    %c0_106 = arith.constant 0 : index
    %c0_107 = arith.constant 0 : index
    %c0_108 = arith.constant 0 : index
    %86 = vector.load %arg7[%c0_106, %c0_107, %c0_108] : memref<1x256x4xbf16, #tpu.memory_space<vmem>>, vector<1x256x4xbf16>
    %87 = vector.shape_cast %86 : vector<1x256x4xbf16> to vector<256x4xbf16>
    %88 = vector.shape_cast %85 : vector<256x4xbf16> to vector<1x256x4xbf16>
    tpu.vector_store %arg7[%c0_106, %c0_107, %c0_108], %88 {strides = array<i32>} : memref<1x256x4xbf16, #tpu.memory_space<vmem>>, vector<1x256x4xbf16>,
    return
  }
  func.func @transform_0(%arg0: i32) -> (i32, i32, i32, i32) {
    %c0_i32 = arith.constant 0 : i32
    %c0_i32_0 = arith.constant 0 : i32
    %c0_i32_1 = arith.constant 0 : i32
    %c0_i32_2 = arith.constant 0 : i32
    return %arg0, %c0_i32, %c0_i32_0, %c0_i32_1 : i32, i32, i32, i32
  }
  func.func @transform_1(%arg0: i32) -> (i32, i32, i32, i32) {
    %c0_i32 = arith.constant 0 : i32
    %c0_i32_0 = arith.constant 0 : i32
    %c0_i32_1 = arith.constant 0 : i32
    %c0_i32_2 = arith.constant 0 : i32
    return %arg0, %c0_i32, %c0_i32_0, %c0_i32_1 : i32, i32, i32, i32
  }
  func.func @transform_2(%arg0: i32) -> (i32, i32, i32) {
    %c0_i32 = arith.constant 0 : i32
    %c0_i32_0 = arith.constant 0 : i32
    %c0_i32_1 = arith.constant 0 : i32
    %c0_i32_2 = arith.constant 0 : i32
    return %c0_i32, %c0_i32_0, %c0_i32_1 : i32, i32, i32
  }
  func.func @transform_3(%arg0: i32) -> (i32, i32) {
    %c0_i32 = arith.constant 0 : i32
    %c0_i32_0 = arith.constant 0 : i32
    %c0_i32_1 = arith.constant 0 : i32
    return %c0_i32, %c0_i32_0 : i32, i32
  }
  func.func @transform_4(%arg0: i32) -> (i32, i32, i32) {
    %c0_i32 = arith.constant 0 : i32
    %c0_i32_0 = arith.constant 0 : i32
    %c0_i32_1 = arith.constant 0 : i32
    %c0_i32_2 = arith.constant 0 : i32
    return %c0_i32, %c0_i32_0, %c0_i32_1 : i32, i32, i32
  }
  func.func @transform_5(%arg0: i32) -> (i32, i32) {
    %c0_i32 = arith.constant 0 : i32
    %c0_i32_0 = arith.constant 0 : i32
    %c0_i32_1 = arith.constant 0 : i32
    return %c0_i32, %c0_i32_0 : i32, i32
  }
  func.func @transform_6(%arg0: i32) -> (i32, i32, i32) {
    %c0_i32 = arith.constant 0 : i32
    %c0_i32_0 = arith.constant 0 : i32
    %c0_i32_1 = arith.constant 0 : i32
    return %arg0, %c0_i32, %c0_i32_0 : i32, i32, i32
  }
}

</mosaic_0001>

<llo_original>
// kernel: tile.7
$region0: #{tile.7}
  %s0 = inlined_call_operand.vmem [shape: f32[4,4], index: 0, kind: input, shape index: {}]
  %s1 = inlined_call_operand.vmem [shape: f32[1,16], index: 1, kind: output, shape index: {}]
  $region1: #{tile.7} parent=0
    #allocation0 [shape = 'u8[4096]{0}', space=vmem, size = 0x1000, scoped, tag = 'scoped mem for output reshape']
    #allocation1 [shape = 'u8[4096]{0}', space=vmem, size = 0x1000, scoped, tag = 'scoped mem for input reshape']
    %s3 = ssub.s32 16, 1
    %v4 = vld [vmem:[%s0] sm:%s3]
    %5 = vst [vmem:[#allocation1] sm:%s3] %v4
    %v6 = vld [vmem:[#allocation1] sm:$0x1]
    %vm7 = vcmask 31744
    %8 = vst.msk [vmem:[#allocation0] sm:$0x1] %vm7, %v6
    %s9 = scalar_lea.vmem [#allocation1], 3
    %v10 = vld [vmem:[%s9] sm:$0x1]
    %11 = vrot.lane.b32.xlu0 %v10, 12
    %v12 = vpop.permute.xlu0 %11
    %vm13 = vcmask 130144
    %14 = vst.msk [vmem:[#allocation0] sm:$0x1] %vm13, %v12
    %s15 = scalar_lea.vmem [#allocation1], 2
    %v16 = vld [vmem:[%s15] sm:$0x1]
    %17 = vrot.lane.b32.xlu0 %v16, 8
    %v18 = vpop.permute.xlu0 %17
    %vm19 = vcmask 97344
    %20 = vst.msk [vmem:[#allocation0] sm:$0x1] %vm19, %v18
    %s21 = scalar_lea.vmem [#allocation1], 1
    %v22 = vld [vmem:[%s21] sm:$0x1]
    %23 = vrot.lane.b32.xlu0 %v22, 4
    %v24 = vpop.permute.xlu0 %23
    %vm25 = vcmask 64544
    %26 = vst.msk [vmem:[#allocation0] sm:$0x1] %vm25, %v24
    %s28 = ssub.s32 2, 1
    %v29 = vld [vmem:[#allocation0] sm:%s28]
    %s31 = ssub.s32 2, 1
    %32 = vst [vmem:[%s1] sm:%s31] %v29

// kernel: tile.6
$region0: #{tile.6}
  #allocation0 [shape = 's32[1]{0}', space=sflag, size = 0x4, scoped, tag = 'scoped memory for tile.6']
  %s0 = inlined_call_operand.vmem [shape: f32[4], index: 0, kind: input, shape index: {}]
  %s1 = inlined_call_operand.vmem [shape: f32[4,4], index: 1, kind: output, shape index: {}]
  // Predicated region
  $region2: #{tile.6} parent=0 // pred_check
    _
  $region3: #{tile.6} parent=0 // pred_check_branch
    %3 = sbr.rel (0) target = $region5
  $region4: #{tile.6} parent=0 // pred_region
    _
  $region5: #{tile.6} parent=0 // pred_fallthru
    _
  %v4 = vld [vmem:[%s0] ss:$0 sm:$0xff]
  %5 = vst [vmem:[%s1] sm:$0xf] %v4

// kernel: up_forward.2
$region0: #{up_forward.2}
  #allocation0 [shape = 'u32[]', space=smem, size = 0x4, offset = 0x4, fixed_abs, tag = 'smem constant byte address 0x4 - core index']
  #allocation1 [shape = 'u32[72,128]{1,0:T(1,128)}', space=vmem, size = 0x9000, scoped, tag = 'internal scratch']
  %s0 = inlined_call_operand.vmem [shape: bf16[2,8,8,8], index: 0, kind: input, shape index: {}]
  %s1 = inlined_call_operand.vmem [shape: bf16[8,16], index: 1, kind: input, shape index: {}]
  %s2 = inlined_call_operand.vmem [shape: f32[1,16], index: 2, kind: input, shape index: {}]
  %s3 = inlined_call_operand.vmem [shape: bf16[2,8,2,8,8], index: 3, kind: output, shape index: {}]
  %s4 = sld [smem:[#allocation0]]
  $region45: #{up_forward.2} parent=0
    _
  %s6 = ssub.s32 1, %s4
  %s7 = scalar_select 0, %s6, %s4
  loop: start=0, step=1, limit=4
  $region2: #{up_forward.2} parent=0 // loop_pre_header
    _
  $region3: #{up_forward.2} parent=0 // loop_header
    %s9 = sphi 0, %s13
    %p10 = scmp.ge.s32.totalorder %s9, 4
    %s19 = sphi 0, %s21
    %s22 = sphi 0, %s19
    %s23 = sphi 0, %s22
    %s39 = sphi 0, %s23
    %s43 = sphi 0, %s43
    %s45 = sphi 0, %s43
    %s46 = sphi 0, %s45
    %s60 = sphi 0, %s46
    %s64 = sphi 0, %s64
    %s66 = sphi 0, %s64
    %s67 = sphi 0, %s66
    %s81 = sphi 0, %s67
    %s87 = sphi 0, %s89
    %s90 = sphi 0, %s87
    %s91 = sphi 0, %s90
    %s107 = sphi 0, %s91
  $region4: #{up_forward.2} parent=0 // loop_header_branch
    %12 = sbr.rel (%p10) target = $region8
  $region5: #{up_forward.2} parent=0 // loop_body
    %s14 = ssub.s32 %s9, 1
    %s15 = ssub.s32 %s9, 2
    %s16 = sadd.s32 %s9, 1
    %s17 = ssub.s32 %s9, %s16
    %p18 = scmp.eq.s32.totalorder %s17, 0
    %s20 = sadd.s32 %s19, 1
    %s21 = scalar_select %p18, %s19, %s20
    %p24 = pneg %p18
    %p25 = scmp.eq.s32.totalorder %s9, 1
    %p26 = por %p24, %p25
    %p27 = scmp.ne.s32.totalorder %s19, %s22
    %p28 = scmp.eq.s32.totalorder %s9, 0
    %p29 = por %p27, %p28
    %p30 = scmp.ne.s32.totalorder %s19, %s22
    %p31 = scmp.eq.s32.totalorder %s14, 1
    %p32 = por %p30, %p31
    %p33 = scmp.ne.s32.totalorder %s22, %s23
    %p34 = scmp.eq.s32.totalorder %s14, 0
    %p35 = por %p33, %p34
    %p36 = scmp.ne.s32.totalorder %s22, %s23
    %p37 = scmp.eq.s32.totalorder %s15, 1
    %p38 = por %p36, %p37
    %p40 = scmp.ne.s32.totalorder %s23, %s39
    %p41 = scmp.eq.s32.totalorder %s15, 0
    %p42 = por %p40, %p41
    %s44 = sadd.s32 %s43, 1
    %p47 = scmp.eq.s32.totalorder %s9, 1
    %p48 = scmp.ne.s32.totalorder %s43, %s45
    %p49 = scmp.eq.s32.totalorder %s9, 0
    %p50 = por %p48, %p49
    %p51 = scmp.ne.s32.totalorder %s43, %s45
    %p52 = scmp.eq.s32.totalorder %s14, 1
    %p53 = por %p51, %p52
    %p54 = scmp.ne.s32.totalorder %s45, %s46
    %p55 = scmp.eq.s32.totalorder %s14, 0
    %p56 = por %p54, %p55
    %p57 = scmp.ne.s32.totalorder %s45, %s46
    %p58 = scmp.eq.s32.totalorder %s15, 1
    %p59 = por %p57, %p58
    %p61 = scmp.ne.s32.totalorder %s46, %s60
    %p62 = scmp.eq.s32.totalorder %s15, 0
    %p63 = por %p61, %p62
    %s65 = sadd.s32 %s64, 1
    %p68 = scmp.eq.s32.totalorder %s9, 1
    %p69 = scmp.ne.s32.totalorder %s64, %s66
    %p70 = scmp.eq.s32.totalorder %s9, 0
    %p71 = por %p69, %p70
    %p72 = scmp.ne.s32.totalorder %s64, %s66
    %p73 = scmp.eq.s32.totalorder %s14, 1
    %p74 = por %p72, %p73
    %p75 = scmp.ne.s32.totalorder %s66, %s67
    %p76 = scmp.eq.s32.totalorder %s14, 0
    %p77 = por %p75, %p76
    %p78 = scmp.ne.s32.totalorder %s66, %s67
    %p79 = scmp.eq.s32.totalorder %s15, 1
    %p80 = por %p78, %p79
    %p82 = scmp.ne.s32.totalorder %s67, %s81
    %p83 = scmp.eq.s32.totalorder %s15, 0
    %p84 = por %p82, %p83
    %s85 = ssub.s32 %s9, %s16
    %p86 = scmp.eq.s32.totalorder %s85, 0
    %s88 = sadd.s32 %s87, 1
    %s89 = scalar_select %p86, %s87, %s88
    %p92 = pneg %p86
    %p93 = scmp.eq.s32.totalorder %s9, 1
    %p94 = por %p92, %p93
    %p95 = scmp.ne.s32.totalorder %s87, %s90
    %p96 = scmp.eq.s32.totalorder %s9, 0
    %p97 = por %p95, %p96
    %p98 = scmp.ne.s32.totalorder %s87, %s90
    %p99 = scmp.eq.s32.totalorder %s14, 1
    %p100 = por %p98, %p99
    %p101 = scmp.ne.s32.totalorder %s90, %s91
    %p102 = scmp.eq.s32.totalorder %s14, 0
    %p103 = por %p101, %p102
    %p104 = scmp.ne.s32.totalorder %s90, %s91
    %p105 = scmp.eq.s32.totalorder %s15, 1
    %p106 = por %p104, %p105
    %p108 = scmp.ne.s32.totalorder %s91, %s107
    %p109 = scmp.eq.s32.totalorder %s15, 0
    %p110 = por %p108, %p109
    %p111 = scmp.le.s32.totalorder 1, %s9
    %p112 = scmp.lt.s32.totalorder %s9, 3
    %p113 = pnand %p111, %p112
    %p114 = pneg %p113
    // Predicated region
    $region9: #{up_forward.2} parent=5 // pred_check
      _
    $region10: #{up_forward.2} parent=5 // pred_check_branch
      %116 = sbr.rel (%p113) target = $region12
    $region11: #{up_forward.2} parent=5 // pred_region
      %s117 = ssub.s32 %s9, 1
      // Predicated region
      $region13: #{up_forward.2} parent=11 // pred_check
        %p118 = pneg %p56
      $region14: #{up_forward.2} parent=11 // pred_check_branch
        %120 = sbr.rel (%p118) target = $region16
      $region15: #{up_forward.2} parent=11 // pred_region
        _
      $region16: #{up_forward.2} parent=11 // pred_fallthru
        _
      // Predicated region
      $region17: #{up_forward.2} parent=11 // pred_check
        %p121 = pneg %p77
      $region18: #{up_forward.2} parent=11 // pred_check_branch
        %123 = sbr.rel (%p121) target = $region20
      $region19: #{up_forward.2} parent=11 // pred_region
        _
      $region20: #{up_forward.2} parent=11 // pred_fallthru
        _
    $region12: #{up_forward.2} parent=5 // pred_fallthru
      _
    %p124 = scmp.lt.s32.totalorder %s9, 2
    // Predicated region
    $region21: #{up_forward.2} parent=5 // pred_check
      %p125 = pneg %p124
    $region22: #{up_forward.2} parent=5 // pred_check_branch
      %127 = sbr.rel (%p125) target = $region24
    $region23: #{up_forward.2} parent=5 // pred_region
      // Predicated region
      $region25: #{up_forward.2} parent=23 // pred_check
        %p128 = pneg %p29
      $region26: #{up_forward.2} parent=23 // pred_check_branch
        %130 = sbr.rel (%p128) target = $region28
      $region27: #{up_forward.2} parent=23 // pred_region
        %p131 = scmp.lt.s32.totalorder %s9, 1
        %s132 = scalar_select %p131, %s9, 1
        %s133 = smul.addr %s132, 8
        %s134 = smul.addr %s133, 4
        %s135 = scalar_lea.vmem %s0, %s134
      $region28: #{up_forward.2} parent=23 // pred_fallthru
        _
    $region24: #{up_forward.2} parent=5 // pred_fallthru
      _
    %p136 = scmp.le.s32.totalorder 1, %s9
    %p137 = scmp.lt.s32.totalorder %s9, 3
    %p138 = pnand %p136, %p137
    %p139 = pneg %p138
    // Predicated region
    $region29: #{up_forward.2} parent=5 // pred_check
      _
    $region30: #{up_forward.2} parent=5 // pred_check_branch
      %141 = sbr.rel (%p138) target = $region32
    $region31: #{up_forward.2} parent=5 // pred_region
      %s142 = ssub.s32 %s9, 1
      %p143 = scmp.lt.s32.totalorder %s14, 1
      %s144 = scalar_select %p143, %s14, 1
      %s145 = smul.addr %s144, 8
      %s146 = smul.addr %s145, 4
      %s147 = scalar_lea.vmem %s0, %s146
      %p148 = pneg %p35
      %p149 = pneg %p32
      %p150 = pneg %p56
      %p151 = pneg %p53
      %p152 = pneg %p77
      %p153 = pneg %p74
      %p154 = pneg %p103
      %p155 = pneg %p100
      %p156 = scmp.lt.s32.totalorder %s14, 1
      %s157 = scalar_select %p156, %s14, 1
      %s158 = smul.addr %s157, 16
      %s159 = smul.addr %s158, 4
      %s160 = scalar_lea.vmem %s3, %s159
      %p161 = scmp.lt.s32.totalorder %s14, 1
      %s162 = scalar_select %p161, %s14, 1
      %s163 = smul.addr %s162, 8
      %s164 = smul.addr %s163, 4
      %s165 = scalar_lea.vmem %s0, %s164
      %p166 = scmp.lt.s32.totalorder %s14, 1
      %s167 = scalar_select %p166, %s14, 1
      %s168 = smul.addr %s167, 16
      %s169 = smul.addr %s168, 4
      %s170 = scalar_lea.vmem %s3, %s169
      %v172 = vld [vmem:[%s165] sm:$0xf]
      %v173 = vld [vmem:[%s165 + $0x4] sm:$0xf]
      %v174 = vld [vmem:[%s165 + $0x8] sm:$0xf]
      %v175 = vld [vmem:[%s165 + $0xc] sm:$0xf]
      %v176 = vld [vmem:[%s165 + $0x10] sm:$0xf]
      %v177 = vld [vmem:[%s165 + $0x14] sm:$0xf]
      %v178 = vld [vmem:[%s165 + $0x18] sm:$0xf]
      %v179 = vld [vmem:[%s165 + $0x1c] sm:$0xf]
      %v180 = vld [vmem:[%s1] sm:$0xf]
      %v181 = vld [vmem:[%s2] sm:$0x1]
      %v183 = vperm.slane %v181, 0
      %v193 = vunpack.c.l.b16 %v172
      %v194 = vunpack.c.l.b16 %v173
      %v195 = vunpack.c.l.b16 %v174
      %v196 = vunpack.c.l.b16 %v175
      %v197 = vunpack.c.l.b16 %v176
      %v198 = vunpack.c.l.b16 %v177
      %v199 = vunpack.c.l.b16 %v178
      %v200 = vunpack.c.l.b16 %v179
      %v201 = vpack.c.b16 %v194, %v193
      %v202 = vpack.c.b16 %v196, %v195
      %v203 = vpack.c.b16 %v198, %v197
      %v204 = vpack.c.b16 %v200, %v199
      %vm205 = vcmask 64512
      %v207 = vsel %vm205, %v201, 0
      %v210 = vsel %vm205, %v202, 0
      %v213 = vsel %vm205, %v203, 0
      %v216 = vsel %vm205, %v204, 0
      %vm218 = vcmask 1043456
      %v220 = vsel %vm218, %v180, 0
      %222 = vmatpush.bf16.msra.mxu0 0
      %223 = vmatpush.bf16.msra.mxu0 0
      %224 = vmatpush.bf16.msra.mxu0 0
      %225 = vmatpush.bf16.msra.mxu0 0
      %226 = vmatpush.bf16.msra.mxu0 0
      %227 = vmatpush.bf16.msra.mxu0 0
      %228 = vmatpush.bf16.msra.mxu0 0
      %229 = vmatpush.bf16.msra.mxu0 %v220
      %230 = vmatmul.bf16.gmra.mxu0 %v207
      %v231 = vpop.f32.mrf.mxu0
      %v232 = vadd.f32 %v183, %v231
      %v233 = vpop.f32.mrf.mxu0
      %v234 = vadd.f32 %v183, %v233
      %235 = vmatmul.bf16.gmra.mxu0 %v210
      %v236 = vpop.f32.mrf.mxu0
      %v237 = vadd.f32 %v183, %v236
      %v238 = vpop.f32.mrf.mxu0
      %v239 = vadd.f32 %v183, %v238
      %240 = vmatmul.bf16.gmra.mxu0 %v213
      %v241 = vpop.f32.mrf.mxu0
      %v242 = vadd.f32 %v183, %v241
      %v243 = vpop.f32.mrf.mxu0
      %v244 = vadd.f32 %v183, %v243
      %245 = vmatmul.bf16.gmra.mxu0 %v216
      %v246 = vpop.f32.mrf.mxu0
      %v247 = vadd.f32 %v183, %v246
      %v248 = vpop.f32.mrf.mxu0
      %v249 = vadd.f32 %v183, %v248
      %250 = vdwg.mxu0
      %v251 = vpack.c.bf16 %v232, %v232
      %v252 = vpack.c.bf16 %v234, %v234
      %v253 = vpack.c.bf16 %v237, %v237
      %v254 = vpack.c.bf16 %v239, %v239
      %v255 = vpack.c.bf16 %v242, %v242
      %v256 = vpack.c.bf16 %v244, %v244
      %v257 = vpack.c.bf16 %v247, %v247
      %v258 = vpack.c.bf16 %v249, %v249
      %vm259 = vcmask 60416
      %260 = vst.msk [vmem:[%s170] sm:$0xf] %vm259, %v251
      %261 = vst.msk [vmem:[%s170 + $0x8] sm:$0xf] %vm259, %v252
      %262 = vst.msk [vmem:[%s170 + $0x10] sm:$0xf] %vm259, %v253
      %263 = vst.msk [vmem:[%s170 + $0x18] sm:$0xf] %vm259, %v254
      %264 = vst.msk [vmem:[%s170 + $0x20] sm:$0xf] %vm259, %v255
      %265 = vst.msk [vmem:[%s170 + $0x28] sm:$0xf] %vm259, %v256
      %266 = vst.msk [vmem:[%s170 + $0x30] sm:$0xf] %vm259, %v257
      %267 = vst.msk [vmem:[%s170 + $0x38] sm:$0xf] %vm259, %v258
      %276 = vrot.lane.b32.xlu0 %v251, 120
      %v277 = vpop.permute.xlu0 %276
      %278 = vrot.lane.b32.xlu0 %v252, 120
      %v279 = vpop.permute.xlu0 %278
      %280 = vrot.lane.b32.xlu0 %v253, 120
      %v281 = vpop.permute.xlu0 %280
      %282 = vrot.lane.b32.xlu0 %v254, 120
      %v283 = vpop.permute.xlu0 %282
      %284 = vrot.lane.b32.xlu0 %v255, 120
      %v285 = vpop.permute.xlu0 %284
      %286 = vrot.lane.b32.xlu0 %v256, 120
      %v287 = vpop.permute.xlu0 %286
      %288 = vrot.lane.b32.xlu0 %v257, 120
      %v289 = vpop.permute.xlu0 %288
      %290 = vrot.lane.b32.xlu0 %v258, 120
      %v291 = vpop.permute.xlu0 %290
      %s300 = scalar_lea.vmem %s170, 4
      %301 = vst.msk [vmem:[%s300] sm:$0xf] %vm259, %v277
      %302 = vst.msk [vmem:[%s300 + $0x8] sm:$0xf] %vm259, %v279
      %303 = vst.msk [vmem:[%s300 + $0x10] sm:$0xf] %vm259, %v281
      %304 = vst.msk [vmem:[%s300 + $0x18] sm:$0xf] %vm259, %v283
      %305 = vst.msk [vmem:[%s300 + $0x20] sm:$0xf] %vm259, %v285
      %306 = vst.msk [vmem:[%s300 + $0x28] sm:$0xf] %vm259, %v287
      %307 = vst.msk [vmem:[%s300 + $0x30] sm:$0xf] %vm259, %v289
      %308 = vst.msk [vmem:[%s300 + $0x38] sm:$0xf] %vm259, %v291
      %p309 = scmp.lt.s32.totalorder %s14, 1
      %s310 = scalar_select %p309, %s14, 1
      %s311 = smul.addr %s310, 16
      %s312 = smul.addr %s311, 4
      %s313 = scalar_lea.vmem %s3, %s312
      // Predicated region
      $region33: #{up_forward.2} parent=31 // pred_check
        %p314 = pneg %p100
      $region34: #{up_forward.2} parent=31 // pred_check_branch
        %316 = sbr.rel (%p314) target = $region36
      $region35: #{up_forward.2} parent=31 // pred_region
        _
      $region36: #{up_forward.2} parent=31 // pred_fallthru
        _
    $region32: #{up_forward.2} parent=5 // pred_fallthru
      _
    %p317 = scmp.le.s32.totalorder 2, %s9
    // Predicated region
    $region37: #{up_forward.2} parent=5 // pred_check
      %p318 = pneg %p317
    $region38: #{up_forward.2} parent=5 // pred_check_branch
      %320 = sbr.rel (%p318) target = $region40
    $region39: #{up_forward.2} parent=5 // pred_region
      %s321 = ssub.s32 %s9, 2
      // Predicated region
      $region41: #{up_forward.2} parent=39 // pred_check
        %p322 = pneg %p106
      $region42: #{up_forward.2} parent=39 // pred_check_branch
        %324 = sbr.rel (%p322) target = $region44
      $region43: #{up_forward.2} parent=39 // pred_region
        %p325 = scmp.lt.s32.totalorder %s15, 1
        %s326 = scalar_select %p325, %s15, 1
        %s327 = smul.addr %s326, 16
        %s328 = smul.addr %s327, 4
        %s329 = scalar_lea.vmem %s3, %s328
      $region44: #{up_forward.2} parent=39 // pred_fallthru
        _
    $region40: #{up_forward.2} parent=5 // pred_fallthru
      _
  $region6: #{up_forward.2} parent=0 // loop_footer
    %s13 = sadd.s32 1, %s9
  $region7: #{up_forward.2} parent=0 // loop_footer_branch
    %8 = sbr.rel target = $region3
  $region8: #{up_forward.2} parent=0 // loop_exit
    _

// kernel: up_forward.3
$region0: #{up_forward.3}
  #allocation0 [shape = 'u32[]', space=smem, size = 0x4, offset = 0x4, fixed_abs, tag = 'smem constant byte address 0x4 - core index']
  #allocation1 [shape = 'u32[72,128]{1,0:T(1,128)}', space=vmem, size = 0x9000, scoped, tag = 'internal scratch']
  #allocation2 [shape = 'bf16[18,16,24]{2,1,0:T(8,128)(2,1)}', space=vmem, size = 0x12000, scoped, tag = 'scratch operand']
  #allocation3 [shape = 'bf16[18,16,12]{2,1,0:T(8,128)(2,1)}', space=vmem, size = 0x12000, scoped, tag = 'scratch operand']
  %s0 = inlined_call_operand.vmem [shape: bf16[2,16,16,4], index: 0, kind: input, shape index: {}]
  %s1 = inlined_call_operand.vmem [shape: bf16[2,16,16,4], index: 1, kind: input, shape index: {}]
  %s2 = inlined_call_operand.vmem [shape: bf16[3,24,4], index: 2, kind: input, shape index: {}]
  %s3 = inlined_call_operand.vmem [shape: f32[1,4], index: 3, kind: input, shape index: {}]
  %s4 = inlined_call_operand.vmem [shape: bf16[3,12,4], index: 4, kind: input, shape index: {}]
  %s5 = inlined_call_operand.vmem [shape: f32[1,4], index: 5, kind: input, shape index: {}]
  %s6 = inlined_call_operand.vmem [shape: bf16[2,256,4], index: 6, kind: output, shape index: {}]
  %s7 = sld [smem:[#allocation0]]
  $region57: #{up_forward.3} parent=0
    _
  %s9 = ssub.s32 1, %s7
  %s10 = scalar_select 0, %s9, %s7
  loop: start=0, step=1, limit=4
  $region2: #{up_forward.3} parent=0 // loop_pre_header
    _
  $region3: #{up_forward.3} parent=0 // loop_header
    %s12 = sphi 0, %s16
    %p13 = scmp.ge.s32.totalorder %s12, 4
    %s22 = sphi 0, %s24
    %s25 = sphi 0, %s22
    %s26 = sphi 0, %s25
    %s42 = sphi 0, %s26
    %s48 = sphi 0, %s50
    %s51 = sphi 0, %s48
    %s52 = sphi 0, %s51
    %s68 = sphi 0, %s52
    %s72 = sphi 0, %s72
    %s74 = sphi 0, %s72
    %s75 = sphi 0, %s74
    %s89 = sphi 0, %s75
    %s93 = sphi 0, %s93
    %s95 = sphi 0, %s93
    %s96 = sphi 0, %s95
    %s110 = sphi 0, %s96
    %s114 = sphi 0, %s114
    %s116 = sphi 0, %s114
    %s117 = sphi 0, %s116
    %s131 = sphi 0, %s117
    %s135 = sphi 0, %s135
    %s137 = sphi 0, %s135
    %s138 = sphi 0, %s137
    %s152 = sphi 0, %s138
    %s158 = sphi 0, %s160
    %s161 = sphi 0, %s158
    %s162 = sphi 0, %s161
    %s178 = sphi 0, %s162
  $region4: #{up_forward.3} parent=0 // loop_header_branch
    %15 = sbr.rel (%p13) target = $region8
  $region5: #{up_forward.3} parent=0 // loop_body
    %s17 = ssub.s32 %s12, 1
    %s18 = ssub.s32 %s12, 2
    %s19 = sadd.s32 %s12, 1
    %s20 = ssub.s32 %s12, %s19
    %p21 = scmp.eq.s32.totalorder %s20, 0
    %s23 = sadd.s32 %s22, 1
    %s24 = scalar_select %p21, %s22, %s23
    %p27 = pneg %p21
    %p28 = scmp.eq.s32.totalorder %s12, 1
    %p29 = por %p27, %p28
    %p30 = scmp.ne.s32.totalorder %s22, %s25
    %p31 = scmp.eq.s32.totalorder %s12, 0
    %p32 = por %p30, %p31
    %p33 = scmp.ne.s32.totalorder %s22, %s25
    %p34 = scmp.eq.s32.totalorder %s17, 1
    %p35 = por %p33, %p34
    %p36 = scmp.ne.s32.totalorder %s25, %s26
    %p37 = scmp.eq.s32.totalorder %s17, 0
    %p38 = por %p36, %p37
    %p39 = scmp.ne.s32.totalorder %s25, %s26
    %p40 = scmp.eq.s32.totalorder %s18, 1
    %p41 = por %p39, %p40
    %p43 = scmp.ne.s32.totalorder %s26, %s42
    %p44 = scmp.eq.s32.totalorder %s18, 0
    %p45 = por %p43, %p44
    %s46 = ssub.s32 %s12, %s19
    %p47 = scmp.eq.s32.totalorder %s46, 0
    %s49 = sadd.s32 %s48, 1
    %s50 = scalar_select %p47, %s48, %s49
    %p53 = pneg %p47
    %p54 = scmp.eq.s32.totalorder %s12, 1
    %p55 = por %p53, %p54
    %p56 = scmp.ne.s32.totalorder %s48, %s51
    %p57 = scmp.eq.s32.totalorder %s12, 0
    %p58 = por %p56, %p57
    %p59 = scmp.ne.s32.totalorder %s48, %s51
    %p60 = scmp.eq.s32.totalorder %s17, 1
    %p61 = por %p59, %p60
    %p62 = scmp.ne.s32.totalorder %s51, %s52
    %p63 = scmp.eq.s32.totalorder %s17, 0
    %p64 = por %p62, %p63
    %p65 = scmp.ne.s32.totalorder %s51, %s52
    %p66 = scmp.eq.s32.totalorder %s18, 1
    %p67 = por %p65, %p66
    %p69 = scmp.ne.s32.totalorder %s52, %s68
    %p70 = scmp.eq.s32.totalorder %s18, 0
    %p71 = por %p69, %p70
    %s73 = sadd.s32 %s72, 1
    %p76 = scmp.eq.s32.totalorder %s12, 1
    %p77 = scmp.ne.s32.totalorder %s72, %s74
    %p78 = scmp.eq.s32.totalorder %s12, 0
    %p79 = por %p77, %p78
    %p80 = scmp.ne.s32.totalorder %s72, %s74
    %p81 = scmp.eq.s32.totalorder %s17, 1
    %p82 = por %p80, %p81
    %p83 = scmp.ne.s32.totalorder %s74, %s75
    %p84 = scmp.eq.s32.totalorder %s17, 0
    %p85 = por %p83, %p84
    %p86 = scmp.ne.s32.totalorder %s74, %s75
    %p87 = scmp.eq.s32.totalorder %s18, 1
    %p88 = por %p86, %p87
    %p90 = scmp.ne.s32.totalorder %s75, %s89
    %p91 = scmp.eq.s32.totalorder %s18, 0
    %p92 = por %p90, %p91
    %s94 = sadd.s32 %s93, 1
    %p97 = scmp.eq.s32.totalorder %s12, 1
    %p98 = scmp.ne.s32.totalorder %s93, %s95
    %p99 = scmp.eq.s32.totalorder %s12, 0
    %p100 = por %p98, %p99
    %p101 = scmp.ne.s32.totalorder %s93, %s95
    %p102 = scmp.eq.s32.totalorder %s17, 1
    %p103 = por %p101, %p102
    %p104 = scmp.ne.s32.totalorder %s95, %s96
    %p105 = scmp.eq.s32.totalorder %s17, 0
    %p106 = por %p104, %p105
    %p107 = scmp.ne.s32.totalorder %s95, %s96
    %p108 = scmp.eq.s32.totalorder %s18, 1
    %p109 = por %p107, %p108
    %p111 = scmp.ne.s32.totalorder %s96, %s110
    %p112 = scmp.eq.s32.totalorder %s18, 0
    %p113 = por %p111, %p112
    %s115 = sadd.s32 %s114, 1
    %p118 = scmp.eq.s32.totalorder %s12, 1
    %p119 = scmp.ne.s32.totalorder %s114, %s116
    %p120 = scmp.eq.s32.totalorder %s12, 0
    %p121 = por %p119, %p120
    %p122 = scmp.ne.s32.totalorder %s114, %s116
    %p123 = scmp.eq.s32.totalorder %s17, 1
    %p124 = por %p122, %p123
    %p125 = scmp.ne.s32.totalorder %s116, %s117
    %p126 = scmp.eq.s32.totalorder %s17, 0
    %p127 = por %p125, %p126
    %p128 = scmp.ne.s32.totalorder %s116, %s117
    %p129 = scmp.eq.s32.totalorder %s18, 1
    %p130 = por %p128, %p129
    %p132 = scmp.ne.s32.totalorder %s117, %s131
    %p133 = scmp.eq.s32.totalorder %s18, 0
    %p134 = por %p132, %p133
    %s136 = sadd.s32 %s135, 1
    %p139 = scmp.eq.s32.totalorder %s12, 1
    %p140 = scmp.ne.s32.totalorder %s135, %s137
    %p141 = scmp.eq.s32.totalorder %s12, 0
    %p142 = por %p140, %p141
    %p143 = scmp.ne.s32.totalorder %s135, %s137
    %p144 = scmp.eq.s32.totalorder %s17, 1
    %p145 = por %p143, %p144
    %p146 = scmp.ne.s32.totalorder %s137, %s138
    %p147 = scmp.eq.s32.totalorder %s17, 0
    %p148 = por %p146, %p147
    %p149 = scmp.ne.s32.totalorder %s137, %s138
    %p150 = scmp.eq.s32.totalorder %s18, 1
    %p151 = por %p149, %p150
    %p153 = scmp.ne.s32.totalorder %s138, %s152
    %p154 = scmp.eq.s32.totalorder %s18, 0
    %p155 = por %p153, %p154
    %s156 = ssub.s32 %s12, %s19
    %p157 = scmp.eq.s32.totalorder %s156, 0
    %s159 = sadd.s32 %s158, 1
    %s160 = scalar_select %p157, %s158, %s159
    %p163 = pneg %p157
    %p164 = scmp.eq.s32.totalorder %s12, 1
    %p165 = por %p163, %p164
    %p166 = scmp.ne.s32.totalorder %s158, %s161
    %p167 = scmp.eq.s32.totalorder %s12, 0
    %p168 = por %p166, %p167
    %p169 = scmp.ne.s32.totalorder %s158, %s161
    %p170 = scmp.eq.s32.totalorder %s17, 1
    %p171 = por %p169, %p170
    %p172 = scmp.ne.s32.totalorder %s161, %s162
    %p173 = scmp.eq.s32.totalorder %s17, 0
    %p174 = por %p172, %p173
    %p175 = scmp.ne.s32.totalorder %s161, %s162
    %p176 = scmp.eq.s32.totalorder %s18, 1
    %p177 = por %p175, %p176
    %p179 = scmp.ne.s32.totalorder %s162, %s178
    %p180 = scmp.eq.s32.totalorder %s18, 0
    %p181 = por %p179, %p180
    %p182 = scmp.le.s32.totalorder 1, %s12
    %p183 = scmp.lt.s32.totalorder %s12, 3
    %p184 = pnand %p182, %p183
    %p185 = pneg %p184
    // Predicated region
    $region9: #{up_forward.3} parent=5 // pred_check
      _
    $region10: #{up_forward.3} parent=5 // pred_check_branch
      %187 = sbr.rel (%p184) target = $region12
    $region11: #{up_forward.3} parent=5 // pred_region
      %s188 = ssub.s32 %s12, 1
      // Predicated region
      $region13: #{up_forward.3} parent=11 // pred_check
        %p189 = pneg %p85
      $region14: #{up_forward.3} parent=11 // pred_check_branch
        %191 = sbr.rel (%p189) target = $region16
      $region15: #{up_forward.3} parent=11 // pred_region
        _
      $region16: #{up_forward.3} parent=11 // pred_fallthru
        _
      // Predicated region
      $region17: #{up_forward.3} parent=11 // pred_check
        %p192 = pneg %p106
      $region18: #{up_forward.3} parent=11 // pred_check_branch
        %194 = sbr.rel (%p192) target = $region20
      $region19: #{up_forward.3} parent=11 // pred_region
        _
      $region20: #{up_forward.3} parent=11 // pred_fallthru
        _
      // Predicated region
      $region21: #{up_forward.3} parent=11 // pred_check
        %p195 = pneg %p127
      $region22: #{up_forward.3} parent=11 // pred_check_branch
        %197 = sbr.rel (%p195) target = $region24
      $region23: #{up_forward.3} parent=11 // pred_region
        _
      $region24: #{up_forward.3} parent=11 // pred_fallthru
        _
      // Predicated region
      $region25: #{up_forward.3} parent=11 // pred_check
        %p198 = pneg %p148
      $region26: #{up_forward.3} parent=11 // pred_check_branch
        %200 = sbr.rel (%p198) target = $region28
      $region27: #{up_forward.3} parent=11 // pred_region
        _
      $region28: #{up_forward.3} parent=11 // pred_fallthru
        _
    $region12: #{up_forward.3} parent=5 // pred_fallthru
      _
    %p201 = scmp.lt.s32.totalorder %s12, 2
    // Predicated region
    $region29: #{up_forward.3} parent=5 // pred_check
      %p202 = pneg %p201
    $region30: #{up_forward.3} parent=5 // pred_check_branch
      %204 = sbr.rel (%p202) target = $region32
    $region31: #{up_forward.3} parent=5 // pred_region
      // Predicated region
      $region33: #{up_forward.3} parent=31 // pred_check
        %p205 = pneg %p32
      $region34: #{up_forward.3} parent=31 // pred_check_branch
        %207 = sbr.rel (%p205) target = $region36
      $region35: #{up_forward.3} parent=31 // pred_region
        %p208 = scmp.lt.s32.totalorder %s12, 1
        %s209 = scalar_select %p208, %s12, 1
        %s210 = smul.addr %s209, 32
        %s211 = smul.addr %s210, 4
        %s212 = scalar_lea.vmem %s0, %s211
      $region36: #{up_forward.3} parent=31 // pred_fallthru
        _
      // Predicated region
      $region37: #{up_forward.3} parent=31 // pred_check
        %p213 = pneg %p58
      $region38: #{up_forward.3} parent=31 // pred_check_branch
        %215 = sbr.rel (%p213) target = $region40
      $region39: #{up_forward.3} parent=31 // pred_region
        %p216 = scmp.lt.s32.totalorder %s12, 1
        %s217 = scalar_select %p216, %s12, 1
        %s218 = smul.addr %s217, 32
        %s219 = smul.addr %s218, 4
        %s220 = scalar_lea.vmem %s1, %s219
      $region40: #{up_forward.3} parent=31 // pred_fallthru
        _
    $region32: #{up_forward.3} parent=5 // pred_fallthru
      _
    %p221 = scmp.le.s32.totalorder 1, %s12
    %p222 = scmp.lt.s32.totalorder %s12, 3
    %p223 = pnand %p221, %p222
    %p224 = pneg %p223
    // Predicated region
    $region41: #{up_forward.3} parent=5 // pred_check
      _
    $region42: #{up_forward.3} parent=5 // pred_check_branch
      %226 = sbr.rel (%p223) target = $region44
    $region43: #{up_forward.3} parent=5 // pred_region
      %s227 = ssub.s32 %s12, 1
      %p228 = scmp.lt.s32.totalorder %s17, 1
      %s229 = scalar_select %p228, %s17, 1
      %s230 = smul.addr %s229, 32
      %s231 = smul.addr %s230, 4
      %s232 = scalar_lea.vmem %s0, %s231
      %p233 = pneg %p38
      %p234 = pneg %p35
      %p235 = scmp.lt.s32.totalorder %s17, 1
      %s236 = scalar_select %p235, %s17, 1
      %s237 = smul.addr %s236, 32
      %s238 = smul.addr %s237, 4
      %s239 = scalar_lea.vmem %s1, %s238
      %p240 = pneg %p64
      %p241 = pneg %p61
      %p242 = pneg %p85
      %p243 = pneg %p82
      %p244 = pneg %p106
      %p245 = pneg %p103
      %p246 = pneg %p127
      %p247 = pneg %p124
      %p248 = pneg %p148
      %p249 = pneg %p145
      %p250 = pneg %p174
      %p251 = pneg %p171
      %p252 = scmp.lt.s32.totalorder %s17, 1
      %s253 = scalar_select %p252, %s17, 1
      %s254 = smul.addr %s253, 32
      %s255 = smul.addr %s254, 4
      %s256 = scalar_lea.vmem %s6, %s255
      %p257 = scmp.lt.s32.totalorder %s17, 1
      %s258 = scalar_select %p257, %s17, 1
      %s259 = smul.addr %s258, 32
      %s260 = smul.addr %s259, 4
      %s261 = scalar_lea.vmem %s0, %s260
      %p262 = scmp.lt.s32.totalorder %s17, 1
      %s263 = scalar_select %p262, %s17, 1
      %s264 = smul.addr %s263, 32
      %s265 = smul.addr %s264, 4
      %s266 = scalar_lea.vmem %s1, %s265
      %p267 = scmp.lt.s32.totalorder %s17, 1
      %s268 = scalar_select %p267, %s17, 1
      %s269 = smul.addr %s268, 32
      %s270 = smul.addr %s269, 4
      %s271 = scalar_lea.vmem %s6, %s270
      %vm273 = vcmask 191488
      %274 = vst.msk [vmem:[#allocation2] sm:$0xf] %vm273, 0
      %275 = vst.msk [vmem:[#allocation2 + $0x4] sm:$0xf] %vm273, 0
      %s276 = scalar_lea.vmem [#allocation2], 136
      %277 = vst.msk [vmem:[%s276] sm:$0xf] %vm273, 0
      %278 = vst.msk [vmem:[%s276 + $0x4] sm:$0xf] %vm273, 0
      %s279 = scalar_lea.vmem [#allocation2], 8
      %vm280 = vcmask 57344
      %vm281 = vsmask.f32 256
      %vm282 = vmand %vm280, %vm281
      %v283 = vld [vmem:[%s279] sm:$0x1]
      %v284 = vsel %vm282, 0, %v283
      %285 = vst [vmem:[%s279] sm:$0x1] %v284
      %v286 = vld [vmem:[%s279 + $0x8] sm:$0x1]
      %v287 = vsel %vm282, 0, %v286
      %288 = vst [vmem:[%s279 + $0x8] sm:$0x1] %v287
      %v289 = vld [vmem:[%s279 + $0x10] sm:$0x1]
      %v290 = vsel %vm282, 0, %v289
      %291 = vst [vmem:[%s279 + $0x10] sm:$0x1] %v290
      %v292 = vld [vmem:[%s279 + $0x18] sm:$0x1]
      %v293 = vsel %vm282, 0, %v292
      %294 = vst [vmem:[%s279 + $0x18] sm:$0x1] %v293
      %v295 = vld [vmem:[%s279 + $0x20] sm:$0x1]
      %v296 = vsel %vm282, 0, %v295
      %297 = vst [vmem:[%s279 + $0x20] sm:$0x1] %v296
      %v298 = vld [vmem:[%s279 + $0x28] sm:$0x1]
      %v299 = vsel %vm282, 0, %v298
      %300 = vst [vmem:[%s279 + $0x28] sm:$0x1] %v299
      %v301 = vld [vmem:[%s279 + $0x30] sm:$0x1]
      %v302 = vsel %vm282, 0, %v301
      %303 = vst [vmem:[%s279 + $0x30] sm:$0x1] %v302
      %v304 = vld [vmem:[%s279 + $0x38] sm:$0x1]
      %v305 = vsel %vm282, 0, %v304
      %306 = vst [vmem:[%s279 + $0x38] sm:$0x1] %v305
      %v307 = vld [vmem:[%s279 + $0x40] sm:$0x1]
      %v308 = vsel %vm282, 0, %v307
      %309 = vst [vmem:[%s279 + $0x40] sm:$0x1] %v308
      %v310 = vld [vmem:[%s279 + $0x48] sm:$0x1]
      %v311 = vsel %vm282, 0, %v310
      %312 = vst [vmem:[%s279 + $0x48] sm:$0x1] %v311
      %v313 = vld [vmem:[%s279 + $0x50] sm:$0x1]
      %v314 = vsel %vm282, 0, %v313
      %315 = vst [vmem:[%s279 + $0x50] sm:$0x1] %v314
      %v316 = vld [vmem:[%s279 + $0x58] sm:$0x1]
      %v317 = vsel %vm282, 0, %v316
      %318 = vst [vmem:[%s279 + $0x58] sm:$0x1] %v317
      %v319 = vld [vmem:[%s279 + $0x60] sm:$0x1]
      %v320 = vsel %vm282, 0, %v319
      %321 = vst [vmem:[%s279 + $0x60] sm:$0x1] %v320
      %v322 = vld [vmem:[%s279 + $0x68] sm:$0x1]
      %v323 = vsel %vm282, 0, %v322
      %324 = vst [vmem:[%s279 + $0x68] sm:$0x1] %v323
      %v325 = vld [vmem:[%s279 + $0x70] sm:$0x1]
      %v326 = vsel %vm282, 0, %v325
      %327 = vst [vmem:[%s279 + $0x70] sm:$0x1] %v326
      %v328 = vld [vmem:[%s279 + $0x78] sm:$0x1]
      %v329 = vsel %vm282, 0, %v328
      %330 = vst [vmem:[%s279 + $0x78] sm:$0x1] %v329
      %vm331 = vcmask 191619
      %vm332 = vsmask.f32 7950
      %vm333 = vmand %vm331, %vm332
      %v334 = vld [vmem:[%s279 + $0x4] sm:$0x8]
      %v335 = vsel %vm333, 0, %v334
      %336 = vst [vmem:[%s279 + $0x4] sm:$0x8] %v335
      %v337 = vld [vmem:[%s279 + $0xc] sm:$0x8]
      %v338 = vsel %vm333, 0, %v337
      %339 = vst [vmem:[%s279 + $0xc] sm:$0x8] %v338
      %v340 = vld [vmem:[%s279 + $0x14] sm:$0x8]
      %v341 = vsel %vm333, 0, %v340
      %342 = vst [vmem:[%s279 + $0x14] sm:$0x8] %v341
      %v343 = vld [vmem:[%s279 + $0x1c] sm:$0x8]
      %v344 = vsel %vm333, 0, %v343
      %345 = vst [vmem:[%s279 + $0x1c] sm:$0x8] %v344
      %v346 = vld [vmem:[%s279 + $0x24] sm:$0x8]
      %v347 = vsel %vm333, 0, %v346
      %348 = vst [vmem:[%s279 + $0x24] sm:$0x8] %v347
      %v349 = vld [vmem:[%s279 + $0x2c] sm:$0x8]
      %v350 = vsel %vm333, 0, %v349
      %351 = vst [vmem:[%s279 + $0x2c] sm:$0x8] %v350
      %v352 = vld [vmem:[%s279 + $0x34] sm:$0x8]
      %v353 = vsel %vm333, 0, %v352
      %354 = vst [vmem:[%s279 + $0x34] sm:$0x8] %v353
      %v355 = vld [vmem:[%s279 + $0x3c] sm:$0x8]
      %v356 = vsel %vm333, 0, %v355
      %357 = vst [vmem:[%s279 + $0x3c] sm:$0x8] %v356
      %v358 = vld [vmem:[%s279 + $0x44] sm:$0x8]
      %v359 = vsel %vm333, 0, %v358
      %360 = vst [vmem:[%s279 + $0x44] sm:$0x8] %v359
      %v361 = vld [vmem:[%s279 + $0x4c] sm:$0x8]
      %v362 = vsel %vm333, 0, %v361
      %363 = vst [vmem:[%s279 + $0x4c] sm:$0x8] %v362
      %v364 = vld [vmem:[%s279 + $0x54] sm:$0x8]
      %v365 = vsel %vm333, 0, %v364
      %366 = vst [vmem:[%s279 + $0x54] sm:$0x8] %v365
      %v367 = vld [vmem:[%s279 + $0x5c] sm:$0x8]
      %v368 = vsel %vm333, 0, %v367
      %369 = vst [vmem:[%s279 + $0x5c] sm:$0x8] %v368
      %v370 = vld [vmem:[%s279 + $0x64] sm:$0x8]
      %v371 = vsel %vm333, 0, %v370
      %372 = vst [vmem:[%s279 + $0x64] sm:$0x8] %v371
      %v373 = vld [vmem:[%s279 + $0x6c] sm:$0x8]
      %v374 = vsel %vm333, 0, %v373
      %375 = vst [vmem:[%s279 + $0x6c] sm:$0x8] %v374
      %v376 = vld [vmem:[%s279 + $0x74] sm:$0x8]
      %v377 = vsel %vm333, 0, %v376
      %378 = vst [vmem:[%s279 + $0x74] sm:$0x8] %v377
      %v379 = vld [vmem:[%s279 + $0x7c] sm:$0x8]
      %v380 = vsel %vm333, 0, %v379
      %381 = vst [vmem:[%s279 + $0x7c] sm:$0x8] %v380
      %vm382 = vcmask 93184
      %383 = vst.msk [vmem:[#allocation3] sm:$0xf] %vm382, 0
      %384 = vst.msk [vmem:[#allocation3 + $0x4] sm:$0xf] %vm382, 0
      %s385 = scalar_lea.vmem [#allocation3], 136
      %386 = vst.msk [vmem:[%s385] sm:$0xf] %vm382, 0
      %387 = vst.msk [vmem:[%s385 + $0x4] sm:$0xf] %vm382, 0
      %s388 = scalar_lea.vmem [#allocation3], 8
      %vm389 = vcmask 24576
      %vm390 = vmand %vm389, %vm281
      %v391 = vld [vmem:[%s388] sm:$0x1]
      %v392 = vsel %vm390, 0, %v391
      %393 = vst [vmem:[%s388] sm:$0x1] %v392
      %v394 = vld [vmem:[%s388 + $0x8] sm:$0x1]
      %v395 = vsel %vm390, 0, %v394
      %396 = vst [vmem:[%s388 + $0x8] sm:$0x1] %v395
      %v397 = vld [vmem:[%s388 + $0x10] sm:$0x1]
      %v398 = vsel %vm390, 0, %v397
      %399 = vst [vmem:[%s388 + $0x10] sm:$0x1] %v398
      %v400 = vld [vmem:[%s388 + $0x18] sm:$0x1]
      %v401 = vsel %vm390, 0, %v400
      %402 = vst [vmem:[%s388 + $0x18] sm:$0x1] %v401
      %v403 = vld [vmem:[%s388 + $0x20] sm:$0x1]
      %v404 = vsel %vm390, 0, %v403
      %405 = vst [vmem:[%s388 + $0x20] sm:$0x1] %v404
      %v406 = vld [vmem:[%s388 + $0x28] sm:$0x1]
      %v407 = vsel %vm390, 0, %v406
      %408 = vst [vmem:[%s388 + $0x28] sm:$0x1] %v407
      %v409 = vld [vmem:[%s388 + $0x30] sm:$0x1]
      %v410 = vsel %vm390, 0, %v409
      %411 = vst [vmem:[%s388 + $0x30] sm:$0x1] %v410
      %v412 = vld [vmem:[%s388 + $0x38] sm:$0x1]
      %v413 = vsel %vm390, 0, %v412
      %414 = vst [vmem:[%s388 + $0x38] sm:$0x1] %v413
      %v415 = vld [vmem:[%s388 + $0x40] sm:$0x1]
      %v416 = vsel %vm390, 0, %v415
      %417 = vst [vmem:[%s388 + $0x40] sm:$0x1] %v416
      %v418 = vld [vmem:[%s388 + $0x48] sm:$0x1]
      %v419 = vsel %vm390, 0, %v418
      %420 = vst [vmem:[%s388 + $0x48] sm:$0x1] %v419
      %v421 = vld [vmem:[%s388 + $0x50] sm:$0x1]
      %v422 = vsel %vm390, 0, %v421
      %423 = vst [vmem:[%s388 + $0x50] sm:$0x1] %v422
      %v424 = vld [vmem:[%s388 + $0x58] sm:$0x1]
      %v425 = vsel %vm390, 0, %v424
      %426 = vst [vmem:[%s388 + $0x58] sm:$0x1] %v425
      %v427 = vld [vmem:[%s388 + $0x60] sm:$0x1]
      %v428 = vsel %vm390, 0, %v427
      %429 = vst [vmem:[%s388 + $0x60] sm:$0x1] %v428
      %v430 = vld [vmem:[%s388 + $0x68] sm:$0x1]
      %v431 = vsel %vm390, 0, %v430
      %432 = vst [vmem:[%s388 + $0x68] sm:$0x1] %v431
      %v433 = vld [vmem:[%s388 + $0x70] sm:$0x1]
      %v434 = vsel %vm390, 0, %v433
      %435 = vst [vmem:[%s388 + $0x70] sm:$0x1] %v434
      %v436 = vld [vmem:[%s388 + $0x78] sm:$0x1]
      %v437 = vsel %vm390, 0, %v436
      %438 = vst [vmem:[%s388 + $0x78] sm:$0x1] %v437
      %vm439 = vcmask 93251
      %vm440 = vmand %vm439, %vm332
      %v441 = vld [vmem:[%s388 + $0x4] sm:$0x8]
      %v442 = vsel %vm440, 0, %v441
      %443 = vst [vmem:[%s388 + $0x4] sm:$0x8] %v442
      %v444 = vld [vmem:[%s388 + $0xc] sm:$0x8]
      %v445 = vsel %vm440, 0, %v444
      %446 = vst [vmem:[%s388 + $0xc] sm:$0x8] %v445
      %v447 = vld [vmem:[%s388 + $0x14] sm:$0x8]
      %v448 = vsel %vm440, 0, %v447
      %449 = vst [vmem:[%s388 + $0x14] sm:$0x8] %v448
      %v450 = vld [vmem:[%s388 + $0x1c] sm:$0x8]
      %v451 = vsel %vm440, 0, %v450
      %452 = vst [vmem:[%s388 + $0x1c] sm:$0x8] %v451
      %v453 = vld [vmem:[%s388 + $0x24] sm:$0x8]
      %v454 = vsel %vm440, 0, %v453
      %455 = vst [vmem:[%s388 + $0x24] sm:$0x8] %v454
      %v456 = vld [vmem:[%s388 + $0x2c] sm:$0x8]
      %v457 = vsel %vm440, 0, %v456
      %458 = vst [vmem:[%s388 + $0x2c] sm:$0x8] %v457
      %v459 = vld [vmem:[%s388 + $0x34] sm:$0x8]
      %v460 = vsel %vm440, 0, %v459
      %461 = vst [vmem:[%s388 + $0x34] sm:$0x8] %v460
      %v462 = vld [vmem:[%s388 + $0x3c] sm:$0x8]
      %v463 = vsel %vm440, 0, %v462
      %464 = vst [vmem:[%s388 + $0x3c] sm:$0x8] %v463
      %v465 = vld [vmem:[%s388 + $0x44] sm:$0x8]
      %v466 = vsel %vm440, 0, %v465
      %467 = vst [vmem:[%s388 + $0x44] sm:$0x8] %v466
      %v468 = vld [vmem:[%s388 + $0x4c] sm:$0x8]
      %v469 = vsel %vm440, 0, %v468
      %470 = vst [vmem:[%s388 + $0x4c] sm:$0x8] %v469
      %v471 = vld [vmem:[%s388 + $0x54] sm:$0x8]
      %v472 = vsel %vm440, 0, %v471
      %473 = vst [vmem:[%s388 + $0x54] sm:$0x8] %v472
      %v474 = vld [vmem:[%s388 + $0x5c] sm:$0x8]
      %v475 = vsel %vm440, 0, %v474
      %476 = vst [vmem:[%s388 + $0x5c] sm:$0x8] %v475
      %v477 = vld [vmem:[%s388 + $0x64] sm:$0x8]
      %v478 = vsel %vm440, 0, %v477
      %479 = vst [vmem:[%s388 + $0x64] sm:$0x8] %v478
      %v480 = vld [vmem:[%s388 + $0x6c] sm:$0x8]
      %v481 = vsel %vm440, 0, %v480
      %482 = vst [vmem:[%s388 + $0x6c] sm:$0x8] %v481
      %v483 = vld [vmem:[%s388 + $0x74] sm:$0x8]
      %v484 = vsel %vm440, 0, %v483
      %485 = vst [vmem:[%s388 + $0x74] sm:$0x8] %v484
      %v486 = vld [vmem:[%s388 + $0x7c] sm:$0x8]
      %v487 = vsel %vm440, 0, %v486
      %488 = vst [vmem:[%s388 + $0x7c] sm:$0x8] %v487
      %v489 = vld [vmem:[%s261] sm:$0xf]
      %v490 = vld [vmem:[%s261 + $0x4] sm:$0xf]
      %v491 = vld [vmem:[%s261 + $0x8] sm:$0xf]
      %v492 = vld [vmem:[%s261 + $0xc] sm:$0xf]
      %v493 = vld [vmem:[%s261 + $0x10] sm:$0xf]
      %v494 = vld [vmem:[%s261 + $0x14] sm:$0xf]
      %v495 = vld [vmem:[%s261 + $0x18] sm:$0xf]
      %v496 = vld [vmem:[%s261 + $0x1c] sm:$0xf]
      %v497 = vld [vmem:[%s261 + $0x20] sm:$0xf]
      %v498 = vld [vmem:[%s261 + $0x24] sm:$0xf]
      %v499 = vld [vmem:[%s261 + $0x28] sm:$0xf]
      %v500 = vld [vmem:[%s261 + $0x2c] sm:$0xf]
      %v501 = vld [vmem:[%s261 + $0x30] sm:$0xf]
      %v502 = vld [vmem:[%s261 + $0x34] sm:$0xf]
      %v503 = vld [vmem:[%s261 + $0x38] sm:$0xf]
      %v504 = vld [vmem:[%s261 + $0x3c] sm:$0xf]
      %v505 = vld [vmem:[%s261 + $0x40] sm:$0xf]
      %v506 = vld [vmem:[%s261 + $0x44] sm:$0xf]
      %v507 = vld [vmem:[%s261 + $0x48] sm:$0xf]
      %v508 = vld [vmem:[%s261 + $0x4c] sm:$0xf]
      %v509 = vld [vmem:[%s261 + $0x50] sm:$0xf]
      %v510 = vld [vmem:[%s261 + $0x54] sm:$0xf]
      %v511 = vld [vmem:[%s261 + $0x58] sm:$0xf]
      %v512 = vld [vmem:[%s261 + $0x5c] sm:$0xf]
      %v513 = vld [vmem:[%s261 + $0x60] sm:$0xf]
      %v514 = vld [vmem:[%s261 + $0x64] sm:$0xf]
      %v515 = vld [vmem:[%s261 + $0x68] sm:$0xf]
      %v516 = vld [vmem:[%s261 + $0x6c] sm:$0xf]
      %v517 = vld [vmem:[%s261 + $0x70] sm:$0xf]
      %v518 = vld [vmem:[%s261 + $0x74] sm:$0xf]
      %v519 = vld [vmem:[%s261 + $0x78] sm:$0xf]
      %v520 = vld [vmem:[%s261 + $0x7c] sm:$0xf]
      %vm521 = vsmask.f32 4368
      %vm522 = vmor %vm281, %vm521
      %v524 = vshrl.u32 %v489, 16
      %v526 = vrot.slane %v524, 7
      %v527 = vshll.u32 %v489, 16
      %v529 = vor.u32 %v526, %v527
      %v530 = vrot.slane %v526, 4
      %v532 = vshrl.u32 %v490, 16
      %v534 = vrot.slane %v532, 7
      %v535 = vshll.u32 %v490, 16
      %v537 = vor.u32 %v534, %v535
      %v538 = vsel %vm522, %v530, %v537
      %v540 = vshrl.u32 %v491, 16
      %v542 = vrot.slane %v540, 7
      %v543 = vshll.u32 %v491, 16
      %v545 = vor.u32 %v542, %v543
      %v546 = vrot.slane %v542, 4
      %v548 = vshrl.u32 %v492, 16
      %v550 = vrot.slane %v548, 7
      %v551 = vshll.u32 %v492, 16
      %v553 = vor.u32 %v550, %v551
      %v554 = vsel %vm522, %v546, %v553
      %v556 = vshrl.u32 %v493, 16
      %v558 = vrot.slane %v556, 7
      %v559 = vshll.u32 %v493, 16
      %v561 = vor.u32 %v558, %v559
      %v562 = vrot.slane %v558, 4
      %v564 = vshrl.u32 %v494, 16
      %v566 = vrot.slane %v564, 7
      %v567 = vshll.u32 %v494, 16
      %v569 = vor.u32 %v566, %v567
      %v570 = vsel %vm522, %v562, %v569
      %v572 = vshrl.u32 %v495, 16
      %v574 = vrot.slane %v572, 7
      %v575 = vshll.u32 %v495, 16
      %v577 = vor.u32 %v574, %v575
      %v578 = vrot.slane %v574, 4
      %v580 = vshrl.u32 %v496, 16
      %v582 = vrot.slane %v580, 7
      %v583 = vshll.u32 %v496, 16
      %v585 = vor.u32 %v582, %v583
      %v586 = vsel %vm522, %v578, %v585
      %v588 = vshrl.u32 %v497, 16
      %v590 = vrot.slane %v588, 7
      %v591 = vshll.u32 %v497, 16
      %v593 = vor.u32 %v590, %v591
      %v594 = vrot.slane %v590, 4
      %v596 = vshrl.u32 %v498, 16
      %v598 = vrot.slane %v596, 7
      %v599 = vshll.u32 %v498, 16
      %v601 = vor.u32 %v598, %v599
      %v602 = vsel %vm522, %v594, %v601
      %v604 = vshrl.u32 %v499, 16
      %v606 = vrot.slane %v604, 7
      %v607 = vshll.u32 %v499, 16
      %v609 = vor.u32 %v606, %v607
      %v610 = vrot.slane %v606, 4
      %v612 = vshrl.u32 %v500, 16
      %v614 = vrot.slane %v612, 7
      %v615 = vshll.u32 %v500, 16
      %v617 = vor.u32 %v614, %v615
      %v618 = vsel %vm522, %v610, %v617
      %v620 = vshrl.u32 %v501, 16
      %v622 = vrot.slane %v620, 7
      %v623 = vshll.u32 %v501, 16
      %v625 = vor.u32 %v622, %v623
      %v626 = vrot.slane %v622, 4
      %v628 = vshrl.u32 %v502, 16
      %v630 = vrot.slane %v628, 7
      %v631 = vshll.u32 %v502, 16
      %v633 = vor.u32 %v630, %v631
      %v634 = vsel %vm522, %v626, %v633
      %v636 = vshrl.u32 %v503, 16
      %v638 = vrot.slane %v636, 7
      %v639 = vshll.u32 %v503, 16
      %v641 = vor.u32 %v638, %v639
      %v642 = vrot.slane %v638, 4
      %v644 = vshrl.u32 %v504, 16
      %v646 = vrot.slane %v644, 7
      %v647 = vshll.u32 %v504, 16
      %v649 = vor.u32 %v646, %v647
      %v650 = vsel %vm522, %v642, %v649
      %v652 = vshrl.u32 %v505, 16
      %v654 = vrot.slane %v652, 7
      %v655 = vshll.u32 %v505, 16
      %v657 = vor.u32 %v654, %v655
      %v658 = vrot.slane %v654, 4
      %v660 = vshrl.u32 %v506, 16
      %v662 = vrot.slane %v660, 7
      %v663 = vshll.u32 %v506, 16
      %v665 = vor.u32 %v662, %v663
      %v666 = vsel %vm522, %v658, %v665
      %v668 = vshrl.u32 %v507, 16
      %v670 = vrot.slane %v668, 7
      %v671 = vshll.u32 %v507, 16
      %v673 = vor.u32 %v670, %v671
      %v674 = vrot.slane %v670, 4
      %v676 = vshrl.u32 %v508, 16
      %v678 = vrot.slane %v676, 7
      %v679 = vshll.u32 %v508, 16
      %v681 = vor.u32 %v678, %v679
      %v682 = vsel %vm522, %v674, %v681
      %v684 = vshrl.u32 %v509, 16
      %v686 = vrot.slane %v684, 7
      %v687 = vshll.u32 %v509, 16
      %v689 = vor.u32 %v686, %v687
      %v690 = vrot.slane %v686, 4
      %v692 = vshrl.u32 %v510, 16
      %v694 = vrot.slane %v692, 7
      %v695 = vshll.u32 %v510, 16
      %v697 = vor.u32 %v694, %v695
      %v698 = vsel %vm522, %v690, %v697
      %v700 = vshrl.u32 %v511, 16
      %v702 = vrot.slane %v700, 7
      %v703 = vshll.u32 %v511, 16
      %v705 = vor.u32 %v702, %v703
      %v706 = vrot.slane %v702, 4
      %v708 = vshrl.u32 %v512, 16
      %v710 = vrot.slane %v708, 7
      %v711 = vshll.u32 %v512, 16
      %v713 = vor.u32 %v710, %v711
      %v714 = vsel %vm522, %v706, %v713
      %v716 = vshrl.u32 %v513, 16
      %v718 = vrot.slane %v716, 7
      %v719 = vshll.u32 %v513, 16
      %v721 = vor.u32 %v718, %v719
      %v722 = vrot.slane %v718, 4
      %v724 = vshrl.u32 %v514, 16
      %v726 = vrot.slane %v724, 7
      %v727 = vshll.u32 %v514, 16
      %v729 = vor.u32 %v726, %v727
      %v730 = vsel %vm522, %v722, %v729
      %v732 = vshrl.u32 %v515, 16
      %v734 = vrot.slane %v732, 7
      %v735 = vshll.u32 %v515, 16
      %v737 = vor.u32 %v734, %v735
      %v738 = vrot.slane %v734, 4
      %v740 = vshrl.u32 %v516, 16
      %v742 = vrot.slane %v740, 7
      %v743 = vshll.u32 %v516, 16
      %v745 = vor.u32 %v742, %v743
      %v746 = vsel %vm522, %v738, %v745
      %v748 = vshrl.u32 %v517, 16
      %v750 = vrot.slane %v748, 7
      %v751 = vshll.u32 %v517, 16
      %v753 = vor.u32 %v750, %v751
      %v754 = vrot.slane %v750, 4
      %v756 = vshrl.u32 %v518, 16
      %v758 = vrot.slane %v756, 7
      %v759 = vshll.u32 %v518, 16
      %v761 = vor.u32 %v758, %v759
      %v762 = vsel %vm522, %v754, %v761
      %v764 = vshrl.u32 %v519, 16
      %v766 = vrot.slane %v764, 7
      %v767 = vshll.u32 %v519, 16
      %v769 = vor.u32 %v766, %v767
      %v770 = vrot.slane %v766, 4
      %v772 = vshrl.u32 %v520, 16
      %v774 = vrot.slane %v772, 7
      %v775 = vshll.u32 %v520, 16
      %v777 = vor.u32 %v774, %v775
      %v778 = vsel %vm522, %v770, %v777
      %vm811 = vcmask 27648
      %vm812 = vsmask.f32 7938
      %vm813 = vmand %vm811, %vm812
      %v814 = vld [vmem:[%s279] sm:$0xf]
      %v815 = vsel %vm813, %v529, %v814
      %816 = vst [vmem:[%s279] sm:$0xf] %v815
      %vm817 = vcmask 27648
      %818 = vst.msk [vmem:[%s279 + $0x4] sm:$0xf] %vm817, %v538
      %v819 = vld [vmem:[%s279 + $0x8] sm:$0xf]
      %v820 = vsel %vm813, %v545, %v819
      %821 = vst [vmem:[%s279 + $0x8] sm:$0xf] %v820
      %822 = vst.msk [vmem:[%s279 + $0xc] sm:$0xf] %vm817, %v554
      %v823 = vld [vmem:[%s279 + $0x10] sm:$0xf]
      %v824 = vsel %vm813, %v561, %v823
      %825 = vst [vmem:[%s279 + $0x10] sm:$0xf] %v824
      %826 = vst.msk [vmem:[%s279 + $0x14] sm:$0xf] %vm817, %v570
      %v827 = vld [vmem:[%s279 + $0x18] sm:$0xf]
      %v828 = vsel %vm813, %v577, %v827
      %829 = vst [vmem:[%s279 + $0x18] sm:$0xf] %v828
      %830 = vst.msk [vmem:[%s279 + $0x1c] sm:$0xf] %vm817, %v586
      %v831 = vld [vmem:[%s279 + $0x20] sm:$0xf]
      %v832 = vsel %vm813, %v593, %v831
      %833 = vst [vmem:[%s279 + $0x20] sm:$0xf] %v832
      %834 = vst.msk [vmem:[%s279 + $0x24] sm:$0xf] %vm817, %v602
      %v835 = vld [vmem:[%s279 + $0x28] sm:$0xf]
      %v836 = vsel %vm813, %v609, %v835
      %837 = vst [vmem:[%s279 + $0x28] sm:$0xf] %v836
      %838 = vst.msk [vmem:[%s279 + $0x2c] sm:$0xf] %vm817, %v618
      %v839 = vld [vmem:[%s279 + $0x30] sm:$0xf]
      %v840 = vsel %vm813, %v625, %v839
      %841 = vst [vmem:[%s279 + $0x30] sm:$0xf] %v840
      %842 = vst.msk [vmem:[%s279 + $0x34] sm:$0xf] %vm817, %v634
      %v843 = vld [vmem:[%s279 + $0x38] sm:$0xf]
      %v844 = vsel %vm813, %v641, %v843
      %845 = vst [vmem:[%s279 + $0x38] sm:$0xf] %v844
      %846 = vst.msk [vmem:[%s279 + $0x3c] sm:$0xf] %vm817, %v650
      %v847 = vld [vmem:[%s279 + $0x40] sm:$0xf]
      %v848 = vsel %vm813, %v657, %v847
      %849 = vst [vmem:[%s279 + $0x40] sm:$0xf] %v848
      %850 = vst.msk [vmem:[%s279 + $0x44] sm:$0xf] %vm817, %v666
      %v851 = vld [vmem:[%s279 + $0x48] sm:$0xf]
      %v852 = vsel %vm813, %v673, %v851
      %853 = vst [vmem:[%s279 + $0x48] sm:$0xf] %v852
      %854 = vst.msk [vmem:[%s279 + $0x4c] sm:$0xf] %vm817, %v682
      %v855 = vld [vmem:[%s279 + $0x50] sm:$0xf]
      %v856 = vsel %vm813, %v689, %v855
      %857 = vst [vmem:[%s279 + $0x50] sm:$0xf] %v856
      %858 = vst.msk [vmem:[%s279 + $0x54] sm:$0xf] %vm817, %v698
      %v859 = vld [vmem:[%s279 + $0x58] sm:$0xf]
      %v860 = vsel %vm813, %v705, %v859
      %861 = vst [vmem:[%s279 + $0x58] sm:$0xf] %v860
      %862 = vst.msk [vmem:[%s279 + $0x5c] sm:$0xf] %vm817, %v714
      %v863 = vld [vmem:[%s279 + $0x60] sm:$0xf]
      %v864 = vsel %vm813, %v721, %v863
      %865 = vst [vmem:[%s279 + $0x60] sm:$0xf] %v864
      %866 = vst.msk [vmem:[%s279 + $0x64] sm:$0xf] %vm817, %v730
      %v867 = vld [vmem:[%s279 + $0x68] sm:$0xf]
      %v868 = vsel %vm813, %v737, %v867
      %869 = vst [vmem:[%s279 + $0x68] sm:$0xf] %v868
      %870 = vst.msk [vmem:[%s279 + $0x6c] sm:$0xf] %vm817, %v746
      %v871 = vld [vmem:[%s279 + $0x70] sm:$0xf]
      %v872 = vsel %vm813, %v753, %v871
      %873 = vst [vmem:[%s279 + $0x70] sm:$0xf] %v872
      %874 = vst.msk [vmem:[%s279 + $0x74] sm:$0xf] %vm817, %v762
      %v875 = vld [vmem:[%s279 + $0x78] sm:$0xf]
      %v876 = vsel %vm813, %v769, %v875
      %877 = vst [vmem:[%s279 + $0x78] sm:$0xf] %v876
      %878 = vst.msk [vmem:[%s279 + $0x7c] sm:$0xf] %vm817, %v778
      %911 = vrot.lane.b32.xlu0 %v489, 8
      %v912 = vpop.permute.xlu0 %911
      %913 = vrot.lane.b32.xlu0 %v490, 8
      %v914 = vpop.permute.xlu0 %913
      %915 = vrot.lane.b32.xlu0 %v491, 8
      %v916 = vpop.permute.xlu0 %915
      %917 = vrot.lane.b32.xlu0 %v492, 8
      %v918 = vpop.permute.xlu0 %917
      %919 = vrot.lane.b32.xlu0 %v493, 8
      %v920 = vpop.permute.xlu0 %919
      %921 = vrot.lane.b32.xlu0 %v494, 8
      %v922 = vpop.permute.xlu0 %921
      %923 = vrot.lane.b32.xlu0 %v495, 8
      %v924 = vpop.permute.xlu0 %923
      %925 = vrot.lane.b32.xlu0 %v496, 8
      %v926 = vpop.permute.xlu0 %925
      %927 = vrot.lane.b32.xlu0 %v497, 8
      %v928 = vpop.permute.xlu0 %927
      %929 = vrot.lane.b32.xlu0 %v498, 8
      %v930 = vpop.permute.xlu0 %929
      %931 = vrot.lane.b32.xlu0 %v499, 8
      %v932 = vpop.permute.xlu0 %931
      %933 = vrot.lane.b32.xlu0 %v500, 8
      %v934 = vpop.permute.xlu0 %933
      %935 = vrot.lane.b32.xlu0 %v501, 8
      %v936 = vpop.permute.xlu0 %935
      %937 = vrot.lane.b32.xlu0 %v502, 8
      %v938 = vpop.permute.xlu0 %937
      %939 = vrot.lane.b32.xlu0 %v503, 8
      %v940 = vpop.permute.xlu0 %939
      %941 = vrot.lane.b32.xlu0 %v504, 8
      %v942 = vpop.permute.xlu0 %941
      %943 = vrot.lane.b32.xlu0 %v505, 8
      %v944 = vpop.permute.xlu0 %943
      %945 = vrot.lane.b32.xlu0 %v506, 8
      %v946 = vpop.permute.xlu0 %945
      %947 = vrot.lane.b32.xlu0 %v507, 8
      %v948 = vpop.permute.xlu0 %947
      %949 = vrot.lane.b32.xlu0 %v508, 8
      %v950 = vpop.permute.xlu0 %949
      %951 = vrot.lane.b32.xlu0 %v509, 8
      %v952 = vpop.permute.xlu0 %951
      %953 = vrot.lane.b32.xlu0 %v510, 8
      %v954 = vpop.permute.xlu0 %953
      %955 = vrot.lane.b32.xlu0 %v511, 8
      %v956 = vpop.permute.xlu0 %955
      %957 = vrot.lane.b32.xlu0 %v512, 8
      %v958 = vpop.permute.xlu0 %957
      %959 = vrot.lane.b32.xlu0 %v513, 8
      %v960 = vpop.permute.xlu0 %959
      %961 = vrot.lane.b32.xlu0 %v514, 8
      %v962 = vpop.permute.xlu0 %961
      %963 = vrot.lane.b32.xlu0 %v515, 8
      %v964 = vpop.permute.xlu0 %963
      %965 = vrot.lane.b32.xlu0 %v516, 8
      %v966 = vpop.permute.xlu0 %965
      %967 = vrot.lane.b32.xlu0 %v517, 8
      %v968 = vpop.permute.xlu0 %967
      %969 = vrot.lane.b32.xlu0 %v518, 8
      %v970 = vpop.permute.xlu0 %969
      %971 = vrot.lane.b32.xlu0 %v519, 8
      %v972 = vpop.permute.xlu0 %971
      %973 = vrot.lane.b32.xlu0 %v520, 8
      %v974 = vpop.permute.xlu0 %973
      %vm1007 = vcmask 93248
      %1008 = vst.msk [vmem:[%s279] sm:$0xf] %vm1007, %v912
      %1009 = vst.msk [vmem:[%s279 + $0x4] sm:$0xf] %vm1007, %v914
      %1010 = vst.msk [vmem:[%s279 + $0x8] sm:$0xf] %vm1007, %v916
      %1011 = vst.msk [vmem:[%s279 + $0xc] sm:$0xf] %vm1007, %v918
      %1012 = vst.msk [vmem:[%s279 + $0x10] sm:$0xf] %vm1007, %v920
      %1013 = vst.msk [vmem:[%s279 + $0x14] sm:$0xf] %vm1007, %v922
      %1014 = vst.msk [vmem:[%s279 + $0x18] sm:$0xf] %vm1007, %v924
      %1015 = vst.msk [vmem:[%s279 + $0x1c] sm:$0xf] %vm1007, %v926
      %1016 = vst.msk [vmem:[%s279 + $0x20] sm:$0xf] %vm1007, %v928
      %1017 = vst.msk [vmem:[%s279 + $0x24] sm:$0xf] %vm1007, %v930
      %1018 = vst.msk [vmem:[%s279 + $0x28] sm:$0xf] %vm1007, %v932
      %1019 = vst.msk [vmem:[%s279 + $0x2c] sm:$0xf] %vm1007, %v934
      %1020 = vst.msk [vmem:[%s279 + $0x30] sm:$0xf] %vm1007, %v936
      %1021 = vst.msk [vmem:[%s279 + $0x34] sm:$0xf] %vm1007, %v938
      %1022 = vst.msk [vmem:[%s279 + $0x38] sm:$0xf] %vm1007, %v940
      %1023 = vst.msk [vmem:[%s279 + $0x3c] sm:$0xf] %vm1007, %v942
      %1024 = vst.msk [vmem:[%s279 + $0x40] sm:$0xf] %vm1007, %v944
      %1025 = vst.msk [vmem:[%s279 + $0x44] sm:$0xf] %vm1007, %v946
      %1026 = vst.msk [vmem:[%s279 + $0x48] sm:$0xf] %vm1007, %v948
      %1027 = vst.msk [vmem:[%s279 + $0x4c] sm:$0xf] %vm1007, %v950
      %1028 = vst.msk [vmem:[%s279 + $0x50] sm:$0xf] %vm1007, %v952
      %1029 = vst.msk [vmem:[%s279 + $0x54] sm:$0xf] %vm1007, %v954
      %1030 = vst.msk [vmem:[%s279 + $0x58] sm:$0xf] %vm1007, %v956
      %1031 = vst.msk [vmem:[%s279 + $0x5c] sm:$0xf] %vm1007, %v958
      %1032 = vst.msk [vmem:[%s279 + $0x60] sm:$0xf] %vm1007, %v960
      %1033 = vst.msk [vmem:[%s279 + $0x64] sm:$0xf] %vm1007, %v962
      %1034 = vst.msk [vmem:[%s279 + $0x68] sm:$0xf] %vm1007, %v964
      %1035 = vst.msk [vmem:[%s279 + $0x6c] sm:$0xf] %vm1007, %v966
      %1036 = vst.msk [vmem:[%s279 + $0x70] sm:$0xf] %vm1007, %v968
      %1037 = vst.msk [vmem:[%s279 + $0x74] sm:$0xf] %vm1007, %v970
      %1038 = vst.msk [vmem:[%s279 + $0x78] sm:$0xf] %vm1007, %v972
      %1039 = vst.msk [vmem:[%s279 + $0x7c] sm:$0xf] %vm1007, %v974
      %vm1040 = vsmask.f32 3328
      %vm1041 = vsmask.f32 7440
      %vm1042 = vmor %vm1040, %vm1041
      %v1043 = vrot.slane %v524, 4
      %v1044 = vrot.slane %v527, 5
      %v1045 = vor.u32 %v1043, %v1044
      %v1046 = vrot.slane %v1045, 4
      %v1047 = vrot.slane %v535, 5
      %v1048 = vsel %vm1042, %v1046, %v1047
      %v1049 = vrot.slane %v532, 4
      %v1050 = vor.u32 %v1049, %v1047
      %v1051 = vrot.slane %v1050, 4
      %v1052 = vrot.slane %v540, 4
      %v1053 = vrot.slane %v543, 5
      %v1054 = vor.u32 %v1052, %v1053
      %v1055 = vrot.slane %v1054, 4
      %v1056 = vrot.slane %v551, 5
      %v1057 = vsel %vm1042, %v1055, %v1056
      %v1058 = vrot.slane %v548, 4
      %v1059 = vor.u32 %v1058, %v1056
      %v1060 = vrot.slane %v1059, 4
      %v1061 = vrot.slane %v556, 4
      %v1062 = vrot.slane %v559, 5
      %v1063 = vor.u32 %v1061, %v1062
      %v1064 = vrot.slane %v1063, 4
      %v1065 = vrot.slane %v567, 5
      %v1066 = vsel %vm1042, %v1064, %v1065
      %v1067 = vrot.slane %v564, 4
      %v1068 = vor.u32 %v1067, %v1065
      %v1069 = vrot.slane %v1068, 4
      %v1070 = vrot.slane %v572, 4
      %v1071 = vrot.slane %v575, 5
      %v1072 = vor.u32 %v1070, %v1071
      %v1073 = vrot.slane %v1072, 4
      %v1074 = vrot.slane %v583, 5
      %v1075 = vsel %vm1042, %v1073, %v1074
      %v1076 = vrot.slane %v580, 4
      %v1077 = vor.u32 %v1076, %v1074
      %v1078 = vrot.slane %v1077, 4
      %v1079 = vrot.slane %v588, 4
      %v1080 = vrot.slane %v591, 5
      %v1081 = vor.u32 %v1079, %v1080
      %v1082 = vrot.slane %v1081, 4
      %v1083 = vrot.slane %v599, 5
      %v1084 = vsel %vm1042, %v1082, %v1083
      %v1085 = vrot.slane %v596, 4
      %v1086 = vor.u32 %v1085, %v1083
      %v1087 = vrot.slane %v1086, 4
      %v1088 = vrot.slane %v604, 4
      %v1089 = vrot.slane %v607, 5
      %v1090 = vor.u32 %v1088, %v1089
      %v1091 = vrot.slane %v1090, 4
      %v1092 = vrot.slane %v615, 5
      %v1093 = vsel %vm1042, %v1091, %v1092
      %v1094 = vrot.slane %v612, 4
      %v1095 = vor.u32 %v1094, %v1092
      %v1096 = vrot.slane %v1095, 4
      %v1097 = vrot.slane %v620, 4
      %v1098 = vrot.slane %v623, 5
      %v1099 = vor.u32 %v1097, %v1098
      %v1100 = vrot.slane %v1099, 4
      %v1101 = vrot.slane %v631, 5
      %v1102 = vsel %vm1042, %v1100, %v1101
      %v1103 = vrot.slane %v628, 4
      %v1104 = vor.u32 %v1103, %v1101
      %v1105 = vrot.slane %v1104, 4
      %v1106 = vrot.slane %v636, 4
      %v1107 = vrot.slane %v639, 5
      %v1108 = vor.u32 %v1106, %v1107
      %v1109 = vrot.slane %v1108, 4
      %v1110 = vrot.slane %v647, 5
      %v1111 = vsel %vm1042, %v1109, %v1110
      %v1112 = vrot.slane %v644, 4
      %v1113 = vor.u32 %v1112, %v1110
      %v1114 = vrot.slane %v1113, 4
      %v1115 = vrot.slane %v652, 4
      %v1116 = vrot.slane %v655, 5
      %v1117 = vor.u32 %v1115, %v1116
      %v1118 = vrot.slane %v1117, 4
      %v1119 = vrot.slane %v663, 5
      %v1120 = vsel %vm1042, %v1118, %v1119
      %v1121 = vrot.slane %v660, 4
      %v1122 = vor.u32 %v1121, %v1119
      %v1123 = vrot.slane %v1122, 4
      %v1124 = vrot.slane %v668, 4
      %v1125 = vrot.slane %v671, 5
      %v1126 = vor.u32 %v1124, %v1125
      %v1127 = vrot.slane %v1126, 4
      %v1128 = vrot.slane %v679, 5
      %v1129 = vsel %vm1042, %v1127, %v1128
      %v1130 = vrot.slane %v676, 4
      %v1131 = vor.u32 %v1130, %v1128
      %v1132 = vrot.slane %v1131, 4
      %v1133 = vrot.slane %v684, 4
      %v1134 = vrot.slane %v687, 5
      %v1135 = vor.u32 %v1133, %v1134
      %v1136 = vrot.slane %v1135, 4
      %v1137 = vrot.slane %v695, 5
      %v1138 = vsel %vm1042, %v1136, %v1137
      %v1139 = vrot.slane %v692, 4
      %v1140 = vor.u32 %v1139, %v1137
      %v1141 = vrot.slane %v1140, 4
      %v1142 = vrot.slane %v700, 4
      %v1143 = vrot.slane %v703, 5
      %v1144 = vor.u32 %v1142, %v1143
      %v1145 = vrot.slane %v1144, 4
      %v1146 = vrot.slane %v711, 5
      %v1147 = vsel %vm1042, %v1145, %v1146
      %v1148 = vrot.slane %v708, 4
      %v1149 = vor.u32 %v1148, %v1146
      %v1150 = vrot.slane %v1149, 4
      %v1151 = vrot.slane %v716, 4
      %v1152 = vrot.slane %v719, 5
      %v1153 = vor.u32 %v1151, %v1152
      %v1154 = vrot.slane %v1153, 4
      %v1155 = vrot.slane %v727, 5
      %v1156 = vsel %vm1042, %v1154, %v1155
      %v1157 = vrot.slane %v724, 4
      %v1158 = vor.u32 %v1157, %v1155
      %v1159 = vrot.slane %v1158, 4
      %v1160 = vrot.slane %v732, 4
      %v1161 = vrot.slane %v735, 5
      %v1162 = vor.u32 %v1160, %v1161
      %v1163 = vrot.slane %v1162, 4
      %v1164 = vrot.slane %v743, 5
      %v1165 = vsel %vm1042, %v1163, %v1164
      %v1166 = vrot.slane %v740, 4
      %v1167 = vor.u32 %v1166, %v1164
      %v1168 = vrot.slane %v1167, 4
      %v1169 = vrot.slane %v748, 4
      %v1170 = vrot.slane %v751, 5
      %v1171 = vor.u32 %v1169, %v1170
      %v1172 = vrot.slane %v1171, 4
      %v1173 = vrot.slane %v759, 5
      %v1174 = vsel %vm1042, %v1172, %v1173
      %v1175 = vrot.slane %v756, 4
      %v1176 = vor.u32 %v1175, %v1173
      %v1177 = vrot.slane %v1176, 4
      %v1178 = vrot.slane %v764, 4
      %v1179 = vrot.slane %v767, 5
      %v1180 = vor.u32 %v1178, %v1179
      %v1181 = vrot.slane %v1180, 4
      %v1182 = vrot.slane %v775, 5
      %v1183 = vsel %vm1042, %v1181, %v1182
      %v1184 = vrot.slane %v772, 4
      %v1185 = vor.u32 %v1184, %v1182
      %v1186 = vrot.slane %v1185, 4
      %1187 = vrot.lane.b32.xlu0 %v1048, 16
      %v1188 = vpop.permute.xlu0 %1187
      %1189 = vrot.lane.b32.xlu0 %v1051, 16
      %v1190 = vpop.permute.xlu0 %1189
      %1191 = vrot.lane.b32.xlu0 %v1057, 16
      %v1192 = vpop.permute.xlu0 %1191
      %1193 = vrot.lane.b32.xlu0 %v1060, 16
      %v1194 = vpop.permute.xlu0 %1193
      %1195 = vrot.lane.b32.xlu0 %v1066, 16
      %v1196 = vpop.permute.xlu0 %1195
      %1197 = vrot.lane.b32.xlu0 %v1069, 16
      %v1198 = vpop.permute.xlu0 %1197
      %1199 = vrot.lane.b32.xlu0 %v1075, 16
      %v1200 = vpop.permute.xlu0 %1199
      %1201 = vrot.lane.b32.xlu0 %v1078, 16
      %v1202 = vpop.permute.xlu0 %1201
      %1203 = vrot.lane.b32.xlu0 %v1084, 16
      %v1204 = vpop.permute.xlu0 %1203
      %1205 = vrot.lane.b32.xlu0 %v1087, 16
      %v1206 = vpop.permute.xlu0 %1205
      %1207 = vrot.lane.b32.xlu0 %v1093, 16
      %v1208 = vpop.permute.xlu0 %1207
      %1209 = vrot.lane.b32.xlu0 %v1096, 16
      %v1210 = vpop.permute.xlu0 %1209
      %1211 = vrot.lane.b32.xlu0 %v1102, 16
      %v1212 = vpop.permute.xlu0 %1211
      %1213 = vrot.lane.b32.xlu0 %v1105, 16
      %v1214 = vpop.permute.xlu0 %1213
      %1215 = vrot.lane.b32.xlu0 %v1111, 16
      %v1216 = vpop.permute.xlu0 %1215
      %1217 = vrot.lane.b32.xlu0 %v1114, 16
      %v1218 = vpop.permute.xlu0 %1217
      %1219 = vrot.lane.b32.xlu0 %v1120, 16
      %v1220 = vpop.permute.xlu0 %1219
      %1221 = vrot.lane.b32.xlu0 %v1123, 16
      %v1222 = vpop.permute.xlu0 %1221
      %1223 = vrot.lane.b32.xlu0 %v1129, 16
      %v1224 = vpop.permute.xlu0 %1223
      %1225 = vrot.lane.b32.xlu0 %v1132, 16
      %v1226 = vpop.permute.xlu0 %1225
      %1227 = vrot.lane.b32.xlu0 %v1138, 16
      %v1228 = vpop.permute.xlu0 %1227
      %1229 = vrot.lane.b32.xlu0 %v1141, 16
      %v1230 = vpop.permute.xlu0 %1229
      %1231 = vrot.lane.b32.xlu0 %v1147, 16
      %v1232 = vpop.permute.xlu0 %1231
      %1233 = vrot.lane.b32.xlu0 %v1150, 16
      %v1234 = vpop.permute.xlu0 %1233
      %1235 = vrot.lane.b32.xlu0 %v1156, 16
      %v1236 = vpop.permute.xlu0 %1235
      %1237 = vrot.lane.b32.xlu0 %v1159, 16
      %v1238 = vpop.permute.xlu0 %1237
      %1239 = vrot.lane.b32.xlu0 %v1165, 16
      %v1240 = vpop.permute.xlu0 %1239
      %1241 = vrot.lane.b32.xlu0 %v1168, 16
      %v1242 = vpop.permute.xlu0 %1241
      %1243 = vrot.lane.b32.xlu0 %v1174, 16
      %v1244 = vpop.permute.xlu0 %1243
      %1245 = vrot.lane.b32.xlu0 %v1177, 16
      %v1246 = vpop.permute.xlu0 %1245
      %1247 = vrot.lane.b32.xlu0 %v1183, 16
      %v1248 = vpop.permute.xlu0 %1247
      %1249 = vrot.lane.b32.xlu0 %v1186, 16
      %v1250 = vpop.permute.xlu0 %1249
      %vm1283 = vcmask 158848
      %1284 = vst.msk [vmem:[%s279] sm:$0xf] %vm1283, %v1188
      %vm1285 = vcmask 158848
      %vm1286 = vmand %vm1285, %vm1040
      %v1287 = vld [vmem:[%s279 + $0x4] sm:$0xf]
      %v1288 = vsel %vm1286, %v1190, %v1287
      %1289 = vst [vmem:[%s279 + $0x4] sm:$0xf] %v1288
      %1290 = vst.msk [vmem:[%s279 + $0x8] sm:$0xf] %vm1283, %v1192
      %v1291 = vld [vmem:[%s279 + $0xc] sm:$0xf]
      %v1292 = vsel %vm1286, %v1194, %v1291
      %1293 = vst [vmem:[%s279 + $0xc] sm:$0xf] %v1292
      %1294 = vst.msk [vmem:[%s279 + $0x10] sm:$0xf] %vm1283, %v1196
      %v1295 = vld [vmem:[%s279 + $0x14] sm:$0xf]
      %v1296 = vsel %vm1286, %v1198, %v1295
      %1297 = vst [vmem:[%s279 + $0x14] sm:$0xf] %v1296
      %1298 = vst.msk [vmem:[%s279 + $0x18] sm:$0xf] %vm1283, %v1200
      %v1299 = vld [vmem:[%s279 + $0x1c] sm:$0xf]
      %v1300 = vsel %vm1286, %v1202, %v1299
      %1301 = vst [vmem:[%s279 + $0x1c] sm:$0xf] %v1300
      %1302 = vst.msk [vmem:[%s279 + $0x20] sm:$0xf] %vm1283, %v1204
      %v1303 = vld [vmem:[%s279 + $0x24] sm:$0xf]
      %v1304 = vsel %vm1286, %v1206, %v1303
      %1305 = vst [vmem:[%s279 + $0x24] sm:$0xf] %v1304
      %1306 = vst.msk [vmem:[%s279 + $0x28] sm:$0xf] %vm1283, %v1208
      %v1307 = vld [vmem:[%s279 + $0x2c] sm:$0xf]
      %v1308 = vsel %vm1286, %v1210, %v1307
      %1309 = vst [vmem:[%s279 + $0x2c] sm:$0xf] %v1308
      %1310 = vst.msk [vmem:[%s279 + $0x30] sm:$0xf] %vm1283, %v1212
      %v1311 = vld [vmem:[%s279 + $0x34] sm:$0xf]
      %v1312 = vsel %vm1286, %v1214, %v1311
      %1313 = vst [vmem:[%s279 + $0x34] sm:$0xf] %v1312
      %1314 = vst.msk [vmem:[%s279 + $0x38] sm:$0xf] %vm1283, %v1216
      %v1315 = vld [vmem:[%s279 + $0x3c] sm:$0xf]
      %v1316 = vsel %vm1286, %v1218, %v1315
      %1317 = vst [vmem:[%s279 + $0x3c] sm:$0xf] %v1316
      %1318 = vst.msk [vmem:[%s279 + $0x40] sm:$0xf] %vm1283, %v1220
      %v1319 = vld [vmem:[%s279 + $0x44] sm:$0xf]
      %v1320 = vsel %vm1286, %v1222, %v1319
      %1321 = vst [vmem:[%s279 + $0x44] sm:$0xf] %v1320
      %1322 = vst.msk [vmem:[%s279 + $0x48] sm:$0xf] %vm1283, %v1224
      %v1323 = vld [vmem:[%s279 + $0x4c] sm:$0xf]
      %v1324 = vsel %vm1286, %v1226, %v1323
      %1325 = vst [vmem:[%s279 + $0x4c] sm:$0xf] %v1324
      %1326 = vst.msk [vmem:[%s279 + $0x50] sm:$0xf] %vm1283, %v1228
      %v1327 = vld [vmem:[%s279 + $0x54] sm:$0xf]
      %v1328 = vsel %vm1286, %v1230, %v1327
      %1329 = vst [vmem:[%s279 + $0x54] sm:$0xf] %v1328
      %1330 = vst.msk [vmem:[%s279 + $0x58] sm:$0xf] %vm1283, %v1232
      %v1331 = vld [vmem:[%s279 + $0x5c] sm:$0xf]
      %v1332 = vsel %vm1286, %v1234, %v1331
      %1333 = vst [vmem:[%s279 + $0x5c] sm:$0xf] %v1332
      %1334 = vst.msk [vmem:[%s279 + $0x60] sm:$0xf] %vm1283, %v1236
      %v1335 = vld [vmem:[%s279 + $0x64] sm:$0xf]
      %v1336 = vsel %vm1286, %v1238, %v1335
      %1337 = vst [vmem:[%s279 + $0x64] sm:$0xf] %v1336
      %1338 = vst.msk [vmem:[%s279 + $0x68] sm:$0xf] %vm1283, %v1240
      %v1339 = vld [vmem:[%s279 + $0x6c] sm:$0xf]
      %v1340 = vsel %vm1286, %v1242, %v1339
      %1341 = vst [vmem:[%s279 + $0x6c] sm:$0xf] %v1340
      %1342 = vst.msk [vmem:[%s279 + $0x70] sm:$0xf] %vm1283, %v1244
      %v1343 = vld [vmem:[%s279 + $0x74] sm:$0xf]
      %v1344 = vsel %vm1286, %v1246, %v1343
      %1345 = vst [vmem:[%s279 + $0x74] sm:$0xf] %v1344
      %1346 = vst.msk [vmem:[%s279 + $0x78] sm:$0xf] %vm1283, %v1248
      %v1347 = vld [vmem:[%s279 + $0x7c] sm:$0xf]
      %v1348 = vsel %vm1286, %v1250, %v1347
      %1349 = vst [vmem:[%s279 + $0x7c] sm:$0xf] %v1348
      %v1350 = vld [vmem:[%s266] sm:$0xf]
      %v1351 = vld [vmem:[%s266 + $0x4] sm:$0xf]
      %v1352 = vld [vmem:[%s266 + $0x8] sm:$0xf]
      %v1353 = vld [vmem:[%s266 + $0xc] sm:$0xf]
      %v1354 = vld [vmem:[%s266 + $0x10] sm:$0xf]
      %v1355 = vld [vmem:[%s266 + $0x14] sm:$0xf]
      %v1356 = vld [vmem:[%s266 + $0x18] sm:$0xf]
      %v1357 = vld [vmem:[%s266 + $0x1c] sm:$0xf]
      %v1358 = vld [vmem:[%s266 + $0x20] sm:$0xf]
      %v1359 = vld [vmem:[%s266 + $0x24] sm:$0xf]
      %v1360 = vld [vmem:[%s266 + $0x28] sm:$0xf]
      %v1361 = vld [vmem:[%s266 + $0x2c] sm:$0xf]
      %v1362 = vld [vmem:[%s266 + $0x30] sm:$0xf]
      %v1363 = vld [vmem:[%s266 + $0x34] sm:$0xf]
      %v1364 = vld [vmem:[%s266 + $0x38] sm:$0xf]
      %v1365 = vld [vmem:[%s266 + $0x3c] sm:$0xf]
      %v1366 = vld [vmem:[%s266 + $0x40] sm:$0xf]
      %v1367 = vld [vmem:[%s266 + $0x44] sm:$0xf]
      %v1368 = vld [vmem:[%s266 + $0x48] sm:$0xf]
      %v1369 = vld [vmem:[%s266 + $0x4c] sm:$0xf]
      %v1370 = vld [vmem:[%s266 + $0x50] sm:$0xf]
      %v1371 = vld [vmem:[%s266 + $0x54] sm:$0xf]
      %v1372 = vld [vmem:[%s266 + $0x58] sm:$0xf]
      %v1373 = vld [vmem:[%s266 + $0x5c] sm:$0xf]
      %v1374 = vld [vmem:[%s266 + $0x60] sm:$0xf]
      %v1375 = vld [vmem:[%s266 + $0x64] sm:$0xf]
      %v1376 = vld [vmem:[%s266 + $0x68] sm:$0xf]
      %v1377 = vld [vmem:[%s266 + $0x6c] sm:$0xf]
      %v1378 = vld [vmem:[%s266 + $0x70] sm:$0xf]
      %v1379 = vld [vmem:[%s266 + $0x74] sm:$0xf]
      %v1380 = vld [vmem:[%s266 + $0x78] sm:$0xf]
      %v1381 = vld [vmem:[%s266 + $0x7c] sm:$0xf]
      %v1383 = vshrl.u32 %v1350, 16
      %v1385 = vrot.slane %v1383, 7
      %v1386 = vshll.u32 %v1350, 16
      %v1388 = vor.u32 %v1385, %v1386
      %v1389 = vrot.slane %v1385, 4
      %v1391 = vshrl.u32 %v1351, 16
      %v1393 = vrot.slane %v1391, 7
      %v1394 = vshll.u32 %v1351, 16
      %v1396 = vor.u32 %v1393, %v1394
      %v1397 = vsel %vm522, %v1389, %v1396
      %v1399 = vshrl.u32 %v1352, 16
      %v1401 = vrot.slane %v1399, 7
      %v1402 = vshll.u32 %v1352, 16
      %v1404 = vor.u32 %v1401, %v1402
      %v1405 = vrot.slane %v1401, 4
      %v1407 = vshrl.u32 %v1353, 16
      %v1409 = vrot.slane %v1407, 7
      %v1410 = vshll.u32 %v1353, 16
      %v1412 = vor.u32 %v1409, %v1410
      %v1413 = vsel %vm522, %v1405, %v1412
      %v1415 = vshrl.u32 %v1354, 16
      %v1417 = vrot.slane %v1415, 7
      %v1418 = vshll.u32 %v1354, 16
      %v1420 = vor.u32 %v1417, %v1418
      %v1421 = vrot.slane %v1417, 4
      %v1423 = vshrl.u32 %v1355, 16
      %v1425 = vrot.slane %v1423, 7
      %v1426 = vshll.u32 %v1355, 16
      %v1428 = vor.u32 %v1425, %v1426
      %v1429 = vsel %vm522, %v1421, %v1428
      %v1431 = vshrl.u32 %v1356, 16
      %v1433 = vrot.slane %v1431, 7
      %v1434 = vshll.u32 %v1356, 16
      %v1436 = vor.u32 %v1433, %v1434
      %v1437 = vrot.slane %v1433, 4
      %v1439 = vshrl.u32 %v1357, 16
      %v1441 = vrot.slane %v1439, 7
      %v1442 = vshll.u32 %v1357, 16
      %v1444 = vor.u32 %v1441, %v1442
      %v1445 = vsel %vm522, %v1437, %v1444
      %v1447 = vshrl.u32 %v1358, 16
      %v1449 = vrot.slane %v1447, 7
      %v1450 = vshll.u32 %v1358, 16
      %v1452 = vor.u32 %v1449, %v1450
      %v1453 = vrot.slane %v1449, 4
      %v1455 = vshrl.u32 %v1359, 16
      %v1457 = vrot.slane %v1455, 7
      %v1458 = vshll.u32 %v1359, 16
      %v1460 = vor.u32 %v1457, %v1458
      %v1461 = vsel %vm522, %v1453, %v1460
      %v1463 = vshrl.u32 %v1360, 16
      %v1465 = vrot.slane %v1463, 7
      %v1466 = vshll.u32 %v1360, 16
      %v1468 = vor.u32 %v1465, %v1466
      %v1469 = vrot.slane %v1465, 4
      %v1471 = vshrl.u32 %v1361, 16
      %v1473 = vrot.slane %v1471, 7
      %v1474 = vshll.u32 %v1361, 16
      %v1476 = vor.u32 %v1473, %v1474
      %v1477 = vsel %vm522, %v1469, %v1476
      %v1479 = vshrl.u32 %v1362, 16
      %v1481 = vrot.slane %v1479, 7
      %v1482 = vshll.u32 %v1362, 16
      %v1484 = vor.u32 %v1481, %v1482
      %v1485 = vrot.slane %v1481, 4
      %v1487 = vshrl.u32 %v1363, 16
      %v1489 = vrot.slane %v1487, 7
      %v1490 = vshll.u32 %v1363, 16
      %v1492 = vor.u32 %v1489, %v1490
      %v1493 = vsel %vm522, %v1485, %v1492
      %v1495 = vshrl.u32 %v1364, 16
      %v1497 = vrot.slane %v1495, 7
      %v1498 = vshll.u32 %v1364, 16
      %v1500 = vor.u32 %v1497, %v1498
      %v1501 = vrot.slane %v1497, 4
      %v1503 = vshrl.u32 %v1365, 16
      %v1505 = vrot.slane %v1503, 7
      %v1506 = vshll.u32 %v1365, 16
      %v1508 = vor.u32 %v1505, %v1506
      %v1509 = vsel %vm522, %v1501, %v1508
      %v1511 = vshrl.u32 %v1366, 16
      %v1513 = vrot.slane %v1511, 7
      %v1514 = vshll.u32 %v1366, 16
      %v1516 = vor.u32 %v1513, %v1514
      %v1517 = vrot.slane %v1513, 4
      %v1519 = vshrl.u32 %v1367, 16
      %v1521 = vrot.slane %v1519, 7
      %v1522 = vshll.u32 %v1367, 16
      %v1524 = vor.u32 %v1521, %v1522
      %v1525 = vsel %vm522, %v1517, %v1524
      %v1527 = vshrl.u32 %v1368, 16
      %v1529 = vrot.slane %v1527, 7
      %v1530 = vshll.u32 %v1368, 16
      %v1532 = vor.u32 %v1529, %v1530
      %v1533 = vrot.slane %v1529, 4
      %v1535 = vshrl.u32 %v1369, 16
      %v1537 = vrot.slane %v1535, 7
      %v1538 = vshll.u32 %v1369, 16
      %v1540 = vor.u32 %v1537, %v1538
      %v1541 = vsel %vm522, %v1533, %v1540
      %v1543 = vshrl.u32 %v1370, 16
      %v1545 = vrot.slane %v1543, 7
      %v1546 = vshll.u32 %v1370, 16
      %v1548 = vor.u32 %v1545, %v1546
      %v1549 = vrot.slane %v1545, 4
      %v1551 = vshrl.u32 %v1371, 16
      %v1553 = vrot.slane %v1551, 7
      %v1554 = vshll.u32 %v1371, 16
      %v1556 = vor.u32 %v1553, %v1554
      %v1557 = vsel %vm522, %v1549, %v1556
      %v1559 = vshrl.u32 %v1372, 16
      %v1561 = vrot.slane %v1559, 7
      %v1562 = vshll.u32 %v1372, 16
      %v1564 = vor.u32 %v1561, %v1562
      %v1565 = vrot.slane %v1561, 4
      %v1567 = vshrl.u32 %v1373, 16
      %v1569 = vrot.slane %v1567, 7
      %v1570 = vshll.u32 %v1373, 16
      %v1572 = vor.u32 %v1569, %v1570
      %v1573 = vsel %vm522, %v1565, %v1572
      %v1575 = vshrl.u32 %v1374, 16
      %v1577 = vrot.slane %v1575, 7
      %v1578 = vshll.u32 %v1374, 16
      %v1580 = vor.u32 %v1577, %v1578
      %v1581 = vrot.slane %v1577, 4
      %v1583 = vshrl.u32 %v1375, 16
      %v1585 = vrot.slane %v1583, 7
      %v1586 = vshll.u32 %v1375, 16
      %v1588 = vor.u32 %v1585, %v1586
      %v1589 = vsel %vm522, %v1581, %v1588
      %v1591 = vshrl.u32 %v1376, 16
      %v1593 = vrot.slane %v1591, 7
      %v1594 = vshll.u32 %v1376, 16
      %v1596 = vor.u32 %v1593, %v1594
      %v1597 = vrot.slane %v1593, 4
      %v1599 = vshrl.u32 %v1377, 16
      %v1601 = vrot.slane %v1599, 7
      %v1602 = vshll.u32 %v1377, 16
      %v1604 = vor.u32 %v1601, %v1602
      %v1605 = vsel %vm522, %v1597, %v1604
      %v1607 = vshrl.u32 %v1378, 16
      %v1609 = vrot.slane %v1607, 7
      %v1610 = vshll.u32 %v1378, 16
      %v1612 = vor.u32 %v1609, %v1610
      %v1613 = vrot.slane %v1609, 4
      %v1615 = vshrl.u32 %v1379, 16
      %v1617 = vrot.slane %v1615, 7
      %v1618 = vshll.u32 %v1379, 16
      %v1620 = vor.u32 %v1617, %v1618
      %v1621 = vsel %vm522, %v1613, %v1620
      %v1623 = vshrl.u32 %v1380, 16
      %v1625 = vrot.slane %v1623, 7
      %v1626 = vshll.u32 %v1380, 16
      %v1628 = vor.u32 %v1625, %v1626
      %v1629 = vrot.slane %v1625, 4
      %v1631 = vshrl.u32 %v1381, 16
      %v1633 = vrot.slane %v1631, 7
      %v1634 = vshll.u32 %v1381, 16
      %v1636 = vor.u32 %v1633, %v1634
      %v1637 = vsel %vm522, %v1629, %v1636
      %1638 = vrot.lane.b32.xlu0 %v1388, 4
      %v1639 = vpop.permute.xlu0 %1638
      %1640 = vrot.lane.b32.xlu0 %v1397, 4
      %v1641 = vpop.permute.xlu0 %1640
      %1642 = vrot.lane.b32.xlu0 %v1404, 4
      %v1643 = vpop.permute.xlu0 %1642
      %1644 = vrot.lane.b32.xlu0 %v1413, 4
      %v1645 = vpop.permute.xlu0 %1644
      %1646 = vrot.lane.b32.xlu0 %v1420, 4
      %v1647 = vpop.permute.xlu0 %1646
      %1648 = vrot.lane.b32.xlu0 %v1429, 4
      %v1649 = vpop.permute.xlu0 %1648
      %1650 = vrot.lane.b32.xlu0 %v1436, 4
      %v1651 = vpop.permute.xlu0 %1650
      %1652 = vrot.lane.b32.xlu0 %v1445, 4
      %v1653 = vpop.permute.xlu0 %1652
      %1654 = vrot.lane.b32.xlu0 %v1452, 4
      %v1655 = vpop.permute.xlu0 %1654
      %1656 = vrot.lane.b32.xlu0 %v1461, 4
      %v1657 = vpop.permute.xlu0 %1656
      %1658 = vrot.lane.b32.xlu0 %v1468, 4
      %v1659 = vpop.permute.xlu0 %1658
      %1660 = vrot.lane.b32.xlu0 %v1477, 4
      %v1661 = vpop.permute.xlu0 %1660
      %1662 = vrot.lane.b32.xlu0 %v1484, 4
      %v1663 = vpop.permute.xlu0 %1662
      %1664 = vrot.lane.b32.xlu0 %v1493, 4
      %v1665 = vpop.permute.xlu0 %1664
      %1666 = vrot.lane.b32.xlu0 %v1500, 4
      %v1667 = vpop.permute.xlu0 %1666
      %1668 = vrot.lane.b32.xlu0 %v1509, 4
      %v1669 = vpop.permute.xlu0 %1668
      %1670 = vrot.lane.b32.xlu0 %v1516, 4
      %v1671 = vpop.permute.xlu0 %1670
      %1672 = vrot.lane.b32.xlu0 %v1525, 4
      %v1673 = vpop.permute.xlu0 %1672
      %1674 = vrot.lane.b32.xlu0 %v1532, 4
      %v1675 = vpop.permute.xlu0 %1674
      %1676 = vrot.lane.b32.xlu0 %v1541, 4
      %v1677 = vpop.permute.xlu0 %1676
      %1678 = vrot.lane.b32.xlu0 %v1548, 4
      %v1679 = vpop.permute.xlu0 %1678
      %1680 = vrot.lane.b32.xlu0 %v1557, 4
      %v1681 = vpop.permute.xlu0 %1680
      %1682 = vrot.lane.b32.xlu0 %v1564, 4
      %v1683 = vpop.permute.xlu0 %1682
      %1684 = vrot.lane.b32.xlu0 %v1573, 4
      %v1685 = vpop.permute.xlu0 %1684
      %1686 = vrot.lane.b32.xlu0 %v1580, 4
      %v1687 = vpop.permute.xlu0 %1686
      %1688 = vrot.lane.b32.xlu0 %v1589, 4
      %v1689 = vpop.permute.xlu0 %1688
      %1690 = vrot.lane.b32.xlu0 %v1596, 4
      %v1691 = vpop.permute.xlu0 %1690
      %1692 = vrot.lane.b32.xlu0 %v1605, 4
      %v1693 = vpop.permute.xlu0 %1692
      %1694 = vrot.lane.b32.xlu0 %v1612, 4
      %v1695 = vpop.permute.xlu0 %1694
      %1696 = vrot.lane.b32.xlu0 %v1621, 4
      %v1697 = vpop.permute.xlu0 %1696
      %1698 = vrot.lane.b32.xlu0 %v1628, 4
      %v1699 = vpop.permute.xlu0 %1698
      %1700 = vrot.lane.b32.xlu0 %v1637, 4
      %v1701 = vpop.permute.xlu0 %1700
      %vm1734 = vcmask 60448
      %vm1735 = vmand %vm1734, %vm812
      %v1736 = vld [vmem:[%s279] sm:$0xf]
      %v1737 = vsel %vm1735, %v1639, %v1736
      %1738 = vst [vmem:[%s279] sm:$0xf] %v1737
      %vm1739 = vcmask 60448
      %1740 = vst.msk [vmem:[%s279 + $0x4] sm:$0xf] %vm1739, %v1641
      %v1741 = vld [vmem:[%s279 + $0x8] sm:$0xf]
      %v1742 = vsel %vm1735, %v1643, %v1741
      %1743 = vst [vmem:[%s279 + $0x8] sm:$0xf] %v1742
      %1744 = vst.msk [vmem:[%s279 + $0xc] sm:$0xf] %vm1739, %v1645
      %v1745 = vld [vmem:[%s279 + $0x10] sm:$0xf]
      %v1746 = vsel %vm1735, %v1647, %v1745
      %1747 = vst [vmem:[%s279 + $0x10] sm:$0xf] %v1746
      %1748 = vst.msk [vmem:[%s279 + $0x14] sm:$0xf] %vm1739, %v1649
      %v1749 = vld [vmem:[%s279 + $0x18] sm:$0xf]
      %v1750 = vsel %vm1735, %v1651, %v1749
      %1751 = vst [vmem:[%s279 + $0x18] sm:$0xf] %v1750
      %1752 = vst.msk [vmem:[%s279 + $0x1c] sm:$0xf] %vm1739, %v1653
      %v1753 = vld [vmem:[%s279 + $0x20] sm:$0xf]
      %v1754 = vsel %vm1735, %v1655, %v1753
      %1755 = vst [vmem:[%s279 + $0x20] sm:$0xf] %v1754
      %1756 = vst.msk [vmem:[%s279 + $0x24] sm:$0xf] %vm1739, %v1657
      %v1757 = vld [vmem:[%s279 + $0x28] sm:$0xf]
      %v1758 = vsel %vm1735, %v1659, %v1757
      %1759 = vst [vmem:[%s279 + $0x28] sm:$0xf] %v1758
      %1760 = vst.msk [vmem:[%s279 + $0x2c] sm:$0xf] %vm1739, %v1661
      %v1761 = vld [vmem:[%s279 + $0x30] sm:$0xf]
      %v1762 = vsel %vm1735, %v1663, %v1761
      %1763 = vst [vmem:[%s279 + $0x30] sm:$0xf] %v1762
      %1764 = vst.msk [vmem:[%s279 + $0x34] sm:$0xf] %vm1739, %v1665
      %v1765 = vld [vmem:[%s279 + $0x38] sm:$0xf]
      %v1766 = vsel %vm1735, %v1667, %v1765
      %1767 = vst [vmem:[%s279 + $0x38] sm:$0xf] %v1766
      %1768 = vst.msk [vmem:[%s279 + $0x3c] sm:$0xf] %vm1739, %v1669
      %v1769 = vld [vmem:[%s279 + $0x40] sm:$0xf]
      %v1770 = vsel %vm1735, %v1671, %v1769
      %1771 = vst [vmem:[%s279 + $0x40] sm:$0xf] %v1770
      %1772 = vst.msk [vmem:[%s279 + $0x44] sm:$0xf] %vm1739, %v1673
      %v1773 = vld [vmem:[%s279 + $0x48] sm:$0xf]
      %v1774 = vsel %vm1735, %v1675, %v1773
      %1775 = vst [vmem:[%s279 + $0x48] sm:$0xf] %v1774
      %1776 = vst.msk [vmem:[%s279 + $0x4c] sm:$0xf] %vm1739, %v1677
      %v1777 = vld [vmem:[%s279 + $0x50] sm:$0xf]
      %v1778 = vsel %vm1735, %v1679, %v1777
      %1779 = vst [vmem:[%s279 + $0x50] sm:$0xf] %v1778
      %1780 = vst.msk [vmem:[%s279 + $0x54] sm:$0xf] %vm1739, %v1681
      %v1781 = vld [vmem:[%s279 + $0x58] sm:$0xf]
      %v1782 = vsel %vm1735, %v1683, %v1781
      %1783 = vst [vmem:[%s279 + $0x58] sm:$0xf] %v1782
      %1784 = vst.msk [vmem:[%s279 + $0x5c] sm:$0xf] %vm1739, %v1685
      %v1785 = vld [vmem:[%s279 + $0x60] sm:$0xf]
      %v1786 = vsel %vm1735, %v1687, %v1785
      %1787 = vst [vmem:[%s279 + $0x60] sm:$0xf] %v1786
      %1788 = vst.msk [vmem:[%s279 + $0x64] sm:$0xf] %vm1739, %v1689
      %v1789 = vld [vmem:[%s279 + $0x68] sm:$0xf]
      %v1790 = vsel %vm1735, %v1691, %v1789
      %1791 = vst [vmem:[%s279 + $0x68] sm:$0xf] %v1790
      %1792 = vst.msk [vmem:[%s279 + $0x6c] sm:$0xf] %vm1739, %v1693
      %v1793 = vld [vmem:[%s279 + $0x70] sm:$0xf]
      %v1794 = vsel %vm1735, %v1695, %v1793
      %1795 = vst [vmem:[%s279 + $0x70] sm:$0xf] %v1794
      %1796 = vst.msk [vmem:[%s279 + $0x74] sm:$0xf] %vm1739, %v1697
      %v1797 = vld [vmem:[%s279 + $0x78] sm:$0xf]
      %v1798 = vsel %vm1735, %v1699, %v1797
      %1799 = vst [vmem:[%s279 + $0x78] sm:$0xf] %v1798
      %1800 = vst.msk [vmem:[%s279 + $0x7c] sm:$0xf] %vm1739, %v1701
      %1833 = vrot.lane.b32.xlu0 %v1350, 12
      %v1834 = vpop.permute.xlu0 %1833
      %1835 = vrot.lane.b32.xlu0 %v1351, 12
      %v1836 = vpop.permute.xlu0 %1835
      %1837 = vrot.lane.b32.xlu0 %v1352, 12
      %v1838 = vpop.permute.xlu0 %1837
      %1839 = vrot.lane.b32.xlu0 %v1353, 12
      %v1840 = vpop.permute.xlu0 %1839
      %1841 = vrot.lane.b32.xlu0 %v1354, 12
      %v1842 = vpop.permute.xlu0 %1841
      %1843 = vrot.lane.b32.xlu0 %v1355, 12
      %v1844 = vpop.permute.xlu0 %1843
      %1845 = vrot.lane.b32.xlu0 %v1356, 12
      %v1846 = vpop.permute.xlu0 %1845
      %1847 = vrot.lane.b32.xlu0 %v1357, 12
      %v1848 = vpop.permute.xlu0 %1847
      %1849 = vrot.lane.b32.xlu0 %v1358, 12
      %v1850 = vpop.permute.xlu0 %1849
      %1851 = vrot.lane.b32.xlu0 %v1359, 12
      %v1852 = vpop.permute.xlu0 %1851
      %1853 = vrot.lane.b32.xlu0 %v1360, 12
      %v1854 = vpop.permute.xlu0 %1853
      %1855 = vrot.lane.b32.xlu0 %v1361, 12
      %v1856 = vpop.permute.xlu0 %1855
      %1857 = vrot.lane.b32.xlu0 %v1362, 12
      %v1858 = vpop.permute.xlu0 %1857
      %1859 = vrot.lane.b32.xlu0 %v1363, 12
      %v1860 = vpop.permute.xlu0 %1859
      %1861 = vrot.lane.b32.xlu0 %v1364, 12
      %v1862 = vpop.permute.xlu0 %1861
      %1863 = vrot.lane.b32.xlu0 %v1365, 12
      %v1864 = vpop.permute.xlu0 %1863
      %1865 = vrot.lane.b32.xlu0 %v1366, 12
      %v1866 = vpop.permute.xlu0 %1865
      %1867 = vrot.lane.b32.xlu0 %v1367, 12
      %v1868 = vpop.permute.xlu0 %1867
      %1869 = vrot.lane.b32.xlu0 %v1368, 12
      %v1870 = vpop.permute.xlu0 %1869
      %1871 = vrot.lane.b32.xlu0 %v1369, 12
      %v1872 = vpop.permute.xlu0 %1871
      %1873 = vrot.lane.b32.xlu0 %v1370, 12
      %v1874 = vpop.permute.xlu0 %1873
      %1875 = vrot.lane.b32.xlu0 %v1371, 12
      %v1876 = vpop.permute.xlu0 %1875
      %1877 = vrot.lane.b32.xlu0 %v1372, 12
      %v1878 = vpop.permute.xlu0 %1877
      %1879 = vrot.lane.b32.xlu0 %v1373, 12
      %v1880 = vpop.permute.xlu0 %1879
      %1881 = vrot.lane.b32.xlu0 %v1374, 12
      %v1882 = vpop.permute.xlu0 %1881
      %1883 = vrot.lane.b32.xlu0 %v1375, 12
      %v1884 = vpop.permute.xlu0 %1883
      %1885 = vrot.lane.b32.xlu0 %v1376, 12
      %v1886 = vpop.permute.xlu0 %1885
      %1887 = vrot.lane.b32.xlu0 %v1377, 12
      %v1888 = vpop.permute.xlu0 %1887
      %1889 = vrot.lane.b32.xlu0 %v1378, 12
      %v1890 = vpop.permute.xlu0 %1889
      %1891 = vrot.lane.b32.xlu0 %v1379, 12
      %v1892 = vpop.permute.xlu0 %1891
      %1893 = vrot.lane.b32.xlu0 %v1380, 12
      %v1894 = vpop.permute.xlu0 %1893
      %1895 = vrot.lane.b32.xlu0 %v1381, 12
      %v1896 = vpop.permute.xlu0 %1895
      %vm1929 = vcmask 126048
      %1930 = vst.msk [vmem:[%s279] sm:$0xf] %vm1929, %v1834
      %1931 = vst.msk [vmem:[%s279 + $0x4] sm:$0xf] %vm1929, %v1836
      %1932 = vst.msk [vmem:[%s279 + $0x8] sm:$0xf] %vm1929, %v1838
      %1933 = vst.msk [vmem:[%s279 + $0xc] sm:$0xf] %vm1929, %v1840
      %1934 = vst.msk [vmem:[%s279 + $0x10] sm:$0xf] %vm1929, %v1842
      %1935 = vst.msk [vmem:[%s279 + $0x14] sm:$0xf] %vm1929, %v1844
      %1936 = vst.msk [vmem:[%s279 + $0x18] sm:$0xf] %vm1929, %v1846
      %1937 = vst.msk [vmem:[%s279 + $0x1c] sm:$0xf] %vm1929, %v1848
      %1938 = vst.msk [vmem:[%s279 + $0x20] sm:$0xf] %vm1929, %v1850
      %1939 = vst.msk [vmem:[%s279 + $0x24] sm:$0xf] %vm1929, %v1852
      %1940 = vst.msk [vmem:[%s279 + $0x28] sm:$0xf] %vm1929, %v1854
      %1941 = vst.msk [vmem:[%s279 + $0x2c] sm:$0xf] %vm1929, %v1856
      %1942 = vst.msk [vmem:[%s279 + $0x30] sm:$0xf] %vm1929, %v1858
      %1943 = vst.msk [vmem:[%s279 + $0x34] sm:$0xf] %vm1929, %v1860
      %1944 = vst.msk [vmem:[%s279 + $0x38] sm:$0xf] %vm1929, %v1862
      %1945 = vst.msk [vmem:[%s279 + $0x3c] sm:$0xf] %vm1929, %v1864
      %1946 = vst.msk [vmem:[%s279 + $0x40] sm:$0xf] %vm1929, %v1866
      %1947 = vst.msk [vmem:[%s279 + $0x44] sm:$0xf] %vm1929, %v1868
      %1948 = vst.msk [vmem:[%s279 + $0x48] sm:$0xf] %vm1929, %v1870
      %1949 = vst.msk [vmem:[%s279 + $0x4c] sm:$0xf] %vm1929, %v1872
      %1950 = vst.msk [vmem:[%s279 + $0x50] sm:$0xf] %vm1929, %v1874
      %1951 = vst.msk [vmem:[%s279 + $0x54] sm:$0xf] %vm1929, %v1876
      %1952 = vst.msk [vmem:[%s279 + $0x58] sm:$0xf] %vm1929, %v1878
      %1953 = vst.msk [vmem:[%s279 + $0x5c] sm:$0xf] %vm1929, %v1880
      %1954 = vst.msk [vmem:[%s279 + $0x60] sm:$0xf] %vm1929, %v1882
      %1955 = vst.msk [vmem:[%s279 + $0x64] sm:$0xf] %vm1929, %v1884
      %1956 = vst.msk [vmem:[%s279 + $0x68] sm:$0xf] %vm1929, %v1886
      %1957 = vst.msk [vmem:[%s279 + $0x6c] sm:$0xf] %vm1929, %v1888
      %1958 = vst.msk [vmem:[%s279 + $0x70] sm:$0xf] %vm1929, %v1890
      %1959 = vst.msk [vmem:[%s279 + $0x74] sm:$0xf] %vm1929, %v1892
      %1960 = vst.msk [vmem:[%s279 + $0x78] sm:$0xf] %vm1929, %v1894
      %1961 = vst.msk [vmem:[%s279 + $0x7c] sm:$0xf] %vm1929, %v1896
      %v1962 = vrot.slane %v1383, 4
      %v1963 = vrot.slane %v1386, 5
      %v1964 = vor.u32 %v1962, %v1963
      %v1965 = vrot.slane %v1964, 4
      %v1966 = vrot.slane %v1394, 5
      %v1967 = vsel %vm1042, %v1965, %v1966
      %v1968 = vrot.slane %v1391, 4
      %v1969 = vor.u32 %v1968, %v1966
      %v1970 = vrot.slane %v1969, 4
      %v1971 = vrot.slane %v1399, 4
      %v1972 = vrot.slane %v1402, 5
      %v1973 = vor.u32 %v1971, %v1972
      %v1974 = vrot.slane %v1973, 4
      %v1975 = vrot.slane %v1410, 5
      %v1976 = vsel %vm1042, %v1974, %v1975
      %v1977 = vrot.slane %v1407, 4
      %v1978 = vor.u32 %v1977, %v1975
      %v1979 = vrot.slane %v1978, 4
      %v1980 = vrot.slane %v1415, 4
      %v1981 = vrot.slane %v1418, 5
      %v1982 = vor.u32 %v1980, %v1981
      %v1983 = vrot.slane %v1982, 4
      %v1984 = vrot.slane %v1426, 5
      %v1985 = vsel %vm1042, %v1983, %v1984
      %v1986 = vrot.slane %v1423, 4
      %v1987 = vor.u32 %v1986, %v1984
      %v1988 = vrot.slane %v1987, 4
      %v1989 = vrot.slane %v1431, 4
      %v1990 = vrot.slane %v1434, 5
      %v1991 = vor.u32 %v1989, %v1990
      %v1992 = vrot.slane %v1991, 4
      %v1993 = vrot.slane %v1442, 5
      %v1994 = vsel %vm1042, %v1992, %v1993
      %v1995 = vrot.slane %v1439, 4
      %v1996 = vor.u32 %v1995, %v1993
      %v1997 = vrot.slane %v1996, 4
      %v1998 = vrot.slane %v1447, 4
      %v1999 = vrot.slane %v1450, 5
      %v2000 = vor.u32 %v1998, %v1999
      %v2001 = vrot.slane %v2000, 4
      %v2002 = vrot.slane %v1458, 5
      %v2003 = vsel %vm1042, %v2001, %v2002
      %v2004 = vrot.slane %v1455, 4
      %v2005 = vor.u32 %v2004, %v2002
      %v2006 = vrot.slane %v2005, 4
      %v2007 = vrot.slane %v1463, 4
      %v2008 = vrot.slane %v1466, 5
      %v2009 = vor.u32 %v2007, %v2008
      %v2010 = vrot.slane %v2009, 4
      %v2011 = vrot.slane %v1474, 5
      %v2012 = vsel %vm1042, %v2010, %v2011
      %v2013 = vrot.slane %v1471, 4
      %v2014 = vor.u32 %v2013, %v2011
      %v2015 = vrot.slane %v2014, 4
      %v2016 = vrot.slane %v1479, 4
      %v2017 = vrot.slane %v1482, 5
      %v2018 = vor.u32 %v2016, %v2017
      %v2019 = vrot.slane %v2018, 4
      %v2020 = vrot.slane %v1490, 5
      %v2021 = vsel %vm1042, %v2019, %v2020
      %v2022 = vrot.slane %v1487, 4
      %v2023 = vor.u32 %v2022, %v2020
      %v2024 = vrot.slane %v2023, 4
      %v2025 = vrot.slane %v1495, 4
      %v2026 = vrot.slane %v1498, 5
      %v2027 = vor.u32 %v2025, %v2026
      %v2028 = vrot.slane %v2027, 4
      %v2029 = vrot.slane %v1506, 5
      %v2030 = vsel %vm1042, %v2028, %v2029
      %v2031 = vrot.slane %v1503, 4
      %v2032 = vor.u32 %v2031, %v2029
      %v2033 = vrot.slane %v2032, 4
      %v2034 = vrot.slane %v1511, 4
      %v2035 = vrot.slane %v1514, 5
      %v2036 = vor.u32 %v2034, %v2035
      %v2037 = vrot.slane %v2036, 4
      %v2038 = vrot.slane %v1522, 5
      %v2039 = vsel %vm1042, %v2037, %v2038
      %v2040 = vrot.slane %v1519, 4
      %v2041 = vor.u32 %v2040, %v2038
      %v2042 = vrot.slane %v2041, 4
      %v2043 = vrot.slane %v1527, 4
      %v2044 = vrot.slane %v1530, 5
      %v2045 = vor.u32 %v2043, %v2044
      %v2046 = vrot.slane %v2045, 4
      %v2047 = vrot.slane %v1538, 5
      %v2048 = vsel %vm1042, %v2046, %v2047
      %v2049 = vrot.slane %v1535, 4
      %v2050 = vor.u32 %v2049, %v2047
      %v2051 = vrot.slane %v2050, 4
      %v2052 = vrot.slane %v1543, 4
      %v2053 = vrot.slane %v1546, 5
      %v2054 = vor.u32 %v2052, %v2053
      %v2055 = vrot.slane %v2054, 4
      %v2056 = vrot.slane %v1554, 5
      %v2057 = vsel %vm1042, %v2055, %v2056
      %v2058 = vrot.slane %v1551, 4
      %v2059 = vor.u32 %v2058, %v2056
      %v2060 = vrot.slane %v2059, 4
      %v2061 = vrot.slane %v1559, 4
      %v2062 = vrot.slane %v1562, 5
      %v2063 = vor.u32 %v2061, %v2062
      %v2064 = vrot.slane %v2063, 4
      %v2065 = vrot.slane %v1570, 5
      %v2066 = vsel %vm1042, %v2064, %v2065
      %v2067 = vrot.slane %v1567, 4
      %v2068 = vor.u32 %v2067, %v2065
      %v2069 = vrot.slane %v2068, 4
      %v2070 = vrot.slane %v1575, 4
      %v2071 = vrot.slane %v1578, 5
      %v2072 = vor.u32 %v2070, %v2071
      %v2073 = vrot.slane %v2072, 4
      %v2074 = vrot.slane %v1586, 5
      %v2075 = vsel %vm1042, %v2073, %v2074
      %v2076 = vrot.slane %v1583, 4
      %v2077 = vor.u32 %v2076, %v2074
      %v2078 = vrot.slane %v2077, 4
      %v2079 = vrot.slane %v1591, 4
      %v2080 = vrot.slane %v1594, 5
      %v2081 = vor.u32 %v2079, %v2080
      %v2082 = vrot.slane %v2081, 4
      %v2083 = vrot.slane %v1602, 5
      %v2084 = vsel %vm1042, %v2082, %v2083
      %v2085 = vrot.slane %v1599, 4
      %v2086 = vor.u32 %v2085, %v2083
      %v2087 = vrot.slane %v2086, 4
      %v2088 = vrot.slane %v1607, 4
      %v2089 = vrot.slane %v1610, 5
      %v2090 = vor.u32 %v2088, %v2089
      %v2091 = vrot.slane %v2090, 4
      %v2092 = vrot.slane %v1618, 5
      %v2093 = vsel %vm1042, %v2091, %v2092
      %v2094 = vrot.slane %v1615, 4
      %v2095 = vor.u32 %v2094, %v2092
      %v2096 = vrot.slane %v2095, 4
      %v2097 = vrot.slane %v1623, 4
      %v2098 = vrot.slane %v1626, 5
      %v2099 = vor.u32 %v2097, %v2098
      %v2100 = vrot.slane %v2099, 4
      %v2101 = vrot.slane %v1634, 5
      %v2102 = vsel %vm1042, %v2100, %v2101
      %v2103 = vrot.slane %v1631, 4
      %v2104 = vor.u32 %v2103, %v2101
      %v2105 = vrot.slane %v2104, 4
      %2106 = vrot.lane.b32.xlu0 %v1967, 20
      %v2107 = vpop.permute.xlu0 %2106
      %2108 = vrot.lane.b32.xlu0 %v1970, 20
      %v2109 = vpop.permute.xlu0 %2108
      %2110 = vrot.lane.b32.xlu0 %v1976, 20
      %v2111 = vpop.permute.xlu0 %2110
      %2112 = vrot.lane.b32.xlu0 %v1979, 20
      %v2113 = vpop.permute.xlu0 %2112
      %2114 = vrot.lane.b32.xlu0 %v1985, 20
      %v2115 = vpop.permute.xlu0 %2114
      %2116 = vrot.lane.b32.xlu0 %v1988, 20
      %v2117 = vpop.permute.xlu0 %2116
      %2118 = vrot.lane.b32.xlu0 %v1994, 20
      %v2119 = vpop.permute.xlu0 %2118
      %2120 = vrot.lane.b32.xlu0 %v1997, 20
      %v2121 = vpop.permute.xlu0 %2120
      %2122 = vrot.lane.b32.xlu0 %v2003, 20
      %v2123 = vpop.permute.xlu0 %2122
      %2124 = vrot.lane.b32.xlu0 %v2006, 20
      %v2125 = vpop.permute.xlu0 %2124
      %2126 = vrot.lane.b32.xlu0 %v2012, 20
      %v2127 = vpop.permute.xlu0 %2126
      %2128 = vrot.lane.b32.xlu0 %v2015, 20
      %v2129 = vpop.permute.xlu0 %2128
      %2130 = vrot.lane.b32.xlu0 %v2021, 20
      %v2131 = vpop.permute.xlu0 %2130
      %2132 = vrot.lane.b32.xlu0 %v2024, 20
      %v2133 = vpop.permute.xlu0 %2132
      %2134 = vrot.lane.b32.xlu0 %v2030, 20
      %v2135 = vpop.permute.xlu0 %2134
      %2136 = vrot.lane.b32.xlu0 %v2033, 20
      %v2137 = vpop.permute.xlu0 %2136
      %2138 = vrot.lane.b32.xlu0 %v2039, 20
      %v2139 = vpop.permute.xlu0 %2138
      %2140 = vrot.lane.b32.xlu0 %v2042, 20
      %v2141 = vpop.permute.xlu0 %2140
      %2142 = vrot.lane.b32.xlu0 %v2048, 20
      %v2143 = vpop.permute.xlu0 %2142
      %2144 = vrot.lane.b32.xlu0 %v2051, 20
      %v2145 = vpop.permute.xlu0 %2144
      %2146 = vrot.lane.b32.xlu0 %v2057, 20
      %v2147 = vpop.permute.xlu0 %2146
      %2148 = vrot.lane.b32.xlu0 %v2060, 20
      %v2149 = vpop.permute.xlu0 %2148
      %2150 = vrot.lane.b32.xlu0 %v2066, 20
      %v2151 = vpop.permute.xlu0 %2150
      %2152 = vrot.lane.b32.xlu0 %v2069, 20
      %v2153 = vpop.permute.xlu0 %2152
      %2154 = vrot.lane.b32.xlu0 %v2075, 20
      %v2155 = vpop.permute.xlu0 %2154
      %2156 = vrot.lane.b32.xlu0 %v2078, 20
      %v2157 = vpop.permute.xlu0 %2156
      %2158 = vrot.lane.b32.xlu0 %v2084, 20
      %v2159 = vpop.permute.xlu0 %2158
      %2160 = vrot.lane.b32.xlu0 %v2087, 20
      %v2161 = vpop.permute.xlu0 %2160
      %2162 = vrot.lane.b32.xlu0 %v2093, 20
      %v2163 = vpop.permute.xlu0 %2162
      %2164 = vrot.lane.b32.xlu0 %v2096, 20
      %v2165 = vpop.permute.xlu0 %2164
      %2166 = vrot.lane.b32.xlu0 %v2102, 20
      %v2167 = vpop.permute.xlu0 %2166
      %2168 = vrot.lane.b32.xlu0 %v2105, 20
      %v2169 = vpop.permute.xlu0 %2168
      %vm2202 = vcmask 191648
      %2203 = vst.msk [vmem:[%s279] sm:$0xf] %vm2202, %v2107
      %vm2204 = vcmask 191648
      %vm2205 = vmand %vm2204, %vm1040
      %v2206 = vld [vmem:[%s279 + $0x4] sm:$0xf]
      %v2207 = vsel %vm2205, %v2109, %v2206
      %2208 = vst [vmem:[%s279 + $0x4] sm:$0xf] %v2207
      %2209 = vst.msk [vmem:[%s279 + $0x8] sm:$0xf] %vm2202, %v2111
      %v2210 = vld [vmem:[%s279 + $0xc] sm:$0xf]
      %v2211 = vsel %vm2205, %v2113, %v2210
      %2212 = vst [vmem:[%s279 + $0xc] sm:$0xf] %v2211
      %2213 = vst.msk [vmem:[%s279 + $0x10] sm:$0xf] %vm2202, %v2115
      %v2214 = vld [vmem:[%s279 + $0x14] sm:$0xf]
      %v2215 = vsel %vm2205, %v2117, %v2214
      %2216 = vst [vmem:[%s279 + $0x14] sm:$0xf] %v2215
      %2217 = vst.msk [vmem:[%s279 + $0x18] sm:$0xf] %vm2202, %v2119
      %v2218 = vld [vmem:[%s279 + $0x1c] sm:$0xf]
      %v2219 = vsel %vm2205, %v2121, %v2218
      %2220 = vst [vmem:[%s279 + $0x1c] sm:$0xf] %v2219
      %2221 = vst.msk [vmem:[%s279 + $0x20] sm:$0xf] %vm2202, %v2123
      %v2222 = vld [vmem:[%s279 + $0x24] sm:$0xf]
      %v2223 = vsel %vm2205, %v2125, %v2222
      %2224 = vst [vmem:[%s279 + $0x24] sm:$0xf] %v2223
      %2225 = vst.msk [vmem:[%s279 + $0x28] sm:$0xf] %vm2202, %v2127
      %v2226 = vld [vmem:[%s279 + $0x2c] sm:$0xf]
      %v2227 = vsel %vm2205, %v2129, %v2226
      %2228 = vst [vmem:[%s279 + $0x2c] sm:$0xf] %v2227
      %2229 = vst.msk [vmem:[%s279 + $0x30] sm:$0xf] %vm2202, %v2131
      %v2230 = vld [vmem:[%s279 + $0x34] sm:$0xf]
      %v2231 = vsel %vm2205, %v2133, %v2230
      %2232 = vst [vmem:[%s279 + $0x34] sm:$0xf] %v2231
      %2233 = vst.msk [vmem:[%s279 + $0x38] sm:$0xf] %vm2202, %v2135
      %v2234 = vld [vmem:[%s279 + $0x3c] sm:$0xf]
      %v2235 = vsel %vm2205, %v2137, %v2234
      %2236 = vst [vmem:[%s279 + $0x3c] sm:$0xf] %v2235
      %2237 = vst.msk [vmem:[%s279 + $0x40] sm:$0xf] %vm2202, %v2139
      %v2238 = vld [vmem:[%s279 + $0x44] sm:$0xf]
      %v2239 = vsel %vm2205, %v2141, %v2238
      %2240 = vst [vmem:[%s279 + $0x44] sm:$0xf] %v2239
      %2241 = vst.msk [vmem:[%s279 + $0x48] sm:$0xf] %vm2202, %v2143
      %v2242 = vld [vmem:[%s279 + $0x4c] sm:$0xf]
      %v2243 = vsel %vm2205, %v2145, %v2242
      %2244 = vst [vmem:[%s279 + $0x4c] sm:$0xf] %v2243
      %2245 = vst.msk [vmem:[%s279 + $0x50] sm:$0xf] %vm2202, %v2147
      %v2246 = vld [vmem:[%s279 + $0x54] sm:$0xf]
      %v2247 = vsel %vm2205, %v2149, %v2246
      %2248 = vst [vmem:[%s279 + $0x54] sm:$0xf] %v2247
      %2249 = vst.msk [vmem:[%s279 + $0x58] sm:$0xf] %vm2202, %v2151
      %v2250 = vld [vmem:[%s279 + $0x5c] sm:$0xf]
      %v2251 = vsel %vm2205, %v2153, %v2250
      %2252 = vst [vmem:[%s279 + $0x5c] sm:$0xf] %v2251
      %2253 = vst.msk [vmem:[%s279 + $0x60] sm:$0xf] %vm2202, %v2155
      %v2254 = vld [vmem:[%s279 + $0x64] sm:$0xf]
      %v2255 = vsel %vm2205, %v2157, %v2254
      %2256 = vst [vmem:[%s279 + $0x64] sm:$0xf] %v2255
      %2257 = vst.msk [vmem:[%s279 + $0x68] sm:$0xf] %vm2202, %v2159
      %v2258 = vld [vmem:[%s279 + $0x6c] sm:$0xf]
      %v2259 = vsel %vm2205, %v2161, %v2258
      %2260 = vst [vmem:[%s279 + $0x6c] sm:$0xf] %v2259
      %2261 = vst.msk [vmem:[%s279 + $0x70] sm:$0xf] %vm2202, %v2163
      %v2262 = vld [vmem:[%s279 + $0x74] sm:$0xf]
      %v2263 = vsel %vm2205, %v2165, %v2262
      %2264 = vst [vmem:[%s279 + $0x74] sm:$0xf] %v2263
      %2265 = vst.msk [vmem:[%s279 + $0x78] sm:$0xf] %vm2202, %v2167
      %v2266 = vld [vmem:[%s279 + $0x7c] sm:$0xf]
      %v2267 = vsel %vm2205, %v2169, %v2266
      %2268 = vst [vmem:[%s279 + $0x7c] sm:$0xf] %v2267
      %v2269 = vld [vmem:[#allocation2] sm:$0xf]
      %v2270 = vld [vmem:[#allocation2 + $0x4] sm:$0xf]
      %v2271 = vld [vmem:[#allocation2 + $0x8] sm:$0xf]
      %v2272 = vld [vmem:[#allocation2 + $0xc] sm:$0xf]
      %v2273 = vld [vmem:[#allocation2 + $0x10] sm:$0xf]
      %v2274 = vld [vmem:[#allocation2 + $0x14] sm:$0xf]
      %v2275 = vld [vmem:[#allocation2 + $0x18] sm:$0xf]
      %v2276 = vld [vmem:[#allocation2 + $0x1c] sm:$0xf]
      %v2277 = vld [vmem:[#allocation2 + $0x20] sm:$0xf]
      %v2278 = vld [vmem:[#allocation2 + $0x24] sm:$0xf]
      %v2279 = vld [vmem:[#allocation2 + $0x28] sm:$0xf]
      %v2280 = vld [vmem:[#allocation2 + $0x2c] sm:$0xf]
      %v2281 = vld [vmem:[#allocation2 + $0x30] sm:$0xf]
      %v2282 = vld [vmem:[#allocation2 + $0x34] sm:$0xf]
      %v2283 = vld [vmem:[#allocation2 + $0x38] sm:$0xf]
      %v2284 = vld [vmem:[#allocation2 + $0x3c] sm:$0xf]
      %v2285 = vld [vmem:[#allocation2 + $0x40] sm:$0xf]
      %v2286 = vld [vmem:[#allocation2 + $0x44] sm:$0xf]
      %v2287 = vld [vmem:[#allocation2 + $0x48] sm:$0xf]
      %v2288 = vld [vmem:[#allocation2 + $0x4c] sm:$0xf]
      %v2289 = vld [vmem:[#allocation2 + $0x50] sm:$0xf]
      %v2290 = vld [vmem:[#allocation2 + $0x54] sm:$0xf]
      %v2291 = vld [vmem:[#allocation2 + $0x58] sm:$0xf]
      %v2292 = vld [vmem:[#allocation2 + $0x5c] sm:$0xf]
      %v2293 = vld [vmem:[#allocation2 + $0x60] sm:$0xf]
      %v2294 = vld [vmem:[#allocation2 + $0x64] sm:$0xf]
      %v2295 = vld [vmem:[#allocation2 + $0x68] sm:$0xf]
      %v2296 = vld [vmem:[#allocation2 + $0x6c] sm:$0xf]
      %v2297 = vld [vmem:[#allocation2 + $0x70] sm:$0xf]
      %v2298 = vld [vmem:[#allocation2 + $0x74] sm:$0xf]
      %v2299 = vld [vmem:[#allocation2 + $0x78] sm:$0xf]
      %v2300 = vld [vmem:[#allocation2 + $0x7c] sm:$0xf]
      %v2301 = vld [vmem:[%s2] sm:$0xf]
      %v2302 = vld [vmem:[%s2 + $0x4] sm:$0xf]
      %v2303 = vld [vmem:[%s2 + $0x8] sm:$0xf]
      %v2304 = vld [vmem:[%s279] sm:$0xf]
      %v2305 = vld [vmem:[%s279 + $0x4] sm:$0xf]
      %v2306 = vld [vmem:[%s279 + $0x8] sm:$0xf]
      %v2307 = vld [vmem:[%s279 + $0xc] sm:$0xf]
      %v2308 = vld [vmem:[%s279 + $0x10] sm:$0xf]
      %v2309 = vld [vmem:[%s279 + $0x14] sm:$0xf]
      %v2310 = vld [vmem:[%s279 + $0x18] sm:$0xf]
      %v2311 = vld [vmem:[%s279 + $0x1c] sm:$0xf]
      %v2312 = vld [vmem:[%s279 + $0x20] sm:$0xf]
      %v2313 = vld [vmem:[%s279 + $0x24] sm:$0xf]
      %v2314 = vld [vmem:[%s279 + $0x28] sm:$0xf]
      %v2315 = vld [vmem:[%s279 + $0x2c] sm:$0xf]
      %v2316 = vld [vmem:[%s279 + $0x30] sm:$0xf]
      %v2317 = vld [vmem:[%s279 + $0x34] sm:$0xf]
      %v2318 = vld [vmem:[%s279 + $0x38] sm:$0xf]
      %v2319 = vld [vmem:[%s279 + $0x3c] sm:$0xf]
      %v2320 = vld [vmem:[%s279 + $0x40] sm:$0xf]
      %v2321 = vld [vmem:[%s279 + $0x44] sm:$0xf]
      %v2322 = vld [vmem:[%s279 + $0x48] sm:$0xf]
      %v2323 = vld [vmem:[%s279 + $0x4c] sm:$0xf]
      %v2324 = vld [vmem:[%s279 + $0x50] sm:$0xf]
      %v2325 = vld [vmem:[%s279 + $0x54] sm:$0xf]
      %v2326 = vld [vmem:[%s279 + $0x58] sm:$0xf]
      %v2327 = vld [vmem:[%s279 + $0x5c] sm:$0xf]
      %v2328 = vld [vmem:[%s279 + $0x60] sm:$0xf]
      %v2329 = vld [vmem:[%s279 + $0x64] sm:$0xf]
      %v2330 = vld [vmem:[%s279 + $0x68] sm:$0xf]
      %v2331 = vld [vmem:[%s279 + $0x6c] sm:$0xf]
      %v2332 = vld [vmem:[%s279 + $0x70] sm:$0xf]
      %v2333 = vld [vmem:[%s279 + $0x74] sm:$0xf]
      %v2334 = vld [vmem:[%s279 + $0x78] sm:$0xf]
      %v2335 = vld [vmem:[%s279 + $0x7c] sm:$0xf]
      %s2336 = scalar_lea.vmem %s2, 12
      %v2337 = vld [vmem:[%s2336] sm:$0xf]
      %v2338 = vld [vmem:[%s2336 + $0x4] sm:$0xf]
      %v2339 = vld [vmem:[%s2336 + $0x8] sm:$0xf]
      %v2372 = vunpack.c.l.b16 %v2304
      %v2373 = vunpack.c.l.b16 %v2305
      %v2374 = vunpack.c.l.b16 %v2306
      %v2375 = vunpack.c.l.b16 %v2307
      %v2376 = vunpack.c.l.b16 %v2308
      %v2377 = vunpack.c.l.b16 %v2309
      %v2378 = vunpack.c.l.b16 %v2310
      %v2379 = vunpack.c.l.b16 %v2311
      %v2380 = vunpack.c.l.b16 %v2312
      %v2381 = vunpack.c.l.b16 %v2313
      %v2382 = vunpack.c.l.b16 %v2314
      %v2383 = vunpack.c.l.b16 %v2315
      %v2384 = vunpack.c.l.b16 %v2316
      %v2385 = vunpack.c.l.b16 %v2317
      %v2386 = vunpack.c.l.b16 %v2318
      %v2387 = vunpack.c.l.b16 %v2319
      %v2388 = vunpack.c.l.b16 %v2320
      %v2389 = vunpack.c.l.b16 %v2321
      %v2390 = vunpack.c.l.b16 %v2322
      %v2391 = vunpack.c.l.b16 %v2323
      %v2392 = vunpack.c.l.b16 %v2324
      %v2393 = vunpack.c.l.b16 %v2325
      %v2394 = vunpack.c.l.b16 %v2326
      %v2395 = vunpack.c.l.b16 %v2327
      %v2396 = vunpack.c.l.b16 %v2328
      %v2397 = vunpack.c.l.b16 %v2329
      %v2398 = vunpack.c.l.b16 %v2330
      %v2399 = vunpack.c.l.b16 %v2331
      %v2400 = vunpack.c.l.b16 %v2332
      %v2401 = vunpack.c.l.b16 %v2333
      %v2402 = vunpack.c.l.b16 %v2334
      %v2403 = vunpack.c.l.b16 %v2335
      %v2404 = vpack.c.b16 %v2373, %v2372
      %v2405 = vpack.c.b16 %v2375, %v2374
      %v2406 = vpack.c.b16 %v2377, %v2376
      %v2407 = vpack.c.b16 %v2379, %v2378
      %v2408 = vpack.c.b16 %v2381, %v2380
      %v2409 = vpack.c.b16 %v2383, %v2382
      %v2410 = vpack.c.b16 %v2385, %v2384
      %v2411 = vpack.c.b16 %v2387, %v2386
      %v2412 = vpack.c.b16 %v2389, %v2388
      %v2413 = vpack.c.b16 %v2391, %v2390
      %v2414 = vpack.c.b16 %v2393, %v2392
      %v2415 = vpack.c.b16 %v2395, %v2394
      %v2416 = vpack.c.b16 %v2397, %v2396
      %v2417 = vpack.c.b16 %v2399, %v2398
      %v2418 = vpack.c.b16 %v2401, %v2400
      %v2419 = vpack.c.b16 %v2403, %v2402
      %v2423 = vunpack.c.l.b16 %v2337
      %v2424 = vunpack.c.l.b16 %v2338
      %v2425 = vunpack.c.l.b16 %v2339
      %v2426 = vpack.c.b16 %v2424, %v2423
      %v2427 = vpack.c.b16 %v2425, %v2425
      %vm2429 = vcmask 195584
      %v2431 = vsel %vm2429, %v2404, 0
      %v2434 = vsel %vm2429, %v2405, 0
      %v2437 = vsel %vm2429, %v2406, 0
      %v2440 = vsel %vm2429, %v2407, 0
      %v2443 = vsel %vm2429, %v2408, 0
      %v2446 = vsel %vm2429, %v2409, 0
      %v2449 = vsel %vm2429, %v2410, 0
      %v2452 = vsel %vm2429, %v2411, 0
      %v2455 = vsel %vm2429, %v2412, 0
      %v2458 = vsel %vm2429, %v2413, 0
      %v2461 = vsel %vm2429, %v2414, 0
      %v2464 = vsel %vm2429, %v2415, 0
      %v2467 = vsel %vm2429, %v2416, 0
      %v2470 = vsel %vm2429, %v2417, 0
      %v2473 = vsel %vm2429, %v2418, 0
      %v2476 = vsel %vm2429, %v2419, 0
      %vm2478 = vcmask 1043456
      %v2480 = vsel %vm2478, %v2427, 0
      %2482 = vmatpush.bf16.msra.mxu0 0
      %2483 = vmatpush.bf16.msra.mxu0 0
      %2484 = vmatpush.bf16.msra.mxu0 0
      %2485 = vmatpush.bf16.msra.mxu0 0
      %2486 = vmatpush.bf16.msra.mxu0 0
      %2487 = vmatpush.bf16.msra.mxu0 0
      %2488 = vmatpush.bf16.msra.mxu0 %v2480
      %2489 = vmatpush.bf16.msra.mxu0 %v2426
      %2490 = vmatmul.bf16.gmra.mxu0 %v2431
      %v2491 = vpop.f32.mrf.mxu0
      %v2492 = vadd.f32 0.0, %v2491
      %v2493 = vpop.f32.mrf.mxu0
      %v2494 = vadd.f32 0.0, %v2493
      %2495 = vmatmul.bf16.gmra.mxu0 %v2434
      %v2496 = vpop.f32.mrf.mxu0
      %v2497 = vadd.f32 0.0, %v2496
      %v2498 = vpop.f32.mrf.mxu0
      %v2499 = vadd.f32 0.0, %v2498
      %2500 = vmatmul.bf16.gmra.mxu0 %v2437
      %v2501 = vpop.f32.mrf.mxu0
      %v2502 = vadd.f32 0.0, %v2501
      %v2503 = vpop.f32.mrf.mxu0
      %v2504 = vadd.f32 0.0, %v2503
      %2505 = vmatmul.bf16.gmra.mxu0 %v2440
      %v2506 = vpop.f32.mrf.mxu0
      %v2507 = vadd.f32 0.0, %v2506
      %v2508 = vpop.f32.mrf.mxu0
      %v2509 = vadd.f32 0.0, %v2508
      %2510 = vmatmul.bf16.gmra.mxu0 %v2443
      %v2511 = vpop.f32.mrf.mxu0
      %v2512 = vadd.f32 0.0, %v2511
      %v2513 = vpop.f32.mrf.mxu0
      %v2514 = vadd.f32 0.0, %v2513
      %2515 = vmatmul.bf16.gmra.mxu0 %v2446
      %v2516 = vpop.f32.mrf.mxu0
      %v2517 = vadd.f32 0.0, %v2516
      %v2518 = vpop.f32.mrf.mxu0
      %v2519 = vadd.f32 0.0, %v2518
      %2520 = vmatmul.bf16.gmra.mxu0 %v2449
      %v2521 = vpop.f32.mrf.mxu0
      %v2522 = vadd.f32 0.0, %v2521
      %v2523 = vpop.f32.mrf.mxu0
      %v2524 = vadd.f32 0.0, %v2523
      %2525 = vmatmul.bf16.gmra.mxu0 %v2452
      %v2526 = vpop.f32.mrf.mxu0
      %v2527 = vadd.f32 0.0, %v2526
      %v2528 = vpop.f32.mrf.mxu0
      %v2529 = vadd.f32 0.0, %v2528
      %2530 = vmatmul.bf16.gmra.mxu0 %v2455
      %v2531 = vpop.f32.mrf.mxu0
      %v2532 = vadd.f32 0.0, %v2531
      %v2533 = vpop.f32.mrf.mxu0
      %v2534 = vadd.f32 0.0, %v2533
      %2535 = vmatmul.bf16.gmra.mxu0 %v2458
      %v2536 = vpop.f32.mrf.mxu0
      %v2537 = vadd.f32 0.0, %v2536
      %v2538 = vpop.f32.mrf.mxu0
      %v2539 = vadd.f32 0.0, %v2538
      %2540 = vmatmul.bf16.gmra.mxu0 %v2461
      %v2541 = vpop.f32.mrf.mxu0
      %v2542 = vadd.f32 0.0, %v2541
      %v2543 = vpop.f32.mrf.mxu0
      %v2544 = vadd.f32 0.0, %v2543
      %2545 = vmatmul.bf16.gmra.mxu0 %v2464
      %v2546 = vpop.f32.mrf.mxu0
      %v2547 = vadd.f32 0.0, %v2546
      %v2548 = vpop.f32.mrf.mxu0
      %v2549 = vadd.f32 0.0, %v2548
      %2550 = vmatmul.bf16.gmra.mxu0 %v2467
      %v2551 = vpop.f32.mrf.mxu0
      %v2552 = vadd.f32 0.0, %v2551
      %v2553 = vpop.f32.mrf.mxu0
      %v2554 = vadd.f32 0.0, %v2553
      %2555 = vmatmul.bf16.gmra.mxu0 %v2470
      %v2556 = vpop.f32.mrf.mxu0
      %v2557 = vadd.f32 0.0, %v2556
      %v2558 = vpop.f32.mrf.mxu0
      %v2559 = vadd.f32 0.0, %v2558
      %2560 = vmatmul.bf16.gmra.mxu0 %v2473
      %v2561 = vpop.f32.mrf.mxu0
      %v2562 = vadd.f32 0.0, %v2561
      %v2563 = vpop.f32.mrf.mxu0
      %v2564 = vadd.f32 0.0, %v2563
      %2565 = vmatmul.bf16.gmra.mxu0 %v2476
      %v2566 = vpop.f32.mrf.mxu0
      %v2567 = vadd.f32 0.0, %v2566
      %v2568 = vpop.f32.mrf.mxu0
      %v2569 = vadd.f32 0.0, %v2568
      %2570 = vdwg.mxu0
      %v2603 = vunpack.c.l.b16 %v2269
      %v2604 = vunpack.c.l.b16 %v2270
      %v2605 = vunpack.c.l.b16 %v2271
      %v2606 = vunpack.c.l.b16 %v2272
      %v2607 = vunpack.c.l.b16 %v2273
      %v2608 = vunpack.c.l.b16 %v2274
      %v2609 = vunpack.c.l.b16 %v2275
      %v2610 = vunpack.c.l.b16 %v2276
      %v2611 = vunpack.c.l.b16 %v2277
      %v2612 = vunpack.c.l.b16 %v2278
      %v2613 = vunpack.c.l.b16 %v2279
      %v2614 = vunpack.c.l.b16 %v2280
      %v2615 = vunpack.c.l.b16 %v2281
      %v2616 = vunpack.c.l.b16 %v2282
      %v2617 = vunpack.c.l.b16 %v2283
      %v2618 = vunpack.c.l.b16 %v2284
      %v2619 = vunpack.c.l.b16 %v2285
      %v2620 = vunpack.c.l.b16 %v2286
      %v2621 = vunpack.c.l.b16 %v2287
      %v2622 = vunpack.c.l.b16 %v2288
      %v2623 = vunpack.c.l.b16 %v2289
      %v2624 = vunpack.c.l.b16 %v2290
      %v2625 = vunpack.c.l.b16 %v2291
      %v2626 = vunpack.c.l.b16 %v2292
      %v2627 = vunpack.c.l.b16 %v2293
      %v2628 = vunpack.c.l.b16 %v2294
      %v2629 = vunpack.c.l.b16 %v2295
      %v2630 = vunpack.c.l.b16 %v2296
      %v2631 = vunpack.c.l.b16 %v2297
      %v2632 = vunpack.c.l.b16 %v2298
      %v2633 = vunpack.c.l.b16 %v2299
      %v2634 = vunpack.c.l.b16 %v2300
      %v2635 = vpack.c.b16 %v2604, %v2603
      %v2636 = vpack.c.b16 %v2606, %v2605
      %v2637 = vpack.c.b16 %v2608, %v2607
      %v2638 = vpack.c.b16 %v2610, %v2609
      %v2639 = vpack.c.b16 %v2612, %v2611
      %v2640 = vpack.c.b16 %v2614, %v2613
      %v2641 = vpack.c.b16 %v2616, %v2615
      %v2642 = vpack.c.b16 %v2618, %v2617
      %v2643 = vpack.c.b16 %v2620, %v2619
      %v2644 = vpack.c.b16 %v2622, %v2621
      %v2645 = vpack.c.b16 %v2624, %v2623
      %v2646 = vpack.c.b16 %v2626, %v2625
      %v2647 = vpack.c.b16 %v2628, %v2627
      %v2648 = vpack.c.b16 %v2630, %v2629
      %v2649 = vpack.c.b16 %v2632, %v2631
      %v2650 = vpack.c.b16 %v2634, %v2633
      %v2654 = vunpack.c.l.b16 %v2301
      %v2655 = vunpack.c.l.b16 %v2302
      %v2656 = vunpack.c.l.b16 %v2303
      %v2657 = vpack.c.b16 %v2655, %v2654
      %v2658 = vpack.c.b16 %v2656, %v2656
      %v2661 = vsel %vm2429, %v2635, 0
      %v2664 = vsel %vm2429, %v2636, 0
      %v2667 = vsel %vm2429, %v2637, 0
      %v2670 = vsel %vm2429, %v2638, 0
      %v2673 = vsel %vm2429, %v2639, 0
      %v2676 = vsel %vm2429, %v2640, 0
      %v2679 = vsel %vm2429, %v2641, 0
      %v2682 = vsel %vm2429, %v2642, 0
      %v2685 = vsel %vm2429, %v2643, 0
      %v2688 = vsel %vm2429, %v2644, 0
      %v2691 = vsel %vm2429, %v2645, 0
      %v2694 = vsel %vm2429, %v2646, 0
      %v2697 = vsel %vm2429, %v2647, 0
      %v2700 = vsel %vm2429, %v2648, 0
      %v2703 = vsel %vm2429, %v2649, 0
      %v2706 = vsel %vm2429, %v2650, 0
      %v2709 = vsel %vm2478, %v2658, 0
      %2711 = vmatpush.bf16.msra.mxu0 0
      %2712 = vmatpush.bf16.msra.mxu0 0
      %2713 = vmatpush.bf16.msra.mxu0 0
      %2714 = vmatpush.bf16.msra.mxu0 0
      %2715 = vmatpush.bf16.msra.mxu0 0
      %2716 = vmatpush.bf16.msra.mxu0 0
      %2717 = vmatpush.bf16.msra.mxu0 %v2709
      %2718 = vmatpush.bf16.msra.mxu0 %v2657
      %2719 = vmatmul.bf16.gmra.mxu0 %v2661
      %v2720 = vpop.f32.mrf.mxu0
      %v2721 = vadd.f32 %v2492, %v2720
      %v2722 = vpop.f32.mrf.mxu0
      %v2723 = vadd.f32 %v2494, %v2722
      %2724 = vmatmul.bf16.gmra.mxu0 %v2664
      %v2725 = vpop.f32.mrf.mxu0
      %v2726 = vadd.f32 %v2497, %v2725
      %v2727 = vpop.f32.mrf.mxu0
      %v2728 = vadd.f32 %v2499, %v2727
      %2729 = vmatmul.bf16.gmra.mxu0 %v2667
      %v2730 = vpop.f32.mrf.mxu0
      %v2731 = vadd.f32 %v2502, %v2730
      %v2732 = vpop.f32.mrf.mxu0
      %v2733 = vadd.f32 %v2504, %v2732
      %2734 = vmatmul.bf16.gmra.mxu0 %v2670
      %v2735 = vpop.f32.mrf.mxu0
      %v2736 = vadd.f32 %v2507, %v2735
      %v2737 = vpop.f32.mrf.mxu0
      %v2738 = vadd.f32 %v2509, %v2737
      %2739 = vmatmul.bf16.gmra.mxu0 %v2673
      %v2740 = vpop.f32.mrf.mxu0
      %v2741 = vadd.f32 %v2512, %v2740
      %v2742 = vpop.f32.mrf.mxu0
      %v2743 = vadd.f32 %v2514, %v2742
      %2744 = vmatmul.bf16.gmra.mxu0 %v2676
      %v2745 = vpop.f32.mrf.mxu0
      %v2746 = vadd.f32 %v2517, %v2745
      %v2747 = vpop.f32.mrf.mxu0
      %v2748 = vadd.f32 %v2519, %v2747
      %2749 = vmatmul.bf16.gmra.mxu0 %v2679
      %v2750 = vpop.f32.mrf.mxu0
      %v2751 = vadd.f32 %v2522, %v2750
      %v2752 = vpop.f32.mrf.mxu0
      %v2753 = vadd.f32 %v2524, %v2752
      %2754 = vmatmul.bf16.gmra.mxu0 %v2682
      %v2755 = vpop.f32.mrf.mxu0
      %v2756 = vadd.f32 %v2527, %v2755
      %v2757 = vpop.f32.mrf.mxu0
      %v2758 = vadd.f32 %v2529, %v2757
      %2759 = vmatmul.bf16.gmra.mxu0 %v2685
      %v2760 = vpop.f32.mrf.mxu0
      %v2761 = vadd.f32 %v2532, %v2760
      %v2762 = vpop.f32.mrf.mxu0
      %v2763 = vadd.f32 %v2534, %v2762
      %2764 = vmatmul.bf16.gmra.mxu0 %v2688
      %v2765 = vpop.f32.mrf.mxu0
      %v2766 = vadd.f32 %v2537, %v2765
      %v2767 = vpop.f32.mrf.mxu0
      %v2768 = vadd.f32 %v2539, %v2767
      %2769 = vmatmul.bf16.gmra.mxu0 %v2691
      %v2770 = vpop.f32.mrf.mxu0
      %v2771 = vadd.f32 %v2542, %v2770
      %v2772 = vpop.f32.mrf.mxu0
      %v2773 = vadd.f32 %v2544, %v2772
      %2774 = vmatmul.bf16.gmra.mxu0 %v2694
      %v2775 = vpop.f32.mrf.mxu0
      %v2776 = vadd.f32 %v2547, %v2775
      %v2777 = vpop.f32.mrf.mxu0
      %v2778 = vadd.f32 %v2549, %v2777
      %2779 = vmatmul.bf16.gmra.mxu0 %v2697
      %v2780 = vpop.f32.mrf.mxu0
      %v2781 = vadd.f32 %v2552, %v2780
      %v2782 = vpop.f32.mrf.mxu0
      %v2783 = vadd.f32 %v2554, %v2782
      %2784 = vmatmul.bf16.gmra.mxu0 %v2700
      %v2785 = vpop.f32.mrf.mxu0
      %v2786 = vadd.f32 %v2557, %v2785
      %v2787 = vpop.f32.mrf.mxu0
      %v2788 = vadd.f32 %v2559, %v2787
      %2789 = vmatmul.bf16.gmra.mxu0 %v2703
      %v2790 = vpop.f32.mrf.mxu0
      %v2791 = vadd.f32 %v2562, %v2790
      %v2792 = vpop.f32.mrf.mxu0
      %v2793 = vadd.f32 %v2564, %v2792
      %2794 = vmatmul.bf16.gmra.mxu0 %v2706
      %v2795 = vpop.f32.mrf.mxu0
      %v2796 = vadd.f32 %v2567, %v2795
      %v2797 = vpop.f32.mrf.mxu0
      %v2798 = vadd.f32 %v2569, %v2797
      %2799 = vdwg.mxu0
      %s2800 = scalar_lea.vmem [#allocation2], 16
      %v2801 = vld [vmem:[%s2800] sm:$0xf]
      %v2802 = vld [vmem:[%s2800 + $0x4] sm:$0xf]
      %v2803 = vld [vmem:[%s2800 + $0x8] sm:$0xf]
      %v2804 = vld [vmem:[%s2800 + $0xc] sm:$0xf]
      %v2805 = vld [vmem:[%s2800 + $0x10] sm:$0xf]
      %v2806 = vld [vmem:[%s2800 + $0x14] sm:$0xf]
      %v2807 = vld [vmem:[%s2800 + $0x18] sm:$0xf]
      %v2808 = vld [vmem:[%s2800 + $0x1c] sm:$0xf]
      %v2809 = vld [vmem:[%s2800 + $0x20] sm:$0xf]
      %v2810 = vld [vmem:[%s2800 + $0x24] sm:$0xf]
      %v2811 = vld [vmem:[%s2800 + $0x28] sm:$0xf]
      %v2812 = vld [vmem:[%s2800 + $0x2c] sm:$0xf]
      %v2813 = vld [vmem:[%s2800 + $0x30] sm:$0xf]
      %v2814 = vld [vmem:[%s2800 + $0x34] sm:$0xf]
      %v2815 = vld [vmem:[%s2800 + $0x38] sm:$0xf]
      %v2816 = vld [vmem:[%s2800 + $0x3c] sm:$0xf]
      %v2817 = vld [vmem:[%s2800 + $0x40] sm:$0xf]
      %v2818 = vld [vmem:[%s2800 + $0x44] sm:$0xf]
      %v2819 = vld [vmem:[%s2800 + $0x48] sm:$0xf]
      %v2820 = vld [vmem:[%s2800 + $0x4c] sm:$0xf]
      %v2821 = vld [vmem:[%s2800 + $0x50] sm:$0xf]
      %v2822 = vld [vmem:[%s2800 + $0x54] sm:$0xf]
      %v2823 = vld [vmem:[%s2800 + $0x58] sm:$0xf]
      %v2824 = vld [vmem:[%s2800 + $0x5c] sm:$0xf]
      %v2825 = vld [vmem:[%s2800 + $0x60] sm:$0xf]
      %v2826 = vld [vmem:[%s2800 + $0x64] sm:$0xf]
      %v2827 = vld [vmem:[%s2800 + $0x68] sm:$0xf]
      %v2828 = vld [vmem:[%s2800 + $0x6c] sm:$0xf]
      %v2829 = vld [vmem:[%s2800 + $0x70] sm:$0xf]
      %v2830 = vld [vmem:[%s2800 + $0x74] sm:$0xf]
      %v2831 = vld [vmem:[%s2800 + $0x78] sm:$0xf]
      %v2832 = vld [vmem:[%s2800 + $0x7c] sm:$0xf]
      %s2833 = scalar_lea.vmem %s2, 24
      %v2834 = vld [vmem:[%s2833] sm:$0xf]
      %v2835 = vld [vmem:[%s2833 + $0x4] sm:$0xf]
      %v2836 = vld [vmem:[%s2833 + $0x8] sm:$0xf]
      %v2869 = vunpack.c.l.b16 %v2801
      %v2870 = vunpack.c.l.b16 %v2802
      %v2871 = vunpack.c.l.b16 %v2803
      %v2872 = vunpack.c.l.b16 %v2804
      %v2873 = vunpack.c.l.b16 %v2805
      %v2874 = vunpack.c.l.b16 %v2806
      %v2875 = vunpack.c.l.b16 %v2807
      %v2876 = vunpack.c.l.b16 %v2808
      %v2877 = vunpack.c.l.b16 %v2809
      %v2878 = vunpack.c.l.b16 %v2810
      %v2879 = vunpack.c.l.b16 %v2811
      %v2880 = vunpack.c.l.b16 %v2812
      %v2881 = vunpack.c.l.b16 %v2813
      %v2882 = vunpack.c.l.b16 %v2814
      %v2883 = vunpack.c.l.b16 %v2815
      %v2884 = vunpack.c.l.b16 %v2816
      %v2885 = vunpack.c.l.b16 %v2817
      %v2886 = vunpack.c.l.b16 %v2818
      %v2887 = vunpack.c.l.b16 %v2819
      %v2888 = vunpack.c.l.b16 %v2820
      %v2889 = vunpack.c.l.b16 %v2821
      %v2890 = vunpack.c.l.b16 %v2822
      %v2891 = vunpack.c.l.b16 %v2823
      %v2892 = vunpack.c.l.b16 %v2824
      %v2893 = vunpack.c.l.b16 %v2825
      %v2894 = vunpack.c.l.b16 %v2826
      %v2895 = vunpack.c.l.b16 %v2827
      %v2896 = vunpack.c.l.b16 %v2828
      %v2897 = vunpack.c.l.b16 %v2829
      %v2898 = vunpack.c.l.b16 %v2830
      %v2899 = vunpack.c.l.b16 %v2831
      %v2900 = vunpack.c.l.b16 %v2832
      %v2901 = vpack.c.b16 %v2870, %v2869
      %v2902 = vpack.c.b16 %v2872, %v2871
      %v2903 = vpack.c.b16 %v2874, %v2873
      %v2904 = vpack.c.b16 %v2876, %v2875
      %v2905 = vpack.c.b16 %v2878, %v2877
      %v2906 = vpack.c.b16 %v2880, %v2879
      %v2907 = vpack.c.b16 %v2882, %v2881
      %v2908 = vpack.c.b16 %v2884, %v2883
      %v2909 = vpack.c.b16 %v2886, %v2885
      %v2910 = vpack.c.b16 %v2888, %v2887
      %v2911 = vpack.c.b16 %v2890, %v2889
      %v2912 = vpack.c.b16 %v2892, %v2891
      %v2913 = vpack.c.b16 %v2894, %v2893
      %v2914 = vpack.c.b16 %v2896, %v2895
      %v2915 = vpack.c.b16 %v2898, %v2897
      %v2916 = vpack.c.b16 %v2900, %v2899
      %v2920 = vunpack.c.l.b16 %v2834
      %v2921 = vunpack.c.l.b16 %v2835
      %v2922 = vunpack.c.l.b16 %v2836
      %v2923 = vpack.c.b16 %v2921, %v2920
      %v2924 = vpack.c.b16 %v2922, %v2922
      %v2927 = vsel %vm2429, %v2901, 0
      %v2930 = vsel %vm2429, %v2902, 0
      %v2933 = vsel %vm2429, %v2903, 0
      %v2936 = vsel %vm2429, %v2904, 0
      %v2939 = vsel %vm2429, %v2905, 0
      %v2942 = vsel %vm2429, %v2906, 0
      %v2945 = vsel %vm2429, %v2907, 0
      %v2948 = vsel %vm2429, %v2908, 0
      %v2951 = vsel %vm2429, %v2909, 0
      %v2954 = vsel %vm2429, %v2910, 0
      %v2957 = vsel %vm2429, %v2911, 0
      %v2960 = vsel %vm2429, %v2912, 0
      %v2963 = vsel %vm2429, %v2913, 0
      %v2966 = vsel %vm2429, %v2914, 0
      %v2969 = vsel %vm2429, %v2915, 0
      %v2972 = vsel %vm2429, %v2916, 0
      %v2975 = vsel %vm2478, %v2924, 0
      %2977 = vmatpush.bf16.msra.mxu0 0
      %2978 = vmatpush.bf16.msra.mxu0 0
      %2979 = vmatpush.bf16.msra.mxu0 0
      %2980 = vmatpush.bf16.msra.mxu0 0
      %2981 = vmatpush.bf16.msra.mxu0 0
      %2982 = vmatpush.bf16.msra.mxu0 0
      %2983 = vmatpush.bf16.msra.mxu0 %v2975
      %2984 = vmatpush.bf16.msra.mxu0 %v2923
      %2985 = vmatmul.bf16.gmra.mxu0 %v2927
      %v2986 = vpop.f32.mrf.mxu0
      %v2987 = vadd.f32 0.0, %v2986
      %v2988 = vpop.f32.mrf.mxu0
      %v2989 = vadd.f32 0.0, %v2988
      %2990 = vmatmul.bf16.gmra.mxu0 %v2930
      %v2991 = vpop.f32.mrf.mxu0
      %v2992 = vadd.f32 0.0, %v2991
      %v2993 = vpop.f32.mrf.mxu0
      %v2994 = vadd.f32 0.0, %v2993
      %2995 = vmatmul.bf16.gmra.mxu0 %v2933
      %v2996 = vpop.f32.mrf.mxu0
      %v2997 = vadd.f32 0.0, %v2996
      %v2998 = vpop.f32.mrf.mxu0
      %v2999 = vadd.f32 0.0, %v2998
      %3000 = vmatmul.bf16.gmra.mxu0 %v2936
      %v3001 = vpop.f32.mrf.mxu0
      %v3002 = vadd.f32 0.0, %v3001
      %v3003 = vpop.f32.mrf.mxu0
      %v3004 = vadd.f32 0.0, %v3003
      %3005 = vmatmul.bf16.gmra.mxu0 %v2939
      %v3006 = vpop.f32.mrf.mxu0
      %v3007 = vadd.f32 0.0, %v3006
      %v3008 = vpop.f32.mrf.mxu0
      %v3009 = vadd.f32 0.0, %v3008
      %3010 = vmatmul.bf16.gmra.mxu0 %v2942
      %v3011 = vpop.f32.mrf.mxu0
      %v3012 = vadd.f32 0.0, %v3011
      %v3013 = vpop.f32.mrf.mxu0
      %v3014 = vadd.f32 0.0, %v3013
      %3015 = vmatmul.bf16.gmra.mxu0 %v2945
      %v3016 = vpop.f32.mrf.mxu0
      %v3017 = vadd.f32 0.0, %v3016
      %v3018 = vpop.f32.mrf.mxu0
      %v3019 = vadd.f32 0.0, %v3018
      %3020 = vmatmul.bf16.gmra.mxu0 %v2948
      %v3021 = vpop.f32.mrf.mxu0
      %v3022 = vadd.f32 0.0, %v3021
      %v3023 = vpop.f32.mrf.mxu0
      %v3024 = vadd.f32 0.0, %v3023
      %3025 = vmatmul.bf16.gmra.mxu0 %v2951
      %v3026 = vpop.f32.mrf.mxu0
      %v3027 = vadd.f32 0.0, %v3026
      %v3028 = vpop.f32.mrf.mxu0
      %v3029 = vadd.f32 0.0, %v3028
      %3030 = vmatmul.bf16.gmra.mxu0 %v2954
      %v3031 = vpop.f32.mrf.mxu0
      %v3032 = vadd.f32 0.0, %v3031
      %v3033 = vpop.f32.mrf.mxu0
      %v3034 = vadd.f32 0.0, %v3033
      %3035 = vmatmul.bf16.gmra.mxu0 %v2957
      %v3036 = vpop.f32.mrf.mxu0
      %v3037 = vadd.f32 0.0, %v3036
      %v3038 = vpop.f32.mrf.mxu0
      %v3039 = vadd.f32 0.0, %v3038
      %3040 = vmatmul.bf16.gmra.mxu0 %v2960
      %v3041 = vpop.f32.mrf.mxu0
      %v3042 = vadd.f32 0.0, %v3041
      %v3043 = vpop.f32.mrf.mxu0
      %v3044 = vadd.f32 0.0, %v3043
      %3045 = vmatmul.bf16.gmra.mxu0 %v2963
      %v3046 = vpop.f32.mrf.mxu0
      %v3047 = vadd.f32 0.0, %v3046
      %v3048 = vpop.f32.mrf.mxu0
      %v3049 = vadd.f32 0.0, %v3048
      %3050 = vmatmul.bf16.gmra.mxu0 %v2966
      %v3051 = vpop.f32.mrf.mxu0
      %v3052 = vadd.f32 0.0, %v3051
      %v3053 = vpop.f32.mrf.mxu0
      %v3054 = vadd.f32 0.0, %v3053
      %3055 = vmatmul.bf16.gmra.mxu0 %v2969
      %v3056 = vpop.f32.mrf.mxu0
      %v3057 = vadd.f32 0.0, %v3056
      %v3058 = vpop.f32.mrf.mxu0
      %v3059 = vadd.f32 0.0, %v3058
      %3060 = vmatmul.bf16.gmra.mxu0 %v2972
      %v3061 = vpop.f32.mrf.mxu0
      %v3062 = vadd.f32 0.0, %v3061
      %v3063 = vpop.f32.mrf.mxu0
      %v3064 = vadd.f32 0.0, %v3063
      %3065 = vdwg.mxu0
      %v3066 = vadd.f32 %v2721, %v2987
      %v3067 = vadd.f32 %v2723, %v2989
      %v3068 = vadd.f32 %v2726, %v2992
      %v3069 = vadd.f32 %v2728, %v2994
      %v3070 = vadd.f32 %v2731, %v2997
      %v3071 = vadd.f32 %v2733, %v2999
      %v3072 = vadd.f32 %v2736, %v3002
      %v3073 = vadd.f32 %v2738, %v3004
      %v3074 = vadd.f32 %v2741, %v3007
      %v3075 = vadd.f32 %v2743, %v3009
      %v3076 = vadd.f32 %v2746, %v3012
      %v3077 = vadd.f32 %v2748, %v3014
      %v3078 = vadd.f32 %v2751, %v3017
      %v3079 = vadd.f32 %v2753, %v3019
      %v3080 = vadd.f32 %v2756, %v3022
      %v3081 = vadd.f32 %v2758, %v3024
      %v3082 = vadd.f32 %v2761, %v3027
      %v3083 = vadd.f32 %v2763, %v3029
      %v3084 = vadd.f32 %v2766, %v3032
      %v3085 = vadd.f32 %v2768, %v3034
      %v3086 = vadd.f32 %v2771, %v3037
      %v3087 = vadd.f32 %v2773, %v3039
      %v3088 = vadd.f32 %v2776, %v3042
      %v3089 = vadd.f32 %v2778, %v3044
      %v3090 = vadd.f32 %v2781, %v3047
      %v3091 = vadd.f32 %v2783, %v3049
      %v3092 = vadd.f32 %v2786, %v3052
      %v3093 = vadd.f32 %v2788, %v3054
      %v3094 = vadd.f32 %v2791, %v3057
      %v3095 = vadd.f32 %v2793, %v3059
      %v3096 = vadd.f32 %v2796, %v3062
      %v3097 = vadd.f32 %v2798, %v3064
      %v3098 = vld [vmem:[%s3] sm:$0x1]
      %v3100 = vperm.slane %v3098, 0
      %v3102 = vadd.f32 %v3066, %v3100
      %v3103 = vadd.f32 %v3067, %v3100
      %v3104 = vadd.f32 %v3068, %v3100
      %v3105 = vadd.f32 %v3069, %v3100
      %v3106 = vadd.f32 %v3070, %v3100
      %v3107 = vadd.f32 %v3071, %v3100
      %v3108 = vadd.f32 %v3072, %v3100
      %v3109 = vadd.f32 %v3073, %v3100
      %v3110 = vadd.f32 %v3074, %v3100
      %v3111 = vadd.f32 %v3075, %v3100
      %v3112 = vadd.f32 %v3076, %v3100
      %v3113 = vadd.f32 %v3077, %v3100
      %v3114 = vadd.f32 %v3078, %v3100
      %v3115 = vadd.f32 %v3079, %v3100
      %v3116 = vadd.f32 %v3080, %v3100
      %v3117 = vadd.f32 %v3081, %v3100
      %v3118 = vadd.f32 %v3082, %v3100
      %v3119 = vadd.f32 %v3083, %v3100
      %v3120 = vadd.f32 %v3084, %v3100
      %v3121 = vadd.f32 %v3085, %v3100
      %v3122 = vadd.f32 %v3086, %v3100
      %v3123 = vadd.f32 %v3087, %v3100
      %v3124 = vadd.f32 %v3088, %v3100
      %v3125 = vadd.f32 %v3089, %v3100
      %v3126 = vadd.f32 %v3090, %v3100
      %v3127 = vadd.f32 %v3091, %v3100
      %v3128 = vadd.f32 %v3092, %v3100
      %v3129 = vadd.f32 %v3093, %v3100
      %v3130 = vadd.f32 %v3094, %v3100
      %v3131 = vadd.f32 %v3095, %v3100
      %v3132 = vadd.f32 %v3096, %v3100
      %v3133 = vadd.f32 %v3097, %v3100
      %v3134 = vmax.f32 %v3102, 0.0
      %v3135 = vmax.f32 %v3103, 0.0
      %v3136 = vmax.f32 %v3104, 0.0
      %v3137 = vmax.f32 %v3105, 0.0
      %v3138 = vmax.f32 %v3106, 0.0
      %v3139 = vmax.f32 %v3107, 0.0
      %v3140 = vmax.f32 %v3108, 0.0
      %v3141 = vmax.f32 %v3109, 0.0
      %v3142 = vmax.f32 %v3110, 0.0
      %v3143 = vmax.f32 %v3111, 0.0
      %v3144 = vmax.f32 %v3112, 0.0
      %v3145 = vmax.f32 %v3113, 0.0
      %v3146 = vmax.f32 %v3114, 0.0
      %v3147 = vmax.f32 %v3115, 0.0
      %v3148 = vmax.f32 %v3116, 0.0
      %v3149 = vmax.f32 %v3117, 0.0
      %v3150 = vmax.f32 %v3118, 0.0
      %v3151 = vmax.f32 %v3119, 0.0
      %v3152 = vmax.f32 %v3120, 0.0
      %v3153 = vmax.f32 %v3121, 0.0
      %v3154 = vmax.f32 %v3122, 0.0
      %v3155 = vmax.f32 %v3123, 0.0
      %v3156 = vmax.f32 %v3124, 0.0
      %v3157 = vmax.f32 %v3125, 0.0
      %v3158 = vmax.f32 %v3126, 0.0
      %v3159 = vmax.f32 %v3127, 0.0
      %v3160 = vmax.f32 %v3128, 0.0
      %v3161 = vmax.f32 %v3129, 0.0
      %v3162 = vmax.f32 %v3130, 0.0
      %v3163 = vmax.f32 %v3131, 0.0
      %v3164 = vmax.f32 %v3132, 0.0
      %v3165 = vmax.f32 %v3133, 0.0
      %v3166 = vpack.c.bf16 %v3134, %v3134
      %v3167 = vpack.c.bf16 %v3135, %v3135
      %v3168 = vpack.c.bf16 %v3136, %v3136
      %v3169 = vpack.c.bf16 %v3137, %v3137
      %v3170 = vpack.c.bf16 %v3138, %v3138
      %v3171 = vpack.c.bf16 %v3139, %v3139
      %v3172 = vpack.c.bf16 %v3140, %v3140
      %v3173 = vpack.c.bf16 %v3141, %v3141
      %v3174 = vpack.c.bf16 %v3142, %v3142
      %v3175 = vpack.c.bf16 %v3143, %v3143
      %v3176 = vpack.c.bf16 %v3144, %v3144
      %v3177 = vpack.c.bf16 %v3145, %v3145
      %v3178 = vpack.c.bf16 %v3146, %v3146
      %v3179 = vpack.c.bf16 %v3147, %v3147
      %v3180 = vpack.c.bf16 %v3148, %v3148
      %v3181 = vpack.c.bf16 %v3149, %v3149
      %v3182 = vpack.c.bf16 %v3150, %v3150
      %v3183 = vpack.c.bf16 %v3151, %v3151
      %v3184 = vpack.c.bf16 %v3152, %v3152
      %v3185 = vpack.c.bf16 %v3153, %v3153
      %v3186 = vpack.c.bf16 %v3154, %v3154
      %v3187 = vpack.c.bf16 %v3155, %v3155
      %v3188 = vpack.c.bf16 %v3156, %v3156
      %v3189 = vpack.c.bf16 %v3157, %v3157
      %v3190 = vpack.c.bf16 %v3158, %v3158
      %v3191 = vpack.c.bf16 %v3159, %v3159
      %v3192 = vpack.c.bf16 %v3160, %v3160
      %v3193 = vpack.c.bf16 %v3161, %v3161
      %v3194 = vpack.c.bf16 %v3162, %v3162
      %v3195 = vpack.c.bf16 %v3163, %v3163
      %v3196 = vpack.c.bf16 %v3164, %v3164
      %v3197 = vpack.c.bf16 %v3165, %v3165
      %v3199 = vshrl.u32 %v3166, 16
      %v3201 = vrot.slane %v3199, 7
      %v3202 = vshll.u32 %v3166, 16
      %v3204 = vor.u32 %v3201, %v3202
      %v3205 = vrot.slane %v3201, 4
      %v3207 = vshrl.u32 %v3167, 16
      %v3209 = vrot.slane %v3207, 7
      %v3210 = vshll.u32 %v3167, 16
      %v3212 = vor.u32 %v3209, %v3210
      %v3213 = vsel %vm522, %v3205, %v3212
      %v3215 = vshrl.u32 %v3168, 16
      %v3217 = vrot.slane %v3215, 7
      %v3218 = vshll.u32 %v3168, 16
      %v3220 = vor.u32 %v3217, %v3218
      %v3221 = vrot.slane %v3217, 4
      %v3223 = vshrl.u32 %v3169, 16
      %v3225 = vrot.slane %v3223, 7
      %v3226 = vshll.u32 %v3169, 16
      %v3228 = vor.u32 %v3225, %v3226
      %v3229 = vsel %vm522, %v3221, %v3228
      %v3231 = vshrl.u32 %v3170, 16
      %v3233 = vrot.slane %v3231, 7
      %v3234 = vshll.u32 %v3170, 16
      %v3236 = vor.u32 %v3233, %v3234
      %v3237 = vrot.slane %v3233, 4
      %v3239 = vshrl.u32 %v3171, 16
      %v3241 = vrot.slane %v3239, 7
      %v3242 = vshll.u32 %v3171, 16
      %v3244 = vor.u32 %v3241, %v3242
      %v3245 = vsel %vm522, %v3237, %v3244
      %v3247 = vshrl.u32 %v3172, 16
      %v3249 = vrot.slane %v3247, 7
      %v3250 = vshll.u32 %v3172, 16
      %v3252 = vor.u32 %v3249, %v3250
      %v3253 = vrot.slane %v3249, 4
      %v3255 = vshrl.u32 %v3173, 16
      %v3257 = vrot.slane %v3255, 7
      %v3258 = vshll.u32 %v3173, 16
      %v3260 = vor.u32 %v3257, %v3258
      %v3261 = vsel %vm522, %v3253, %v3260
      %v3263 = vshrl.u32 %v3174, 16
      %v3265 = vrot.slane %v3263, 7
      %v3266 = vshll.u32 %v3174, 16
      %v3268 = vor.u32 %v3265, %v3266
      %v3269 = vrot.slane %v3265, 4
      %v3271 = vshrl.u32 %v3175, 16
      %v3273 = vrot.slane %v3271, 7
      %v3274 = vshll.u32 %v3175, 16
      %v3276 = vor.u32 %v3273, %v3274
      %v3277 = vsel %vm522, %v3269, %v3276
      %v3279 = vshrl.u32 %v3176, 16
      %v3281 = vrot.slane %v3279, 7
      %v3282 = vshll.u32 %v3176, 16
      %v3284 = vor.u32 %v3281, %v3282
      %v3285 = vrot.slane %v3281, 4
      %v3287 = vshrl.u32 %v3177, 16
      %v3289 = vrot.slane %v3287, 7
      %v3290 = vshll.u32 %v3177, 16
      %v3292 = vor.u32 %v3289, %v3290
      %v3293 = vsel %vm522, %v3285, %v3292
      %v3295 = vshrl.u32 %v3178, 16
      %v3297 = vrot.slane %v3295, 7
      %v3298 = vshll.u32 %v3178, 16
      %v3300 = vor.u32 %v3297, %v3298
      %v3301 = vrot.slane %v3297, 4
      %v3303 = vshrl.u32 %v3179, 16
      %v3305 = vrot.slane %v3303, 7
      %v3306 = vshll.u32 %v3179, 16
      %v3308 = vor.u32 %v3305, %v3306
      %v3309 = vsel %vm522, %v3301, %v3308
      %v3311 = vshrl.u32 %v3180, 16
      %v3313 = vrot.slane %v3311, 7
      %v3314 = vshll.u32 %v3180, 16
      %v3316 = vor.u32 %v3313, %v3314
      %v3317 = vrot.slane %v3313, 4
      %v3319 = vshrl.u32 %v3181, 16
      %v3321 = vrot.slane %v3319, 7
      %v3322 = vshll.u32 %v3181, 16
      %v3324 = vor.u32 %v3321, %v3322
      %v3325 = vsel %vm522, %v3317, %v3324
      %v3327 = vshrl.u32 %v3182, 16
      %v3329 = vrot.slane %v3327, 7
      %v3330 = vshll.u32 %v3182, 16
      %v3332 = vor.u32 %v3329, %v3330
      %v3333 = vrot.slane %v3329, 4
      %v3335 = vshrl.u32 %v3183, 16
      %v3337 = vrot.slane %v3335, 7
      %v3338 = vshll.u32 %v3183, 16
      %v3340 = vor.u32 %v3337, %v3338
      %v3341 = vsel %vm522, %v3333, %v3340
      %v3343 = vshrl.u32 %v3184, 16
      %v3345 = vrot.slane %v3343, 7
      %v3346 = vshll.u32 %v3184, 16
      %v3348 = vor.u32 %v3345, %v3346
      %v3349 = vrot.slane %v3345, 4
      %v3351 = vshrl.u32 %v3185, 16
      %v3353 = vrot.slane %v3351, 7
      %v3354 = vshll.u32 %v3185, 16
      %v3356 = vor.u32 %v3353, %v3354
      %v3357 = vsel %vm522, %v3349, %v3356
      %v3359 = vshrl.u32 %v3186, 16
      %v3361 = vrot.slane %v3359, 7
      %v3362 = vshll.u32 %v3186, 16
      %v3364 = vor.u32 %v3361, %v3362
      %v3365 = vrot.slane %v3361, 4
      %v3367 = vshrl.u32 %v3187, 16
      %v3369 = vrot.slane %v3367, 7
      %v3370 = vshll.u32 %v3187, 16
      %v3372 = vor.u32 %v3369, %v3370
      %v3373 = vsel %vm522, %v3365, %v3372
      %v3375 = vshrl.u32 %v3188, 16
      %v3377 = vrot.slane %v3375, 7
      %v3378 = vshll.u32 %v3188, 16
      %v3380 = vor.u32 %v3377, %v3378
      %v3381 = vrot.slane %v3377, 4
      %v3383 = vshrl.u32 %v3189, 16
      %v3385 = vrot.slane %v3383, 7
      %v3386 = vshll.u32 %v3189, 16
      %v3388 = vor.u32 %v3385, %v3386
      %v3389 = vsel %vm522, %v3381, %v3388
      %v3391 = vshrl.u32 %v3190, 16
      %v3393 = vrot.slane %v3391, 7
      %v3394 = vshll.u32 %v3190, 16
      %v3396 = vor.u32 %v3393, %v3394
      %v3397 = vrot.slane %v3393, 4
      %v3399 = vshrl.u32 %v3191, 16
      %v3401 = vrot.slane %v3399, 7
      %v3402 = vshll.u32 %v3191, 16
      %v3404 = vor.u32 %v3401, %v3402
      %v3405 = vsel %vm522, %v3397, %v3404
      %v3407 = vshrl.u32 %v3192, 16
      %v3409 = vrot.slane %v3407, 7
      %v3410 = vshll.u32 %v3192, 16
      %v3412 = vor.u32 %v3409, %v3410
      %v3413 = vrot.slane %v3409, 4
      %v3415 = vshrl.u32 %v3193, 16
      %v3417 = vrot.slane %v3415, 7
      %v3418 = vshll.u32 %v3193, 16
      %v3420 = vor.u32 %v3417, %v3418
      %v3421 = vsel %vm522, %v3413, %v3420
      %v3423 = vshrl.u32 %v3194, 16
      %v3425 = vrot.slane %v3423, 7
      %v3426 = vshll.u32 %v3194, 16
      %v3428 = vor.u32 %v3425, %v3426
      %v3429 = vrot.slane %v3425, 4
      %v3431 = vshrl.u32 %v3195, 16
      %v3433 = vrot.slane %v3431, 7
      %v3434 = vshll.u32 %v3195, 16
      %v3436 = vor.u32 %v3433, %v3434
      %v3437 = vsel %vm522, %v3429, %v3436
      %v3439 = vshrl.u32 %v3196, 16
      %v3441 = vrot.slane %v3439, 7
      %v3442 = vshll.u32 %v3196, 16
      %v3444 = vor.u32 %v3441, %v3442
      %v3445 = vrot.slane %v3441, 4
      %v3447 = vshrl.u32 %v3197, 16
      %v3449 = vrot.slane %v3447, 7
      %v3450 = vshll.u32 %v3197, 16
      %v3452 = vor.u32 %v3449, %v3450
      %v3453 = vsel %vm522, %v3445, %v3452
      %v3486 = vld [vmem:[%s388] sm:$0xf]
      %v3487 = vsel %vm813, %v3204, %v3486
      %3488 = vst [vmem:[%s388] sm:$0xf] %v3487
      %3489 = vst.msk [vmem:[%s388 + $0x4] sm:$0xf] %vm817, %v3213
      %v3490 = vld [vmem:[%s388 + $0x8] sm:$0xf]
      %v3491 = vsel %vm813, %v3220, %v3490
      %3492 = vst [vmem:[%s388 + $0x8] sm:$0xf] %v3491
      %3493 = vst.msk [vmem:[%s388 + $0xc] sm:$0xf] %vm817, %v3229
      %v3494 = vld [vmem:[%s388 + $0x10] sm:$0xf]
      %v3495 = vsel %vm813, %v3236, %v3494
      %3496 = vst [vmem:[%s388 + $0x10] sm:$0xf] %v3495
      %3497 = vst.msk [vmem:[%s388 + $0x14] sm:$0xf] %vm817, %v3245
      %v3498 = vld [vmem:[%s388 + $0x18] sm:$0xf]
      %v3499 = vsel %vm813, %v3252, %v3498
      %3500 = vst [vmem:[%s388 + $0x18] sm:$0xf] %v3499
      %3501 = vst.msk [vmem:[%s388 + $0x1c] sm:$0xf] %vm817, %v3261
      %v3502 = vld [vmem:[%s388 + $0x20] sm:$0xf]
      %v3503 = vsel %vm813, %v3268, %v3502
      %3504 = vst [vmem:[%s388 + $0x20] sm:$0xf] %v3503
      %3505 = vst.msk [vmem:[%s388 + $0x24] sm:$0xf] %vm817, %v3277
      %v3506 = vld [vmem:[%s388 + $0x28] sm:$0xf]
      %v3507 = vsel %vm813, %v3284, %v3506
      %3508 = vst [vmem:[%s388 + $0x28] sm:$0xf] %v3507
      %3509 = vst.msk [vmem:[%s388 + $0x2c] sm:$0xf] %vm817, %v3293
      %v3510 = vld [vmem:[%s388 + $0x30] sm:$0xf]
      %v3511 = vsel %vm813, %v3300, %v3510
      %3512 = vst [vmem:[%s388 + $0x30] sm:$0xf] %v3511
      %3513 = vst.msk [vmem:[%s388 + $0x34] sm:$0xf] %vm817, %v3309
      %v3514 = vld [vmem:[%s388 + $0x38] sm:$0xf]
      %v3515 = vsel %vm813, %v3316, %v3514
      %3516 = vst [vmem:[%s388 + $0x38] sm:$0xf] %v3515
      %3517 = vst.msk [vmem:[%s388 + $0x3c] sm:$0xf] %vm817, %v3325
      %v3518 = vld [vmem:[%s388 + $0x40] sm:$0xf]
      %v3519 = vsel %vm813, %v3332, %v3518
      %3520 = vst [vmem:[%s388 + $0x40] sm:$0xf] %v3519
      %3521 = vst.msk [vmem:[%s388 + $0x44] sm:$0xf] %vm817, %v3341
      %v3522 = vld [vmem:[%s388 + $0x48] sm:$0xf]
      %v3523 = vsel %vm813, %v3348, %v3522
      %3524 = vst [vmem:[%s388 + $0x48] sm:$0xf] %v3523
      %3525 = vst.msk [vmem:[%s388 + $0x4c] sm:$0xf] %vm817, %v3357
      %v3526 = vld [vmem:[%s388 + $0x50] sm:$0xf]
      %v3527 = vsel %vm813, %v3364, %v3526
      %3528 = vst [vmem:[%s388 + $0x50] sm:$0xf] %v3527
      %3529 = vst.msk [vmem:[%s388 + $0x54] sm:$0xf] %vm817, %v3373
      %v3530 = vld [vmem:[%s388 + $0x58] sm:$0xf]
      %v3531 = vsel %vm813, %v3380, %v3530
      %3532 = vst [vmem:[%s388 + $0x58] sm:$0xf] %v3531
      %3533 = vst.msk [vmem:[%s388 + $0x5c] sm:$0xf] %vm817, %v3389
      %v3534 = vld [vmem:[%s388 + $0x60] sm:$0xf]
      %v3535 = vsel %vm813, %v3396, %v3534
      %3536 = vst [vmem:[%s388 + $0x60] sm:$0xf] %v3535
      %3537 = vst.msk [vmem:[%s388 + $0x64] sm:$0xf] %vm817, %v3405
      %v3538 = vld [vmem:[%s388 + $0x68] sm:$0xf]
      %v3539 = vsel %vm813, %v3412, %v3538
      %3540 = vst [vmem:[%s388 + $0x68] sm:$0xf] %v3539
      %3541 = vst.msk [vmem:[%s388 + $0x6c] sm:$0xf] %vm817, %v3421
      %v3542 = vld [vmem:[%s388 + $0x70] sm:$0xf]
      %v3543 = vsel %vm813, %v3428, %v3542
      %3544 = vst [vmem:[%s388 + $0x70] sm:$0xf] %v3543
      %3545 = vst.msk [vmem:[%s388 + $0x74] sm:$0xf] %vm817, %v3437
      %v3546 = vld [vmem:[%s388 + $0x78] sm:$0xf]
      %v3547 = vsel %vm813, %v3444, %v3546
      %3548 = vst [vmem:[%s388 + $0x78] sm:$0xf] %v3547
      %3549 = vst.msk [vmem:[%s388 + $0x7c] sm:$0xf] %vm817, %v3453
      %3582 = vrot.lane.b32.xlu0 %v3166, 4
      %v3583 = vpop.permute.xlu0 %3582
      %3584 = vrot.lane.b32.xlu0 %v3167, 4
      %v3585 = vpop.permute.xlu0 %3584
      %3586 = vrot.lane.b32.xlu0 %v3168, 4
      %v3587 = vpop.permute.xlu0 %3586
      %3588 = vrot.lane.b32.xlu0 %v3169, 4
      %v3589 = vpop.permute.xlu0 %3588
      %3590 = vrot.lane.b32.xlu0 %v3170, 4
      %v3591 = vpop.permute.xlu0 %3590
      %3592 = vrot.lane.b32.xlu0 %v3171, 4
      %v3593 = vpop.permute.xlu0 %3592
      %3594 = vrot.lane.b32.xlu0 %v3172, 4
      %v3595 = vpop.permute.xlu0 %3594
      %3596 = vrot.lane.b32.xlu0 %v3173, 4
      %v3597 = vpop.permute.xlu0 %3596
      %3598 = vrot.lane.b32.xlu0 %v3174, 4
      %v3599 = vpop.permute.xlu0 %3598
      %3600 = vrot.lane.b32.xlu0 %v3175, 4
      %v3601 = vpop.permute.xlu0 %3600
      %3602 = vrot.lane.b32.xlu0 %v3176, 4
      %v3603 = vpop.permute.xlu0 %3602
      %3604 = vrot.lane.b32.xlu0 %v3177, 4
      %v3605 = vpop.permute.xlu0 %3604
      %3606 = vrot.lane.b32.xlu0 %v3178, 4
      %v3607 = vpop.permute.xlu0 %3606
      %3608 = vrot.lane.b32.xlu0 %v3179, 4
      %v3609 = vpop.permute.xlu0 %3608
      %3610 = vrot.lane.b32.xlu0 %v3180, 4
      %v3611 = vpop.permute.xlu0 %3610
      %3612 = vrot.lane.b32.xlu0 %v3181, 4
      %v3613 = vpop.permute.xlu0 %3612
      %3614 = vrot.lane.b32.xlu0 %v3182, 4
      %v3615 = vpop.permute.xlu0 %3614
      %3616 = vrot.lane.b32.xlu0 %v3183, 4
      %v3617 = vpop.permute.xlu0 %3616
      %3618 = vrot.lane.b32.xlu0 %v3184, 4
      %v3619 = vpop.permute.xlu0 %3618
      %3620 = vrot.lane.b32.xlu0 %v3185, 4
      %v3621 = vpop.permute.xlu0 %3620
      %3622 = vrot.lane.b32.xlu0 %v3186, 4
      %v3623 = vpop.permute.xlu0 %3622
      %3624 = vrot.lane.b32.xlu0 %v3187, 4
      %v3625 = vpop.permute.xlu0 %3624
      %3626 = vrot.lane.b32.xlu0 %v3188, 4
      %v3627 = vpop.permute.xlu0 %3626
      %3628 = vrot.lane.b32.xlu0 %v3189, 4
      %v3629 = vpop.permute.xlu0 %3628
      %3630 = vrot.lane.b32.xlu0 %v3190, 4
      %v3631 = vpop.permute.xlu0 %3630
      %3632 = vrot.lane.b32.xlu0 %v3191, 4
      %v3633 = vpop.permute.xlu0 %3632
      %3634 = vrot.lane.b32.xlu0 %v3192, 4
      %v3635 = vpop.permute.xlu0 %3634
      %3636 = vrot.lane.b32.xlu0 %v3193, 4
      %v3637 = vpop.permute.xlu0 %3636
      %3638 = vrot.lane.b32.xlu0 %v3194, 4
      %v3639 = vpop.permute.xlu0 %3638
      %3640 = vrot.lane.b32.xlu0 %v3195, 4
      %v3641 = vpop.permute.xlu0 %3640
      %3642 = vrot.lane.b32.xlu0 %v3196, 4
      %v3643 = vpop.permute.xlu0 %3642
      %3644 = vrot.lane.b32.xlu0 %v3197, 4
      %v3645 = vpop.permute.xlu0 %3644
      %3678 = vst.msk [vmem:[%s388] sm:$0xf] %vm1739, %v3583
      %3679 = vst.msk [vmem:[%s388 + $0x4] sm:$0xf] %vm1739, %v3585
      %3680 = vst.msk [vmem:[%s388 + $0x8] sm:$0xf] %vm1739, %v3587
      %3681 = vst.msk [vmem:[%s388 + $0xc] sm:$0xf] %vm1739, %v3589
      %3682 = vst.msk [vmem:[%s388 + $0x10] sm:$0xf] %vm1739, %v3591
      %3683 = vst.msk [vmem:[%s388 + $0x14] sm:$0xf] %vm1739, %v3593
      %3684 = vst.msk [vmem:[%s388 + $0x18] sm:$0xf] %vm1739, %v3595
      %3685 = vst.msk [vmem:[%s388 + $0x1c] sm:$0xf] %vm1739, %v3597
      %3686 = vst.msk [vmem:[%s388 + $0x20] sm:$0xf] %vm1739, %v3599
      %3687 = vst.msk [vmem:[%s388 + $0x24] sm:$0xf] %vm1739, %v3601
      %3688 = vst.msk [vmem:[%s388 + $0x28] sm:$0xf] %vm1739, %v3603
      %3689 = vst.msk [vmem:[%s388 + $0x2c] sm:$0xf] %vm1739, %v3605
      %3690 = vst.msk [vmem:[%s388 + $0x30] sm:$0xf] %vm1739, %v3607
      %3691 = vst.msk [vmem:[%s388 + $0x34] sm:$0xf] %vm1739, %v3609
      %3692 = vst.msk [vmem:[%s388 + $0x38] sm:$0xf] %vm1739, %v3611
      %3693 = vst.msk [vmem:[%s388 + $0x3c] sm:$0xf] %vm1739, %v3613
      %3694 = vst.msk [vmem:[%s388 + $0x40] sm:$0xf] %vm1739, %v3615
      %3695 = vst.msk [vmem:[%s388 + $0x44] sm:$0xf] %vm1739, %v3617
      %3696 = vst.msk [vmem:[%s388 + $0x48] sm:$0xf] %vm1739, %v3619
      %3697 = vst.msk [vmem:[%s388 + $0x4c] sm:$0xf] %vm1739, %v3621
      %3698 = vst.msk [vmem:[%s388 + $0x50] sm:$0xf] %vm1739, %v3623
      %3699 = vst.msk [vmem:[%s388 + $0x54] sm:$0xf] %vm1739, %v3625
      %3700 = vst.msk [vmem:[%s388 + $0x58] sm:$0xf] %vm1739, %v3627
      %3701 = vst.msk [vmem:[%s388 + $0x5c] sm:$0xf] %vm1739, %v3629
      %3702 = vst.msk [vmem:[%s388 + $0x60] sm:$0xf] %vm1739, %v3631
      %3703 = vst.msk [vmem:[%s388 + $0x64] sm:$0xf] %vm1739, %v3633
      %3704 = vst.msk [vmem:[%s388 + $0x68] sm:$0xf] %vm1739, %v3635
      %3705 = vst.msk [vmem:[%s388 + $0x6c] sm:$0xf] %vm1739, %v3637
      %3706 = vst.msk [vmem:[%s388 + $0x70] sm:$0xf] %vm1739, %v3639
      %3707 = vst.msk [vmem:[%s388 + $0x74] sm:$0xf] %vm1739, %v3641
      %3708 = vst.msk [vmem:[%s388 + $0x78] sm:$0xf] %vm1739, %v3643
      %3709 = vst.msk [vmem:[%s388 + $0x7c] sm:$0xf] %vm1739, %v3645
      %v3710 = vrot.slane %v3199, 4
      %v3711 = vrot.slane %v3202, 5
      %v3712 = vor.u32 %v3710, %v3711
      %v3713 = vrot.slane %v3712, 4
      %v3714 = vrot.slane %v3210, 5
      %v3715 = vsel %vm1042, %v3713, %v3714
      %v3716 = vrot.slane %v3207, 4
      %v3717 = vor.u32 %v3716, %v3714
      %v3718 = vrot.slane %v3717, 4
      %v3719 = vrot.slane %v3215, 4
      %v3720 = vrot.slane %v3218, 5
      %v3721 = vor.u32 %v3719, %v3720
      %v3722 = vrot.slane %v3721, 4
      %v3723 = vrot.slane %v3226, 5
      %v3724 = vsel %vm1042, %v3722, %v3723
      %v3725 = vrot.slane %v3223, 4
      %v3726 = vor.u32 %v3725, %v3723
      %v3727 = vrot.slane %v3726, 4
      %v3728 = vrot.slane %v3231, 4
      %v3729 = vrot.slane %v3234, 5
      %v3730 = vor.u32 %v3728, %v3729
      %v3731 = vrot.slane %v3730, 4
      %v3732 = vrot.slane %v3242, 5
      %v3733 = vsel %vm1042, %v3731, %v3732
      %v3734 = vrot.slane %v3239, 4
      %v3735 = vor.u32 %v3734, %v3732
      %v3736 = vrot.slane %v3735, 4
      %v3737 = vrot.slane %v3247, 4
      %v3738 = vrot.slane %v3250, 5
      %v3739 = vor.u32 %v3737, %v3738
      %v3740 = vrot.slane %v3739, 4
      %v3741 = vrot.slane %v3258, 5
      %v3742 = vsel %vm1042, %v3740, %v3741
      %v3743 = vrot.slane %v3255, 4
      %v3744 = vor.u32 %v3743, %v3741
      %v3745 = vrot.slane %v3744, 4
      %v3746 = vrot.slane %v3263, 4
      %v3747 = vrot.slane %v3266, 5
      %v3748 = vor.u32 %v3746, %v3747
      %v3749 = vrot.slane %v3748, 4
      %v3750 = vrot.slane %v3274, 5
      %v3751 = vsel %vm1042, %v3749, %v3750
      %v3752 = vrot.slane %v3271, 4
      %v3753 = vor.u32 %v3752, %v3750
      %v3754 = vrot.slane %v3753, 4
      %v3755 = vrot.slane %v3279, 4
      %v3756 = vrot.slane %v3282, 5
      %v3757 = vor.u32 %v3755, %v3756
      %v3758 = vrot.slane %v3757, 4
      %v3759 = vrot.slane %v3290, 5
      %v3760 = vsel %vm1042, %v3758, %v3759
      %v3761 = vrot.slane %v3287, 4
      %v3762 = vor.u32 %v3761, %v3759
      %v3763 = vrot.slane %v3762, 4
      %v3764 = vrot.slane %v3295, 4
      %v3765 = vrot.slane %v3298, 5
      %v3766 = vor.u32 %v3764, %v3765
      %v3767 = vrot.slane %v3766, 4
      %v3768 = vrot.slane %v3306, 5
      %v3769 = vsel %vm1042, %v3767, %v3768
      %v3770 = vrot.slane %v3303, 4
      %v3771 = vor.u32 %v3770, %v3768
      %v3772 = vrot.slane %v3771, 4
      %v3773 = vrot.slane %v3311, 4
      %v3774 = vrot.slane %v3314, 5
      %v3775 = vor.u32 %v3773, %v3774
      %v3776 = vrot.slane %v3775, 4
      %v3777 = vrot.slane %v3322, 5
      %v3778 = vsel %vm1042, %v3776, %v3777
      %v3779 = vrot.slane %v3319, 4
      %v3780 = vor.u32 %v3779, %v3777
      %v3781 = vrot.slane %v3780, 4
      %v3782 = vrot.slane %v3327, 4
      %v3783 = vrot.slane %v3330, 5
      %v3784 = vor.u32 %v3782, %v3783
      %v3785 = vrot.slane %v3784, 4
      %v3786 = vrot.slane %v3338, 5
      %v3787 = vsel %vm1042, %v3785, %v3786
      %v3788 = vrot.slane %v3335, 4
      %v3789 = vor.u32 %v3788, %v3786
      %v3790 = vrot.slane %v3789, 4
      %v3791 = vrot.slane %v3343, 4
      %v3792 = vrot.slane %v3346, 5
      %v3793 = vor.u32 %v3791, %v3792
      %v3794 = vrot.slane %v3793, 4
      %v3795 = vrot.slane %v3354, 5
      %v3796 = vsel %vm1042, %v3794, %v3795
      %v3797 = vrot.slane %v3351, 4
      %v3798 = vor.u32 %v3797, %v3795
      %v3799 = vrot.slane %v3798, 4
      %v3800 = vrot.slane %v3359, 4
      %v3801 = vrot.slane %v3362, 5
      %v3802 = vor.u32 %v3800, %v3801
      %v3803 = vrot.slane %v3802, 4
      %v3804 = vrot.slane %v3370, 5
      %v3805 = vsel %vm1042, %v3803, %v3804
      %v3806 = vrot.slane %v3367, 4
      %v3807 = vor.u32 %v3806, %v3804
      %v3808 = vrot.slane %v3807, 4
      %v3809 = vrot.slane %v3375, 4
      %v3810 = vrot.slane %v3378, 5
      %v3811 = vor.u32 %v3809, %v3810
      %v3812 = vrot.slane %v3811, 4
      %v3813 = vrot.slane %v3386, 5
      %v3814 = vsel %vm1042, %v3812, %v3813
      %v3815 = vrot.slane %v3383, 4
      %v3816 = vor.u32 %v3815, %v3813
      %v3817 = vrot.slane %v3816, 4
      %v3818 = vrot.slane %v3391, 4
      %v3819 = vrot.slane %v3394, 5
      %v3820 = vor.u32 %v3818, %v3819
      %v3821 = vrot.slane %v3820, 4
      %v3822 = vrot.slane %v3402, 5
      %v3823 = vsel %vm1042, %v3821, %v3822
      %v3824 = vrot.slane %v3399, 4
      %v3825 = vor.u32 %v3824, %v3822
      %v3826 = vrot.slane %v3825, 4
      %v3827 = vrot.slane %v3407, 4
      %v3828 = vrot.slane %v3410, 5
      %v3829 = vor.u32 %v3827, %v3828
      %v3830 = vrot.slane %v3829, 4
      %v3831 = vrot.slane %v3418, 5
      %v3832 = vsel %vm1042, %v3830, %v3831
      %v3833 = vrot.slane %v3415, 4
      %v3834 = vor.u32 %v3833, %v3831
      %v3835 = vrot.slane %v3834, 4
      %v3836 = vrot.slane %v3423, 4
      %v3837 = vrot.slane %v3426, 5
      %v3838 = vor.u32 %v3836, %v3837
      %v3839 = vrot.slane %v3838, 4
      %v3840 = vrot.slane %v3434, 5
      %v3841 = vsel %vm1042, %v3839, %v3840
      %v3842 = vrot.slane %v3431, 4
      %v3843 = vor.u32 %v3842, %v3840
      %v3844 = vrot.slane %v3843, 4
      %v3845 = vrot.slane %v3439, 4
      %v3846 = vrot.slane %v3442, 5
      %v3847 = vor.u32 %v3845, %v3846
      %v3848 = vrot.slane %v3847, 4
      %v3849 = vrot.slane %v3450, 5
      %v3850 = vsel %vm1042, %v3848, %v3849
      %v3851 = vrot.slane %v3447, 4
      %v3852 = vor.u32 %v3851, %v3849
      %v3853 = vrot.slane %v3852, 4
      %3854 = vrot.lane.b32.xlu0 %v3715, 8
      %v3855 = vpop.permute.xlu0 %3854
      %3856 = vrot.lane.b32.xlu0 %v3718, 8
      %v3857 = vpop.permute.xlu0 %3856
      %3858 = vrot.lane.b32.xlu0 %v3724, 8
      %v3859 = vpop.permute.xlu0 %3858
      %3860 = vrot.lane.b32.xlu0 %v3727, 8
      %v3861 = vpop.permute.xlu0 %3860
      %3862 = vrot.lane.b32.xlu0 %v3733, 8
      %v3863 = vpop.permute.xlu0 %3862
      %3864 = vrot.lane.b32.xlu0 %v3736, 8
      %v3865 = vpop.permute.xlu0 %3864
      %3866 = vrot.lane.b32.xlu0 %v3742, 8
      %v3867 = vpop.permute.xlu0 %3866
      %3868 = vrot.lane.b32.xlu0 %v3745, 8
      %v3869 = vpop.permute.xlu0 %3868
      %3870 = vrot.lane.b32.xlu0 %v3751, 8
      %v3871 = vpop.permute.xlu0 %3870
      %3872 = vrot.lane.b32.xlu0 %v3754, 8
      %v3873 = vpop.permute.xlu0 %3872
      %3874 = vrot.lane.b32.xlu0 %v3760, 8
      %v3875 = vpop.permute.xlu0 %3874
      %3876 = vrot.lane.b32.xlu0 %v3763, 8
      %v3877 = vpop.permute.xlu0 %3876
      %3878 = vrot.lane.b32.xlu0 %v3769, 8
      %v3879 = vpop.permute.xlu0 %3878
      %3880 = vrot.lane.b32.xlu0 %v3772, 8
      %v3881 = vpop.permute.xlu0 %3880
      %3882 = vrot.lane.b32.xlu0 %v3778, 8
      %v3883 = vpop.permute.xlu0 %3882
      %3884 = vrot.lane.b32.xlu0 %v3781, 8
      %v3885 = vpop.permute.xlu0 %3884
      %3886 = vrot.lane.b32.xlu0 %v3787, 8
      %v3887 = vpop.permute.xlu0 %3886
      %3888 = vrot.lane.b32.xlu0 %v3790, 8
      %v3889 = vpop.permute.xlu0 %3888
      %3890 = vrot.lane.b32.xlu0 %v3796, 8
      %v3891 = vpop.permute.xlu0 %3890
      %3892 = vrot.lane.b32.xlu0 %v3799, 8
      %v3893 = vpop.permute.xlu0 %3892
      %3894 = vrot.lane.b32.xlu0 %v3805, 8
      %v3895 = vpop.permute.xlu0 %3894
      %3896 = vrot.lane.b32.xlu0 %v3808, 8
      %v3897 = vpop.permute.xlu0 %3896
      %3898 = vrot.lane.b32.xlu0 %v3814, 8
      %v3899 = vpop.permute.xlu0 %3898
      %3900 = vrot.lane.b32.xlu0 %v3817, 8
      %v3901 = vpop.permute.xlu0 %3900
      %3902 = vrot.lane.b32.xlu0 %v3823, 8
      %v3903 = vpop.permute.xlu0 %3902
      %3904 = vrot.lane.b32.xlu0 %v3826, 8
      %v3905 = vpop.permute.xlu0 %3904
      %3906 = vrot.lane.b32.xlu0 %v3832, 8
      %v3907 = vpop.permute.xlu0 %3906
      %3908 = vrot.lane.b32.xlu0 %v3835, 8
      %v3909 = vpop.permute.xlu0 %3908
      %3910 = vrot.lane.b32.xlu0 %v3841, 8
      %v3911 = vpop.permute.xlu0 %3910
      %3912 = vrot.lane.b32.xlu0 %v3844, 8
      %v3913 = vpop.permute.xlu0 %3912
      %3914 = vrot.lane.b32.xlu0 %v3850, 8
      %v3915 = vpop.permute.xlu0 %3914
      %3916 = vrot.lane.b32.xlu0 %v3853, 8
      %v3917 = vpop.permute.xlu0 %3916
      %3950 = vst.msk [vmem:[%s388] sm:$0xf] %vm1007, %v3855
      %vm3951 = vcmask 93248
      %vm3952 = vmand %vm3951, %vm1040
      %v3953 = vld [vmem:[%s388 + $0x4] sm:$0xf]
      %v3954 = vsel %vm3952, %v3857, %v3953
      %3955 = vst [vmem:[%s388 + $0x4] sm:$0xf] %v3954
      %3956 = vst.msk [vmem:[%s388 + $0x8] sm:$0xf] %vm1007, %v3859
      %v3957 = vld [vmem:[%s388 + $0xc] sm:$0xf]
      %v3958 = vsel %vm3952, %v3861, %v3957
      %3959 = vst [vmem:[%s388 + $0xc] sm:$0xf] %v3958
      %3960 = vst.msk [vmem:[%s388 + $0x10] sm:$0xf] %vm1007, %v3863
      %v3961 = vld [vmem:[%s388 + $0x14] sm:$0xf]
      %v3962 = vsel %vm3952, %v3865, %v3961
      %3963 = vst [vmem:[%s388 + $0x14] sm:$0xf] %v3962
      %3964 = vst.msk [vmem:[%s388 + $0x18] sm:$0xf] %vm1007, %v3867
      %v3965 = vld [vmem:[%s388 + $0x1c] sm:$0xf]
      %v3966 = vsel %vm3952, %v3869, %v3965
      %3967 = vst [vmem:[%s388 + $0x1c] sm:$0xf] %v3966
      %3968 = vst.msk [vmem:[%s388 + $0x20] sm:$0xf] %vm1007, %v3871
      %v3969 = vld [vmem:[%s388 + $0x24] sm:$0xf]
      %v3970 = vsel %vm3952, %v3873, %v3969
      %3971 = vst [vmem:[%s388 + $0x24] sm:$0xf] %v3970
      %3972 = vst.msk [vmem:[%s388 + $0x28] sm:$0xf] %vm1007, %v3875
      %v3973 = vld [vmem:[%s388 + $0x2c] sm:$0xf]
      %v3974 = vsel %vm3952, %v3877, %v3973
      %3975 = vst [vmem:[%s388 + $0x2c] sm:$0xf] %v3974
      %3976 = vst.msk [vmem:[%s388 + $0x30] sm:$0xf] %vm1007, %v3879
      %v3977 = vld [vmem:[%s388 + $0x34] sm:$0xf]
      %v3978 = vsel %vm3952, %v3881, %v3977
      %3979 = vst [vmem:[%s388 + $0x34] sm:$0xf] %v3978
      %3980 = vst.msk [vmem:[%s388 + $0x38] sm:$0xf] %vm1007, %v3883
      %v3981 = vld [vmem:[%s388 + $0x3c] sm:$0xf]
      %v3982 = vsel %vm3952, %v3885, %v3981
      %3983 = vst [vmem:[%s388 + $0x3c] sm:$0xf] %v3982
      %3984 = vst.msk [vmem:[%s388 + $0x40] sm:$0xf] %vm1007, %v3887
      %v3985 = vld [vmem:[%s388 + $0x44] sm:$0xf]
      %v3986 = vsel %vm3952, %v3889, %v3985
      %3987 = vst [vmem:[%s388 + $0x44] sm:$0xf] %v3986
      %3988 = vst.msk [vmem:[%s388 + $0x48] sm:$0xf] %vm1007, %v3891
      %v3989 = vld [vmem:[%s388 + $0x4c] sm:$0xf]
      %v3990 = vsel %vm3952, %v3893, %v3989
      %3991 = vst [vmem:[%s388 + $0x4c] sm:$0xf] %v3990
      %3992 = vst.msk [vmem:[%s388 + $0x50] sm:$0xf] %vm1007, %v3895
      %v3993 = vld [vmem:[%s388 + $0x54] sm:$0xf]
      %v3994 = vsel %vm3952, %v3897, %v3993
      %3995 = vst [vmem:[%s388 + $0x54] sm:$0xf] %v3994
      %3996 = vst.msk [vmem:[%s388 + $0x58] sm:$0xf] %vm1007, %v3899
      %v3997 = vld [vmem:[%s388 + $0x5c] sm:$0xf]
      %v3998 = vsel %vm3952, %v3901, %v3997
      %3999 = vst [vmem:[%s388 + $0x5c] sm:$0xf] %v3998
      %4000 = vst.msk [vmem:[%s388 + $0x60] sm:$0xf] %vm1007, %v3903
      %v4001 = vld [vmem:[%s388 + $0x64] sm:$0xf]
      %v4002 = vsel %vm3952, %v3905, %v4001
      %4003 = vst [vmem:[%s388 + $0x64] sm:$0xf] %v4002
      %4004 = vst.msk [vmem:[%s388 + $0x68] sm:$0xf] %vm1007, %v3907
      %v4005 = vld [vmem:[%s388 + $0x6c] sm:$0xf]
      %v4006 = vsel %vm3952, %v3909, %v4005
      %4007 = vst [vmem:[%s388 + $0x6c] sm:$0xf] %v4006
      %4008 = vst.msk [vmem:[%s388 + $0x70] sm:$0xf] %vm1007, %v3911
      %v4009 = vld [vmem:[%s388 + $0x74] sm:$0xf]
      %v4010 = vsel %vm3952, %v3913, %v4009
      %4011 = vst [vmem:[%s388 + $0x74] sm:$0xf] %v4010
      %4012 = vst.msk [vmem:[%s388 + $0x78] sm:$0xf] %vm1007, %v3915
      %v4013 = vld [vmem:[%s388 + $0x7c] sm:$0xf]
      %v4014 = vsel %vm3952, %v3917, %v4013
      %4015 = vst [vmem:[%s388 + $0x7c] sm:$0xf] %v4014
      %v4016 = vld [vmem:[#allocation3] sm:$0xf]
      %v4017 = vld [vmem:[#allocation3 + $0x4] sm:$0xf]
      %v4018 = vld [vmem:[#allocation3 + $0x8] sm:$0xf]
      %v4019 = vld [vmem:[#allocation3 + $0xc] sm:$0xf]
      %v4020 = vld [vmem:[#allocation3 + $0x10] sm:$0xf]
      %v4021 = vld [vmem:[#allocation3 + $0x14] sm:$0xf]
      %v4022 = vld [vmem:[#allocation3 + $0x18] sm:$0xf]
      %v4023 = vld [vmem:[#allocation3 + $0x1c] sm:$0xf]
      %v4024 = vld [vmem:[#allocation3 + $0x20] sm:$0xf]
      %v4025 = vld [vmem:[#allocation3 + $0x24] sm:$0xf]
      %v4026 = vld [vmem:[#allocation3 + $0x28] sm:$0xf]
      %v4027 = vld [vmem:[#allocation3 + $0x2c] sm:$0xf]
      %v4028 = vld [vmem:[#allocation3 + $0x30] sm:$0xf]
      %v4029 = vld [vmem:[#allocation3 + $0x34] sm:$0xf]
      %v4030 = vld [vmem:[#allocation3 + $0x38] sm:$0xf]
      %v4031 = vld [vmem:[#allocation3 + $0x3c] sm:$0xf]
      %v4032 = vld [vmem:[#allocation3 + $0x40] sm:$0xf]
      %v4033 = vld [vmem:[#allocation3 + $0x44] sm:$0xf]
      %v4034 = vld [vmem:[#allocation3 + $0x48] sm:$0xf]
      %v4035 = vld [vmem:[#allocation3 + $0x4c] sm:$0xf]
      %v4036 = vld [vmem:[#allocation3 + $0x50] sm:$0xf]
      %v4037 = vld [vmem:[#allocation3 + $0x54] sm:$0xf]
      %v4038 = vld [vmem:[#allocation3 + $0x58] sm:$0xf]
      %v4039 = vld [vmem:[#allocation3 + $0x5c] sm:$0xf]
      %v4040 = vld [vmem:[#allocation3 + $0x60] sm:$0xf]
      %v4041 = vld [vmem:[#allocation3 + $0x64] sm:$0xf]
      %v4042 = vld [vmem:[#allocation3 + $0x68] sm:$0xf]
      %v4043 = vld [vmem:[#allocation3 + $0x6c] sm:$0xf]
      %v4044 = vld [vmem:[#allocation3 + $0x70] sm:$0xf]
      %v4045 = vld [vmem:[#allocation3 + $0x74] sm:$0xf]
      %v4046 = vld [vmem:[#allocation3 + $0x78] sm:$0xf]
      %v4047 = vld [vmem:[#allocation3 + $0x7c] sm:$0xf]
      %v4048 = vld [vmem:[%s4] sm:$0xf]
      %v4049 = vld [vmem:[%s4 + $0x4] sm:$0x3]
      %v4050 = vld [vmem:[%s388] sm:$0xf]
      %v4051 = vld [vmem:[%s388 + $0x4] sm:$0xf]
      %v4052 = vld [vmem:[%s388 + $0x8] sm:$0xf]
      %v4053 = vld [vmem:[%s388 + $0xc] sm:$0xf]
      %v4054 = vld [vmem:[%s388 + $0x10] sm:$0xf]
      %v4055 = vld [vmem:[%s388 + $0x14] sm:$0xf]
      %v4056 = vld [vmem:[%s388 + $0x18] sm:$0xf]
      %v4057 = vld [vmem:[%s388 + $0x1c] sm:$0xf]
      %v4058 = vld [vmem:[%s388 + $0x20] sm:$0xf]
      %v4059 = vld [vmem:[%s388 + $0x24] sm:$0xf]
      %v4060 = vld [vmem:[%s388 + $0x28] sm:$0xf]
      %v4061 = vld [vmem:[%s388 + $0x2c] sm:$0xf]
      %v4062 = vld [vmem:[%s388 + $0x30] sm:$0xf]
      %v4063 = vld [vmem:[%s388 + $0x34] sm:$0xf]
      %v4064 = vld [vmem:[%s388 + $0x38] sm:$0xf]
      %v4065 = vld [vmem:[%s388 + $0x3c] sm:$0xf]
      %v4066 = vld [vmem:[%s388 + $0x40] sm:$0xf]
      %v4067 = vld [vmem:[%s388 + $0x44] sm:$0xf]
      %v4068 = vld [vmem:[%s388 + $0x48] sm:$0xf]
      %v4069 = vld [vmem:[%s388 + $0x4c] sm:$0xf]
      %v4070 = vld [vmem:[%s388 + $0x50] sm:$0xf]
      %v4071 = vld [vmem:[%s388 + $0x54] sm:$0xf]
      %v4072 = vld [vmem:[%s388 + $0x58] sm:$0xf]
      %v4073 = vld [vmem:[%s388 + $0x5c] sm:$0xf]
      %v4074 = vld [vmem:[%s388 + $0x60] sm:$0xf]
      %v4075 = vld [vmem:[%s388 + $0x64] sm:$0xf]
      %v4076 = vld [vmem:[%s388 + $0x68] sm:$0xf]
      %v4077 = vld [vmem:[%s388 + $0x6c] sm:$0xf]
      %v4078 = vld [vmem:[%s388 + $0x70] sm:$0xf]
      %v4079 = vld [vmem:[%s388 + $0x74] sm:$0xf]
      %v4080 = vld [vmem:[%s388 + $0x78] sm:$0xf]
      %v4081 = vld [vmem:[%s388 + $0x7c] sm:$0xf]
      %s4082 = scalar_lea.vmem %s4, 8
      %v4083 = vld [vmem:[%s4082] sm:$0xf]
      %v4084 = vld [vmem:[%s4082 + $0x4] sm:$0x3]
      %v4117 = vunpack.c.l.b16 %v4050
      %v4118 = vunpack.c.l.b16 %v4051
      %v4119 = vunpack.c.l.b16 %v4052
      %v4120 = vunpack.c.l.b16 %v4053
      %v4121 = vunpack.c.l.b16 %v4054
      %v4122 = vunpack.c.l.b16 %v4055
      %v4123 = vunpack.c.l.b16 %v4056
      %v4124 = vunpack.c.l.b16 %v4057
      %v4125 = vunpack.c.l.b16 %v4058
      %v4126 = vunpack.c.l.b16 %v4059
      %v4127 = vunpack.c.l.b16 %v4060
      %v4128 = vunpack.c.l.b16 %v4061
      %v4129 = vunpack.c.l.b16 %v4062
      %v4130 = vunpack.c.l.b16 %v4063
      %v4131 = vunpack.c.l.b16 %v4064
      %v4132 = vunpack.c.l.b16 %v4065
      %v4133 = vunpack.c.l.b16 %v4066
      %v4134 = vunpack.c.l.b16 %v4067
      %v4135 = vunpack.c.l.b16 %v4068
      %v4136 = vunpack.c.l.b16 %v4069
      %v4137 = vunpack.c.l.b16 %v4070
      %v4138 = vunpack.c.l.b16 %v4071
      %v4139 = vunpack.c.l.b16 %v4072
      %v4140 = vunpack.c.l.b16 %v4073
      %v4141 = vunpack.c.l.b16 %v4074
      %v4142 = vunpack.c.l.b16 %v4075
      %v4143 = vunpack.c.l.b16 %v4076
      %v4144 = vunpack.c.l.b16 %v4077
      %v4145 = vunpack.c.l.b16 %v4078
      %v4146 = vunpack.c.l.b16 %v4079
      %v4147 = vunpack.c.l.b16 %v4080
      %v4148 = vunpack.c.l.b16 %v4081
      %v4149 = vpack.c.b16 %v4118, %v4117
      %v4150 = vpack.c.b16 %v4120, %v4119
      %v4151 = vpack.c.b16 %v4122, %v4121
      %v4152 = vpack.c.b16 %v4124, %v4123
      %v4153 = vpack.c.b16 %v4126, %v4125
      %v4154 = vpack.c.b16 %v4128, %v4127
      %v4155 = vpack.c.b16 %v4130, %v4129
      %v4156 = vpack.c.b16 %v4132, %v4131
      %v4157 = vpack.c.b16 %v4134, %v4133
      %v4158 = vpack.c.b16 %v4136, %v4135
      %v4159 = vpack.c.b16 %v4138, %v4137
      %v4160 = vpack.c.b16 %v4140, %v4139
      %v4161 = vpack.c.b16 %v4142, %v4141
      %v4162 = vpack.c.b16 %v4144, %v4143
      %v4163 = vpack.c.b16 %v4146, %v4145
      %v4164 = vpack.c.b16 %v4148, %v4147
      %v4167 = vunpack.c.l.b16 %v4083
      %v4168 = vunpack.c.l.b16 %v4084
      %v4169 = vpack.c.b16 %v4168, %v4167
      %vm4170 = vcmask 97280
      %v4172 = vsel %vm4170, %v4149, 0
      %v4175 = vsel %vm4170, %v4150, 0
      %v4178 = vsel %vm4170, %v4151, 0
      %v4181 = vsel %vm4170, %v4152, 0
      %v4184 = vsel %vm4170, %v4153, 0
      %v4187 = vsel %vm4170, %v4154, 0
      %v4190 = vsel %vm4170, %v4155, 0
      %v4193 = vsel %vm4170, %v4156, 0
      %v4196 = vsel %vm4170, %v4157, 0
      %v4199 = vsel %vm4170, %v4158, 0
      %v4202 = vsel %vm4170, %v4159, 0
      %v4205 = vsel %vm4170, %v4160, 0
      %v4208 = vsel %vm4170, %v4161, 0
      %v4211 = vsel %vm4170, %v4162, 0
      %v4214 = vsel %vm4170, %v4163, 0
      %v4217 = vsel %vm4170, %v4164, 0
      %vm4219 = vcmask 1045504
      %v4221 = vsel %vm4219, %v4169, 0
      %4223 = vmatpush.bf16.msra.mxu0 0
      %4224 = vmatpush.bf16.msra.mxu0 0
      %4225 = vmatpush.bf16.msra.mxu0 0
      %4226 = vmatpush.bf16.msra.mxu0 0
      %4227 = vmatpush.bf16.msra.mxu0 0
      %4228 = vmatpush.bf16.msra.mxu0 0
      %4229 = vmatpush.bf16.msra.mxu0 0
      %4230 = vmatpush.bf16.msra.mxu0 %v4221
      %4231 = vmatmul.bf16.gmra.mxu0 %v4172
      %v4232 = vpop.f32.mrf.mxu0
      %v4233 = vadd.f32 0.0, %v4232
      %v4234 = vpop.f32.mrf.mxu0
      %v4235 = vadd.f32 0.0, %v4234
      %4236 = vmatmul.bf16.gmra.mxu0 %v4175
      %v4237 = vpop.f32.mrf.mxu0
      %v4238 = vadd.f32 0.0, %v4237
      %v4239 = vpop.f32.mrf.mxu0
      %v4240 = vadd.f32 0.0, %v4239
      %4241 = vmatmul.bf16.gmra.mxu0 %v4178
      %v4242 = vpop.f32.mrf.mxu0
      %v4243 = vadd.f32 0.0, %v4242
      %v4244 = vpop.f32.mrf.mxu0
      %v4245 = vadd.f32 0.0, %v4244
      %4246 = vmatmul.bf16.gmra.mxu0 %v4181
      %v4247 = vpop.f32.mrf.mxu0
      %v4248 = vadd.f32 0.0, %v4247
      %v4249 = vpop.f32.mrf.mxu0
      %v4250 = vadd.f32 0.0, %v4249
      %4251 = vmatmul.bf16.gmra.mxu0 %v4184
      %v4252 = vpop.f32.mrf.mxu0
      %v4253 = vadd.f32 0.0, %v4252
      %v4254 = vpop.f32.mrf.mxu0
      %v4255 = vadd.f32 0.0, %v4254
      %4256 = vmatmul.bf16.gmra.mxu0 %v4187
      %v4257 = vpop.f32.mrf.mxu0
      %v4258 = vadd.f32 0.0, %v4257
      %v4259 = vpop.f32.mrf.mxu0
      %v4260 = vadd.f32 0.0, %v4259
      %4261 = vmatmul.bf16.gmra.mxu0 %v4190
      %v4262 = vpop.f32.mrf.mxu0
      %v4263 = vadd.f32 0.0, %v4262
      %v4264 = vpop.f32.mrf.mxu0
      %v4265 = vadd.f32 0.0, %v4264
      %4266 = vmatmul.bf16.gmra.mxu0 %v4193
      %v4267 = vpop.f32.mrf.mxu0
      %v4268 = vadd.f32 0.0, %v4267
      %v4269 = vpop.f32.mrf.mxu0
      %v4270 = vadd.f32 0.0, %v4269
      %4271 = vmatmul.bf16.gmra.mxu0 %v4196
      %v4272 = vpop.f32.mrf.mxu0
      %v4273 = vadd.f32 0.0, %v4272
      %v4274 = vpop.f32.mrf.mxu0
      %v4275 = vadd.f32 0.0, %v4274
      %4276 = vmatmul.bf16.gmra.mxu0 %v4199
      %v4277 = vpop.f32.mrf.mxu0
      %v4278 = vadd.f32 0.0, %v4277
      %v4279 = vpop.f32.mrf.mxu0
      %v4280 = vadd.f32 0.0, %v4279
      %4281 = vmatmul.bf16.gmra.mxu0 %v4202
      %v4282 = vpop.f32.mrf.mxu0
      %v4283 = vadd.f32 0.0, %v4282
      %v4284 = vpop.f32.mrf.mxu0
      %v4285 = vadd.f32 0.0, %v4284
      %4286 = vmatmul.bf16.gmra.mxu0 %v4205
      %v4287 = vpop.f32.mrf.mxu0
      %v4288 = vadd.f32 0.0, %v4287
      %v4289 = vpop.f32.mrf.mxu0
      %v4290 = vadd.f32 0.0, %v4289
      %4291 = vmatmul.bf16.gmra.mxu0 %v4208
      %v4292 = vpop.f32.mrf.mxu0
      %v4293 = vadd.f32 0.0, %v4292
      %v4294 = vpop.f32.mrf.mxu0
      %v4295 = vadd.f32 0.0, %v4294
      %4296 = vmatmul.bf16.gmra.mxu0 %v4211
      %v4297 = vpop.f32.mrf.mxu0
      %v4298 = vadd.f32 0.0, %v4297
      %v4299 = vpop.f32.mrf.mxu0
      %v4300 = vadd.f32 0.0, %v4299
      %4301 = vmatmul.bf16.gmra.mxu0 %v4214
      %v4302 = vpop.f32.mrf.mxu0
      %v4303 = vadd.f32 0.0, %v4302
      %v4304 = vpop.f32.mrf.mxu0
      %v4305 = vadd.f32 0.0, %v4304
      %4306 = vmatmul.bf16.gmra.mxu0 %v4217
      %v4307 = vpop.f32.mrf.mxu0
      %v4308 = vadd.f32 0.0, %v4307
      %v4309 = vpop.f32.mrf.mxu0
      %v4310 = vadd.f32 0.0, %v4309
      %4311 = vdwg.mxu0
      %v4344 = vunpack.c.l.b16 %v4016
      %v4345 = vunpack.c.l.b16 %v4017
      %v4346 = vunpack.c.l.b16 %v4018
      %v4347 = vunpack.c.l.b16 %v4019
      %v4348 = vunpack.c.l.b16 %v4020
      %v4349 = vunpack.c.l.b16 %v4021
      %v4350 = vunpack.c.l.b16 %v4022
      %v4351 = vunpack.c.l.b16 %v4023
      %v4352 = vunpack.c.l.b16 %v4024
      %v4353 = vunpack.c.l.b16 %v4025
      %v4354 = vunpack.c.l.b16 %v4026
      %v4355 = vunpack.c.l.b16 %v4027
      %v4356 = vunpack.c.l.b16 %v4028
      %v4357 = vunpack.c.l.b16 %v4029
      %v4358 = vunpack.c.l.b16 %v4030
      %v4359 = vunpack.c.l.b16 %v4031
      %v4360 = vunpack.c.l.b16 %v4032
      %v4361 = vunpack.c.l.b16 %v4033
      %v4362 = vunpack.c.l.b16 %v4034
      %v4363 = vunpack.c.l.b16 %v4035
      %v4364 = vunpack.c.l.b16 %v4036
      %v4365 = vunpack.c.l.b16 %v4037
      %v4366 = vunpack.c.l.b16 %v4038
      %v4367 = vunpack.c.l.b16 %v4039
      %v4368 = vunpack.c.l.b16 %v4040
      %v4369 = vunpack.c.l.b16 %v4041
      %v4370 = vunpack.c.l.b16 %v4042
      %v4371 = vunpack.c.l.b16 %v4043
      %v4372 = vunpack.c.l.b16 %v4044
      %v4373 = vunpack.c.l.b16 %v4045
      %v4374 = vunpack.c.l.b16 %v4046
      %v4375 = vunpack.c.l.b16 %v4047
      %v4376 = vpack.c.b16 %v4345, %v4344
      %v4377 = vpack.c.b16 %v4347, %v4346
      %v4378 = vpack.c.b16 %v4349, %v4348
      %v4379 = vpack.c.b16 %v4351, %v4350
      %v4380 = vpack.c.b16 %v4353, %v4352
      %v4381 = vpack.c.b16 %v4355, %v4354
      %v4382 = vpack.c.b16 %v4357, %v4356
      %v4383 = vpack.c.b16 %v4359, %v4358
      %v4384 = vpack.c.b16 %v4361, %v4360
      %v4385 = vpack.c.b16 %v4363, %v4362
      %v4386 = vpack.c.b16 %v4365, %v4364
      %v4387 = vpack.c.b16 %v4367, %v4366
      %v4388 = vpack.c.b16 %v4369, %v4368
      %v4389 = vpack.c.b16 %v4371, %v4370
      %v4390 = vpack.c.b16 %v4373, %v4372
      %v4391 = vpack.c.b16 %v4375, %v4374
      %v4394 = vunpack.c.l.b16 %v4048
      %v4395 = vunpack.c.l.b16 %v4049
      %v4396 = vpack.c.b16 %v4395, %v4394
      %v4398 = vsel %vm4170, %v4376, 0
      %v4401 = vsel %vm4170, %v4377, 0
      %v4404 = vsel %vm4170, %v4378, 0
      %v4407 = vsel %vm4170, %v4379, 0
      %v4410 = vsel %vm4170, %v4380, 0
      %v4413 = vsel %vm4170, %v4381, 0
      %v4416 = vsel %vm4170, %v4382, 0
      %v4419 = vsel %vm4170, %v4383, 0
      %v4422 = vsel %vm4170, %v4384, 0
      %v4425 = vsel %vm4170, %v4385, 0
      %v4428 = vsel %vm4170, %v4386, 0
      %v4431 = vsel %vm4170, %v4387, 0
      %v4434 = vsel %vm4170, %v4388, 0
      %v4437 = vsel %vm4170, %v4389, 0
      %v4440 = vsel %vm4170, %v4390, 0
      %v4443 = vsel %vm4170, %v4391, 0
      %v4446 = vsel %vm4219, %v4396, 0
      %4448 = vmatpush.bf16.msra.mxu0 0
      %4449 = vmatpush.bf16.msra.mxu0 0
      %4450 = vmatpush.bf16.msra.mxu0 0
      %4451 = vmatpush.bf16.msra.mxu0 0
      %4452 = vmatpush.bf16.msra.mxu0 0
      %4453 = vmatpush.bf16.msra.mxu0 0
      %4454 = vmatpush.bf16.msra.mxu0 0
      %4455 = vmatpush.bf16.msra.mxu0 %v4446
      %4456 = vmatmul.bf16.gmra.mxu0 %v4398
      %v4457 = vpop.f32.mrf.mxu0
      %v4458 = vadd.f32 %v4233, %v4457
      %v4459 = vpop.f32.mrf.mxu0
      %v4460 = vadd.f32 %v4235, %v4459
      %4461 = vmatmul.bf16.gmra.mxu0 %v4401
      %v4462 = vpop.f32.mrf.mxu0
      %v4463 = vadd.f32 %v4238, %v4462
      %v4464 = vpop.f32.mrf.mxu0
      %v4465 = vadd.f32 %v4240, %v4464
      %4466 = vmatmul.bf16.gmra.mxu0 %v4404
      %v4467 = vpop.f32.mrf.mxu0
      %v4468 = vadd.f32 %v4243, %v4467
      %v4469 = vpop.f32.mrf.mxu0
      %v4470 = vadd.f32 %v4245, %v4469
      %4471 = vmatmul.bf16.gmra.mxu0 %v4407
      %v4472 = vpop.f32.mrf.mxu0
      %v4473 = vadd.f32 %v4248, %v4472
      %v4474 = vpop.f32.mrf.mxu0
      %v4475 = vadd.f32 %v4250, %v4474
      %4476 = vmatmul.bf16.gmra.mxu0 %v4410
      %v4477 = vpop.f32.mrf.mxu0
      %v4478 = vadd.f32 %v4253, %v4477
      %v4479 = vpop.f32.mrf.mxu0
      %v4480 = vadd.f32 %v4255, %v4479
      %4481 = vmatmul.bf16.gmra.mxu0 %v4413
      %v4482 = vpop.f32.mrf.mxu0
      %v4483 = vadd.f32 %v4258, %v4482
      %v4484 = vpop.f32.mrf.mxu0
      %v4485 = vadd.f32 %v4260, %v4484
      %4486 = vmatmul.bf16.gmra.mxu0 %v4416
      %v4487 = vpop.f32.mrf.mxu0
      %v4488 = vadd.f32 %v4263, %v4487
      %v4489 = vpop.f32.mrf.mxu0
      %v4490 = vadd.f32 %v4265, %v4489
      %4491 = vmatmul.bf16.gmra.mxu0 %v4419
      %v4492 = vpop.f32.mrf.mxu0
      %v4493 = vadd.f32 %v4268, %v4492
      %v4494 = vpop.f32.mrf.mxu0
      %v4495 = vadd.f32 %v4270, %v4494
      %4496 = vmatmul.bf16.gmra.mxu0 %v4422
      %v4497 = vpop.f32.mrf.mxu0
      %v4498 = vadd.f32 %v4273, %v4497
      %v4499 = vpop.f32.mrf.mxu0
      %v4500 = vadd.f32 %v4275, %v4499
      %4501 = vmatmul.bf16.gmra.mxu0 %v4425
      %v4502 = vpop.f32.mrf.mxu0
      %v4503 = vadd.f32 %v4278, %v4502
      %v4504 = vpop.f32.mrf.mxu0
      %v4505 = vadd.f32 %v4280, %v4504
      %4506 = vmatmul.bf16.gmra.mxu0 %v4428
      %v4507 = vpop.f32.mrf.mxu0
      %v4508 = vadd.f32 %v4283, %v4507
      %v4509 = vpop.f32.mrf.mxu0
      %v4510 = vadd.f32 %v4285, %v4509
      %4511 = vmatmul.bf16.gmra.mxu0 %v4431
      %v4512 = vpop.f32.mrf.mxu0
      %v4513 = vadd.f32 %v4288, %v4512
      %v4514 = vpop.f32.mrf.mxu0
      %v4515 = vadd.f32 %v4290, %v4514
      %4516 = vmatmul.bf16.gmra.mxu0 %v4434
      %v4517 = vpop.f32.mrf.mxu0
      %v4518 = vadd.f32 %v4293, %v4517
      %v4519 = vpop.f32.mrf.mxu0
      %v4520 = vadd.f32 %v4295, %v4519
      %4521 = vmatmul.bf16.gmra.mxu0 %v4437
      %v4522 = vpop.f32.mrf.mxu0
      %v4523 = vadd.f32 %v4298, %v4522
      %v4524 = vpop.f32.mrf.mxu0
      %v4525 = vadd.f32 %v4300, %v4524
      %4526 = vmatmul.bf16.gmra.mxu0 %v4440
      %v4527 = vpop.f32.mrf.mxu0
      %v4528 = vadd.f32 %v4303, %v4527
      %v4529 = vpop.f32.mrf.mxu0
      %v4530 = vadd.f32 %v4305, %v4529
      %4531 = vmatmul.bf16.gmra.mxu0 %v4443
      %v4532 = vpop.f32.mrf.mxu0
      %v4533 = vadd.f32 %v4308, %v4532
      %v4534 = vpop.f32.mrf.mxu0
      %v4535 = vadd.f32 %v4310, %v4534
      %4536 = vdwg.mxu0
      %s4537 = scalar_lea.vmem [#allocation3], 16
      %v4538 = vld [vmem:[%s4537] sm:$0xf]
      %v4539 = vld [vmem:[%s4537 + $0x4] sm:$0xf]
      %v4540 = vld [vmem:[%s4537 + $0x8] sm:$0xf]
      %v4541 = vld [vmem:[%s4537 + $0xc] sm:$0xf]
      %v4542 = vld [vmem:[%s4537 + $0x10] sm:$0xf]
      %v4543 = vld [vmem:[%s4537 + $0x14] sm:$0xf]
      %v4544 = vld [vmem:[%s4537 + $0x18] sm:$0xf]
      %v4545 = vld [vmem:[%s4537 + $0x1c] sm:$0xf]
      %v4546 = vld [vmem:[%s4537 + $0x20] sm:$0xf]
      %v4547 = vld [vmem:[%s4537 + $0x24] sm:$0xf]
      %v4548 = vld [vmem:[%s4537 + $0x28] sm:$0xf]
      %v4549 = vld [vmem:[%s4537 + $0x2c] sm:$0xf]
      %v4550 = vld [vmem:[%s4537 + $0x30] sm:$0xf]
      %v4551 = vld [vmem:[%s4537 + $0x34] sm:$0xf]
      %v4552 = vld [vmem:[%s4537 + $0x38] sm:$0xf]
      %v4553 = vld [vmem:[%s4537 + $0x3c] sm:$0xf]
      %v4554 = vld [vmem:[%s4537 + $0x40] sm:$0xf]
      %v4555 = vld [vmem:[%s4537 + $0x44] sm:$0xf]
      %v4556 = vld [vmem:[%s4537 + $0x48] sm:$0xf]
      %v4557 = vld [vmem:[%s4537 + $0x4c] sm:$0xf]
      %v4558 = vld [vmem:[%s4537 + $0x50] sm:$0xf]
      %v4559 = vld [vmem:[%s4537 + $0x54] sm:$0xf]
      %v4560 = vld [vmem:[%s4537 + $0x58] sm:$0xf]
      %v4561 = vld [vmem:[%s4537 + $0x5c] sm:$0xf]
      %v4562 = vld [vmem:[%s4537 + $0x60] sm:$0xf]
      %v4563 = vld [vmem:[%s4537 + $0x64] sm:$0xf]
      %v4564 = vld [vmem:[%s4537 + $0x68] sm:$0xf]
      %v4565 = vld [vmem:[%s4537 + $0x6c] sm:$0xf]
      %v4566 = vld [vmem:[%s4537 + $0x70] sm:$0xf]
      %v4567 = vld [vmem:[%s4537 + $0x74] sm:$0xf]
      %v4568 = vld [vmem:[%s4537 + $0x78] sm:$0xf]
      %v4569 = vld [vmem:[%s4537 + $0x7c] sm:$0xf]
      %s4570 = scalar_lea.vmem %s4, 16
      %v4571 = vld [vmem:[%s4570] sm:$0xf]
      %v4572 = vld [vmem:[%s4570 + $0x4] sm:$0x3]
      %v4605 = vunpack.c.l.b16 %v4538
      %v4606 = vunpack.c.l.b16 %v4539
      %v4607 = vunpack.c.l.b16 %v4540
      %v4608 = vunpack.c.l.b16 %v4541
      %v4609 = vunpack.c.l.b16 %v4542
      %v4610 = vunpack.c.l.b16 %v4543
      %v4611 = vunpack.c.l.b16 %v4544
      %v4612 = vunpack.c.l.b16 %v4545
      %v4613 = vunpack.c.l.b16 %v4546
      %v4614 = vunpack.c.l.b16 %v4547
      %v4615 = vunpack.c.l.b16 %v4548
      %v4616 = vunpack.c.l.b16 %v4549
      %v4617 = vunpack.c.l.b16 %v4550
      %v4618 = vunpack.c.l.b16 %v4551
      %v4619 = vunpack.c.l.b16 %v4552
      %v4620 = vunpack.c.l.b16 %v4553
      %v4621 = vunpack.c.l.b16 %v4554
      %v4622 = vunpack.c.l.b16 %v4555
      %v4623 = vunpack.c.l.b16 %v4556
      %v4624 = vunpack.c.l.b16 %v4557
      %v4625 = vunpack.c.l.b16 %v4558
      %v4626 = vunpack.c.l.b16 %v4559
      %v4627 = vunpack.c.l.b16 %v4560
      %v4628 = vunpack.c.l.b16 %v4561
      %v4629 = vunpack.c.l.b16 %v4562
      %v4630 = vunpack.c.l.b16 %v4563
      %v4631 = vunpack.c.l.b16 %v4564
      %v4632 = vunpack.c.l.b16 %v4565
      %v4633 = vunpack.c.l.b16 %v4566
      %v4634 = vunpack.c.l.b16 %v4567
      %v4635 = vunpack.c.l.b16 %v4568
      %v4636 = vunpack.c.l.b16 %v4569
      %v4637 = vpack.c.b16 %v4606, %v4605
      %v4638 = vpack.c.b16 %v4608, %v4607
      %v4639 = vpack.c.b16 %v4610, %v4609
      %v4640 = vpack.c.b16 %v4612, %v4611
      %v4641 = vpack.c.b16 %v4614, %v4613
      %v4642 = vpack.c.b16 %v4616, %v4615
      %v4643 = vpack.c.b16 %v4618, %v4617
      %v4644 = vpack.c.b16 %v4620, %v4619
      %v4645 = vpack.c.b16 %v4622, %v4621
      %v4646 = vpack.c.b16 %v4624, %v4623
      %v4647 = vpack.c.b16 %v4626, %v4625
      %v4648 = vpack.c.b16 %v4628, %v4627
      %v4649 = vpack.c.b16 %v4630, %v4629
      %v4650 = vpack.c.b16 %v4632, %v4631
      %v4651 = vpack.c.b16 %v4634, %v4633
      %v4652 = vpack.c.b16 %v4636, %v4635
      %v4655 = vunpack.c.l.b16 %v4571
      %v4656 = vunpack.c.l.b16 %v4572
      %v4657 = vpack.c.b16 %v4656, %v4655
      %v4659 = vsel %vm4170, %v4637, 0
      %v4662 = vsel %vm4170, %v4638, 0
      %v4665 = vsel %vm4170, %v4639, 0
      %v4668 = vsel %vm4170, %v4640, 0
      %v4671 = vsel %vm4170, %v4641, 0
      %v4674 = vsel %vm4170, %v4642, 0
      %v4677 = vsel %vm4170, %v4643, 0
      %v4680 = vsel %vm4170, %v4644, 0
      %v4683 = vsel %vm4170, %v4645, 0
      %v4686 = vsel %vm4170, %v4646, 0
      %v4689 = vsel %vm4170, %v4647, 0
      %v4692 = vsel %vm4170, %v4648, 0
      %v4695 = vsel %vm4170, %v4649, 0
      %v4698 = vsel %vm4170, %v4650, 0
      %v4701 = vsel %vm4170, %v4651, 0
      %v4704 = vsel %vm4170, %v4652, 0
      %v4707 = vsel %vm4219, %v4657, 0
      %4709 = vmatpush.bf16.msra.mxu0 0
      %4710 = vmatpush.bf16.msra.mxu0 0
      %4711 = vmatpush.bf16.msra.mxu0 0
      %4712 = vmatpush.bf16.msra.mxu0 0
      %4713 = vmatpush.bf16.msra.mxu0 0
      %4714 = vmatpush.bf16.msra.mxu0 0
      %4715 = vmatpush.bf16.msra.mxu0 0
      %4716 = vmatpush.bf16.msra.mxu0 %v4707
      %4717 = vmatmul.bf16.gmra.mxu0 %v4659
      %v4718 = vpop.f32.mrf.mxu0
      %v4719 = vadd.f32 0.0, %v4718
      %v4720 = vpop.f32.mrf.mxu0
      %v4721 = vadd.f32 0.0, %v4720
      %4722 = vmatmul.bf16.gmra.mxu0 %v4662
      %v4723 = vpop.f32.mrf.mxu0
      %v4724 = vadd.f32 0.0, %v4723
      %v4725 = vpop.f32.mrf.mxu0
      %v4726 = vadd.f32 0.0, %v4725
      %4727 = vmatmul.bf16.gmra.mxu0 %v4665
      %v4728 = vpop.f32.mrf.mxu0
      %v4729 = vadd.f32 0.0, %v4728
      %v4730 = vpop.f32.mrf.mxu0
      %v4731 = vadd.f32 0.0, %v4730
      %4732 = vmatmul.bf16.gmra.mxu0 %v4668
      %v4733 = vpop.f32.mrf.mxu0
      %v4734 = vadd.f32 0.0, %v4733
      %v4735 = vpop.f32.mrf.mxu0
      %v4736 = vadd.f32 0.0, %v4735
      %4737 = vmatmul.bf16.gmra.mxu0 %v4671
      %v4738 = vpop.f32.mrf.mxu0
      %v4739 = vadd.f32 0.0, %v4738
      %v4740 = vpop.f32.mrf.mxu0
      %v4741 = vadd.f32 0.0, %v4740
      %4742 = vmatmul.bf16.gmra.mxu0 %v4674
      %v4743 = vpop.f32.mrf.mxu0
      %v4744 = vadd.f32 0.0, %v4743
      %v4745 = vpop.f32.mrf.mxu0
      %v4746 = vadd.f32 0.0, %v4745
      %4747 = vmatmul.bf16.gmra.mxu0 %v4677
      %v4748 = vpop.f32.mrf.mxu0
      %v4749 = vadd.f32 0.0, %v4748
      %v4750 = vpop.f32.mrf.mxu0
      %v4751 = vadd.f32 0.0, %v4750
      %4752 = vmatmul.bf16.gmra.mxu0 %v4680
      %v4753 = vpop.f32.mrf.mxu0
      %v4754 = vadd.f32 0.0, %v4753
      %v4755 = vpop.f32.mrf.mxu0
      %v4756 = vadd.f32 0.0, %v4755
      %4757 = vmatmul.bf16.gmra.mxu0 %v4683
      %v4758 = vpop.f32.mrf.mxu0
      %v4759 = vadd.f32 0.0, %v4758
      %v4760 = vpop.f32.mrf.mxu0
      %v4761 = vadd.f32 0.0, %v4760
      %4762 = vmatmul.bf16.gmra.mxu0 %v4686
      %v4763 = vpop.f32.mrf.mxu0
      %v4764 = vadd.f32 0.0, %v4763
      %v4765 = vpop.f32.mrf.mxu0
      %v4766 = vadd.f32 0.0, %v4765
      %4767 = vmatmul.bf16.gmra.mxu0 %v4689
      %v4768 = vpop.f32.mrf.mxu0
      %v4769 = vadd.f32 0.0, %v4768
      %v4770 = vpop.f32.mrf.mxu0
      %v4771 = vadd.f32 0.0, %v4770
      %4772 = vmatmul.bf16.gmra.mxu0 %v4692
      %v4773 = vpop.f32.mrf.mxu0
      %v4774 = vadd.f32 0.0, %v4773
      %v4775 = vpop.f32.mrf.mxu0
      %v4776 = vadd.f32 0.0, %v4775
      %4777 = vmatmul.bf16.gmra.mxu0 %v4695
      %v4778 = vpop.f32.mrf.mxu0
      %v4779 = vadd.f32 0.0, %v4778
      %v4780 = vpop.f32.mrf.mxu0
      %v4781 = vadd.f32 0.0, %v4780
      %4782 = vmatmul.bf16.gmra.mxu0 %v4698
      %v4783 = vpop.f32.mrf.mxu0
      %v4784 = vadd.f32 0.0, %v4783
      %v4785 = vpop.f32.mrf.mxu0
      %v4786 = vadd.f32 0.0, %v4785
      %4787 = vmatmul.bf16.gmra.mxu0 %v4701
      %v4788 = vpop.f32.mrf.mxu0
      %v4789 = vadd.f32 0.0, %v4788
      %v4790 = vpop.f32.mrf.mxu0
      %v4791 = vadd.f32 0.0, %v4790
      %4792 = vmatmul.bf16.gmra.mxu0 %v4704
      %v4793 = vpop.f32.mrf.mxu0
      %v4794 = vadd.f32 0.0, %v4793
      %v4795 = vpop.f32.mrf.mxu0
      %v4796 = vadd.f32 0.0, %v4795
      %4797 = vdwg.mxu0
      %v4798 = vadd.f32 %v4458, %v4719
      %v4799 = vadd.f32 %v4460, %v4721
      %v4800 = vadd.f32 %v4463, %v4724
      %v4801 = vadd.f32 %v4465, %v4726
      %v4802 = vadd.f32 %v4468, %v4729
      %v4803 = vadd.f32 %v4470, %v4731
      %v4804 = vadd.f32 %v4473, %v4734
      %v4805 = vadd.f32 %v4475, %v4736
      %v4806 = vadd.f32 %v4478, %v4739
      %v4807 = vadd.f32 %v4480, %v4741
      %v4808 = vadd.f32 %v4483, %v4744
      %v4809 = vadd.f32 %v4485, %v4746
      %v4810 = vadd.f32 %v4488, %v4749
      %v4811 = vadd.f32 %v4490, %v4751
      %v4812 = vadd.f32 %v4493, %v4754
      %v4813 = vadd.f32 %v4495, %v4756
      %v4814 = vadd.f32 %v4498, %v4759
      %v4815 = vadd.f32 %v4500, %v4761
      %v4816 = vadd.f32 %v4503, %v4764
      %v4817 = vadd.f32 %v4505, %v4766
      %v4818 = vadd.f32 %v4508, %v4769
      %v4819 = vadd.f32 %v4510, %v4771
      %v4820 = vadd.f32 %v4513, %v4774
      %v4821 = vadd.f32 %v4515, %v4776
      %v4822 = vadd.f32 %v4518, %v4779
      %v4823 = vadd.f32 %v4520, %v4781
      %v4824 = vadd.f32 %v4523, %v4784
      %v4825 = vadd.f32 %v4525, %v4786
      %v4826 = vadd.f32 %v4528, %v4789
      %v4827 = vadd.f32 %v4530, %v4791
      %v4828 = vadd.f32 %v4533, %v4794
      %v4829 = vadd.f32 %v4535, %v4796
      %v4830 = vld [vmem:[%s5] sm:$0x1]
      %v4832 = vperm.slane %v4830, 0
      %v4834 = vadd.f32 %v4798, %v4832
      %v4835 = vadd.f32 %v4799, %v4832
      %v4836 = vadd.f32 %v4800, %v4832
      %v4837 = vadd.f32 %v4801, %v4832
      %v4838 = vadd.f32 %v4802, %v4832
      %v4839 = vadd.f32 %v4803, %v4832
      %v4840 = vadd.f32 %v4804, %v4832
      %v4841 = vadd.f32 %v4805, %v4832
      %v4842 = vadd.f32 %v4806, %v4832
      %v4843 = vadd.f32 %v4807, %v4832
      %v4844 = vadd.f32 %v4808, %v4832
      %v4845 = vadd.f32 %v4809, %v4832
      %v4846 = vadd.f32 %v4810, %v4832
      %v4847 = vadd.f32 %v4811, %v4832
      %v4848 = vadd.f32 %v4812, %v4832
      %v4849 = vadd.f32 %v4813, %v4832
      %v4850 = vadd.f32 %v4814, %v4832
      %v4851 = vadd.f32 %v4815, %v4832
      %v4852 = vadd.f32 %v4816, %v4832
      %v4853 = vadd.f32 %v4817, %v4832
      %v4854 = vadd.f32 %v4818, %v4832
      %v4855 = vadd.f32 %v4819, %v4832
      %v4856 = vadd.f32 %v4820, %v4832
      %v4857 = vadd.f32 %v4821, %v4832
      %v4858 = vadd.f32 %v4822, %v4832
      %v4859 = vadd.f32 %v4823, %v4832
      %v4860 = vadd.f32 %v4824, %v4832
      %v4861 = vadd.f32 %v4825, %v4832
      %v4862 = vadd.f32 %v4826, %v4832
      %v4863 = vadd.f32 %v4827, %v4832
      %v4864 = vadd.f32 %v4828, %v4832
      %v4865 = vadd.f32 %v4829, %v4832
      %v4866 = vmax.f32 %v4834, 0.0
      %v4867 = vmax.f32 %v4835, 0.0
      %v4868 = vmax.f32 %v4836, 0.0
      %v4869 = vmax.f32 %v4837, 0.0
      %v4870 = vmax.f32 %v4838, 0.0
      %v4871 = vmax.f32 %v4839, 0.0
      %v4872 = vmax.f32 %v4840, 0.0
      %v4873 = vmax.f32 %v4841, 0.0
      %v4874 = vmax.f32 %v4842, 0.0
      %v4875 = vmax.f32 %v4843, 0.0
      %v4876 = vmax.f32 %v4844, 0.0
      %v4877 = vmax.f32 %v4845, 0.0
      %v4878 = vmax.f32 %v4846, 0.0
      %v4879 = vmax.f32 %v4847, 0.0
      %v4880 = vmax.f32 %v4848, 0.0
      %v4881 = vmax.f32 %v4849, 0.0
      %v4882 = vmax.f32 %v4850, 0.0
      %v4883 = vmax.f32 %v4851, 0.0
      %v4884 = vmax.f32 %v4852, 0.0
      %v4885 = vmax.f32 %v4853, 0.0
      %v4886 = vmax.f32 %v4854, 0.0
      %v4887 = vmax.f32 %v4855, 0.0
      %v4888 = vmax.f32 %v4856, 0.0
      %v4889 = vmax.f32 %v4857, 0.0
      %v4890 = vmax.f32 %v4858, 0.0
      %v4891 = vmax.f32 %v4859, 0.0
      %v4892 = vmax.f32 %v4860, 0.0
      %v4893 = vmax.f32 %v4861, 0.0
      %v4894 = vmax.f32 %v4862, 0.0
      %v4895 = vmax.f32 %v4863, 0.0
      %v4896 = vmax.f32 %v4864, 0.0
      %v4897 = vmax.f32 %v4865, 0.0
      %v4898 = vpack.c.bf16 %v4866, %v4866
      %v4899 = vpack.c.bf16 %v4867, %v4867
      %v4900 = vpack.c.bf16 %v4868, %v4868
      %v4901 = vpack.c.bf16 %v4869, %v4869
      %v4902 = vpack.c.bf16 %v4870, %v4870
      %v4903 = vpack.c.bf16 %v4871, %v4871
      %v4904 = vpack.c.bf16 %v4872, %v4872
      %v4905 = vpack.c.bf16 %v4873, %v4873
      %v4906 = vpack.c.bf16 %v4874, %v4874
      %v4907 = vpack.c.bf16 %v4875, %v4875
      %v4908 = vpack.c.bf16 %v4876, %v4876
      %v4909 = vpack.c.bf16 %v4877, %v4877
      %v4910 = vpack.c.bf16 %v4878, %v4878
      %v4911 = vpack.c.bf16 %v4879, %v4879
      %v4912 = vpack.c.bf16 %v4880, %v4880
      %v4913 = vpack.c.bf16 %v4881, %v4881
      %v4914 = vpack.c.bf16 %v4882, %v4882
      %v4915 = vpack.c.bf16 %v4883, %v4883
      %v4916 = vpack.c.bf16 %v4884, %v4884
      %v4917 = vpack.c.bf16 %v4885, %v4885
      %v4918 = vpack.c.bf16 %v4886, %v4886
      %v4919 = vpack.c.bf16 %v4887, %v4887
      %v4920 = vpack.c.bf16 %v4888, %v4888
      %v4921 = vpack.c.bf16 %v4889, %v4889
      %v4922 = vpack.c.bf16 %v4890, %v4890
      %v4923 = vpack.c.bf16 %v4891, %v4891
      %v4924 = vpack.c.bf16 %v4892, %v4892
      %v4925 = vpack.c.bf16 %v4893, %v4893
      %v4926 = vpack.c.bf16 %v4894, %v4894
      %v4927 = vpack.c.bf16 %v4895, %v4895
      %v4928 = vpack.c.bf16 %v4896, %v4896
      %v4929 = vpack.c.bf16 %v4897, %v4897
      %4930 = vst.msk [vmem:[%s271] sm:$0xf] %vm817, %v4898
      %4931 = vst.msk [vmem:[%s271 + $0x4] sm:$0xf] %vm817, %v4899
      %4932 = vst.msk [vmem:[%s271 + $0x8] sm:$0xf] %vm817, %v4900
      %4933 = vst.msk [vmem:[%s271 + $0xc] sm:$0xf] %vm817, %v4901
      %4934 = vst.msk [vmem:[%s271 + $0x10] sm:$0xf] %vm817, %v4902
      %4935 = vst.msk [vmem:[%s271 + $0x14] sm:$0xf] %vm817, %v4903
      %4936 = vst.msk [vmem:[%s271 + $0x18] sm:$0xf] %vm817, %v4904
      %4937 = vst.msk [vmem:[%s271 + $0x1c] sm:$0xf] %vm817, %v4905
      %4938 = vst.msk [vmem:[%s271 + $0x20] sm:$0xf] %vm817, %v4906
      %4939 = vst.msk [vmem:[%s271 + $0x24] sm:$0xf] %vm817, %v4907
      %4940 = vst.msk [vmem:[%s271 + $0x28] sm:$0xf] %vm817, %v4908
      %4941 = vst.msk [vmem:[%s271 + $0x2c] sm:$0xf] %vm817, %v4909
      %4942 = vst.msk [vmem:[%s271 + $0x30] sm:$0xf] %vm817, %v4910
      %4943 = vst.msk [vmem:[%s271 + $0x34] sm:$0xf] %vm817, %v4911
      %4944 = vst.msk [vmem:[%s271 + $0x38] sm:$0xf] %vm817, %v4912
      %4945 = vst.msk [vmem:[%s271 + $0x3c] sm:$0xf] %vm817, %v4913
      %4946 = vst.msk [vmem:[%s271 + $0x40] sm:$0xf] %vm817, %v4914
      %4947 = vst.msk [vmem:[%s271 + $0x44] sm:$0xf] %vm817, %v4915
      %4948 = vst.msk [vmem:[%s271 + $0x48] sm:$0xf] %vm817, %v4916
      %4949 = vst.msk [vmem:[%s271 + $0x4c] sm:$0xf] %vm817, %v4917
      %4950 = vst.msk [vmem:[%s271 + $0x50] sm:$0xf] %vm817, %v4918
      %4951 = vst.msk [vmem:[%s271 + $0x54] sm:$0xf] %vm817, %v4919
      %4952 = vst.msk [vmem:[%s271 + $0x58] sm:$0xf] %vm817, %v4920
      %4953 = vst.msk [vmem:[%s271 + $0x5c] sm:$0xf] %vm817, %v4921
      %4954 = vst.msk [vmem:[%s271 + $0x60] sm:$0xf] %vm817, %v4922
      %4955 = vst.msk [vmem:[%s271 + $0x64] sm:$0xf] %vm817, %v4923
      %4956 = vst.msk [vmem:[%s271 + $0x68] sm:$0xf] %vm817, %v4924
      %4957 = vst.msk [vmem:[%s271 + $0x6c] sm:$0xf] %vm817, %v4925
      %4958 = vst.msk [vmem:[%s271 + $0x70] sm:$0xf] %vm817, %v4926
      %4959 = vst.msk [vmem:[%s271 + $0x74] sm:$0xf] %vm817, %v4927
      %4960 = vst.msk [vmem:[%s271 + $0x78] sm:$0xf] %vm817, %v4928
      %4961 = vst.msk [vmem:[%s271 + $0x7c] sm:$0xf] %vm817, %v4929
      %p4962 = scmp.lt.s32.totalorder %s17, 1
      %s4963 = scalar_select %p4962, %s17, 1
      %s4964 = smul.addr %s4963, 32
      %s4965 = smul.addr %s4964, 4
      %s4966 = scalar_lea.vmem %s6, %s4965
      // Predicated region
      $region45: #{up_forward.3} parent=43 // pred_check
        %p4967 = pneg %p171
      $region46: #{up_forward.3} parent=43 // pred_check_branch
        %4969 = sbr.rel (%p4967) target = $region48
      $region47: #{up_forward.3} parent=43 // pred_region
        _
      $region48: #{up_forward.3} parent=43 // pred_fallthru
        _
    $region44: #{up_forward.3} parent=5 // pred_fallthru
      _
    %p4970 = scmp.le.s32.totalorder 2, %s12
    // Predicated region
    $region49: #{up_forward.3} parent=5 // pred_check
      %p4971 = pneg %p4970
    $region50: #{up_forward.3} parent=5 // pred_check_branch
      %4973 = sbr.rel (%p4971) target = $region52
    $region51: #{up_forward.3} parent=5 // pred_region
      %s4974 = ssub.s32 %s12, 2
      // Predicated region
      $region53: #{up_forward.3} parent=51 // pred_check
        %p4975 = pneg %p177
      $region54: #{up_forward.3} parent=51 // pred_check_branch
        %4977 = sbr.rel (%p4975) target = $region56
      $region55: #{up_forward.3} parent=51 // pred_region
        %p4978 = scmp.lt.s32.totalorder %s18, 1
        %s4979 = scalar_select %p4978, %s18, 1
        %s4980 = smul.addr %s4979, 32
        %s4981 = smul.addr %s4980, 4
        %s4982 = scalar_lea.vmem %s6, %s4981
      $region56: #{up_forward.3} parent=51 // pred_fallthru
        _
    $region52: #{up_forward.3} parent=5 // pred_fallthru
      _
  $region6: #{up_forward.3} parent=0 // loop_footer
    %s16 = sadd.s32 1, %s12
  $region7: #{up_forward.3} parent=0 // loop_footer_branch
    %11 = sbr.rel target = $region3
  $region8: #{up_forward.3} parent=0 // loop_exit
    _

</llo_original>
